<compile_context>
chip_gen: v6e
topology: v6e:2x2x1
jax: 0.10.0
libtpu: 0.0.40
codegen_flags: <defaults>
</compile_context>

<pallas_src>
import jax
import jax.numpy as jnp
from jax.experimental import pallas as pl
from jax.experimental.pallas import tpu as pltpu

_VMEM = pl.BlockSpec(memory_space=pltpu.MemorySpace.VMEM)
_MXU_DTYPE = jnp.bfloat16  # MXU-native on v5e/v6e/v7x; accumulation stays f32


# ------------------------------ fused kernel --------------------------------
def _center_kernel(x_ref, w1_ref, g1_ref, bt1_ref,
                   w2_ref, g2_ref, bt2_ref,
                   wd_ref, bd_ref,
                   o_ref,
                   pad1_ref, pad2_ref):
    # x_ref  : (N*h, 2, w, 2*Cin) bf16 -- free reshape of NHWC input (h=H/2, w=W/2)
    # w1_ref : (9, Cin, Cmid) bf16, w2_ref: (9, Cmid, Cout) bf16
    # wd_ref : (Cout, 4*Cdec) bf16 (lane order dy, dx, c)
    # o_ref  : (N*h*w, 4*Cdec) f32 -- one contiguous lane-dense store
    # pad*_ref: bf16 zero-halo padded activation scratch in VMEM
    n, hp2, wp2, cin = pad1_ref.shape
    h, w = hp2 - 2, wp2 - 2
    cmid = w1_ref.shape[2]
    m = n * h * w

    def bn_relu(acc, gamma, beta):
        # BatchNorm2d (training mode, biased batch stats) + ReLU, f32 math.
        # Single reduction pass (sum + sumsq), folded scale/shift normalize.
        s = jnp.sum(acc, axis=0, keepdims=True)
        ss = jnp.sum(acc * acc, axis=0, keepdims=True)
        mean = s * (1.0 / m)
        var = ss * (1.0 / m) - mean * mean
        scale = gamma * jax.lax.rsqrt(var + 1e-5)
        shift = beta - mean * scale
        return jnp.maximum(acc * scale + shift, 0.0)

    def conv3x3_bn_relu(pad_ref, act_nhwc, w_ref, g_ref, beta_ref):
        c = pad_ref.shape[3]
        cout = w_ref.shape[2]
        zdt = pad_ref.dtype
        # Zero only the 1-pixel halo (no full-buffer zero fill), then store interior.
        pad_ref[:, 0:1, :, :] = jnp.zeros((n, 1, w + 2, c), zdt)
        pad_ref[:, h + 1:h + 2, :, :] = jnp.zeros((n, 1, w + 2, c), zdt)
        pad_ref[:, :, 0:1, :] = jnp.zeros((n, h + 2, 1, c), zdt)
        pad_ref[:, :, w + 1:w + 2, :] = jnp.zeros((n, h + 2, 1, c), zdt)
        pad_ref[:, 1:h + 1, 1:w + 1, :] = act_nhwc
        # 3x3 conv = 9 accumulated shifted matmuls (no 9x im2col copy).
        acc = jnp.zeros((m, cout), jnp.float32)
        for dy in range(3):
            for dx in range(3):
                win = pad_ref[:, dy:dy + h, dx:dx + w, :].reshape(m, c)
                acc = acc + jnp.dot(win, w_ref[3 * dy + dx],
                                    preferred_element_type=jnp.float32)
        return bn_relu(acc, g_ref[...], beta_ref[...])

    # ---- MaxPool2d(2): window rows on dim 1, window cols packed in lanes.
    x = x_ref[...]                                              # (N*h, 2, w, 2*Cin)
    xh = jnp.maximum(x[:, 0, :, :], x[:, 1, :, :])              # (N*h, w, 2*Cin)
    pooled = jnp.maximum(xh[..., :cin], xh[..., cin:])          # (N*h, w, Cin) bf16

    # ---- Conv3x3 + BN + ReLU (x2), fully in VMEM; intermediates bf16 into MXU.
    a1 = conv3x3_bn_relu(pad1_ref, pooled.reshape(n, h, w, cin),
                         w1_ref, g1_ref, bt1_ref)               # (M, Cmid) f32
    a2 = conv3x3_bn_relu(pad2_ref,
                         a1.reshape(n, h, w, cmid).astype(pad2_ref.dtype),
                         w2_ref, g2_ref, bt2_ref)               # (M, Cout) f32

    # ---- ConvTranspose2d(k=2, s=2): one matmul; lane-dense store, lanes (dy, dx, c).
    y = jnp.dot(a2.astype(wd_ref.dtype), wd_ref[...],
                preferred_element_type=jnp.float32) + bd_ref[...]   # (M, 4*Cdec)
    o_ref[...] = y.astype(o_ref.dtype)


# ------------------------------- Center2D ----------------------------------
def init_center2d_params(key, in_ch, mid_ch, out_ch, deconv_ch):
    ks = jax.random.split(key, 10)
    f32 = jnp.float32
    return {
        "w1": jax.random.normal(ks[0], (3, 3, in_ch, mid_ch), f32) * 0.1,
        "b1": jax.random.normal(ks[1], (mid_ch,), f32) * 0.1,
        "g1": 1.0 + 0.1 * jax.random.normal(ks[2], (mid_ch,), f32),
        "beta1": 0.1 * jax.random.normal(ks[3], (mid_ch,), f32),
        "w2": jax.random.normal(ks[4], (3, 3, mid_ch, out_ch), f32) * 0.1,
        "b2": jax.random.normal(ks[5], (out_ch,), f32) * 0.1,
        "g2": 1.0 + 0.1 * jax.random.normal(ks[6], (out_ch,), f32),
        "beta2": 0.1 * jax.random.normal(ks[7], (out_ch,), f32),
        "wd": jax.random.normal(ks[8], (out_ch, deconv_ch, 2, 2), f32) * 0.1,
        "bd": jax.random.normal(ks[9], (deconv_ch,), f32) * 0.1,
    }


def center2d_forward(x_nchw, params):
    # TODO(synk): F.dropout2d (stochastic training-mode channel dropout) is not
    # implemented; module default dropout=False makes the forward deterministic.
    n, cin, H, W = x_nchw.shape
    assert H % 2 == 0 and W % 2 == 0, "MaxPool2d(2) assumes even spatial dims"
    h, w = H // 2, W // 2
    cmid = params["w1"].shape[-1]
    cout = params["w2"].shape[-1]
    cdec = params["wd"].shape[1]
    m = n * h * w

    # Boundary layout: NCHW -> NHWC (+bf16 cast), then a FREE metadata reshape
    # packing the 2x2 pool window (row-parity on dim 1, col-parity in lanes).
    x = jnp.transpose(x_nchw, (0, 2, 3, 1)).astype(_MXU_DTYPE)
    x_packed = x.reshape(n * h, 2, w, 2 * cin)

    # Weight plumbing (tiny, once): per-tap (C, Cout) conv matrices; deconv
    # weight packed to (Cout, 4*Cdec) with columns ordered (dy, dx, c).
    # Conv biases b1/b2 are NOT passed: training-mode BN cancels them exactly.
    w1 = params["w1"].reshape(9, cin, cmid).astype(_MXU_DTYPE)
    w2 = params["w2"].reshape(9, cmid, cout).astype(_MXU_DTYPE)
    wd = jnp.transpose(params["wd"], (0, 2, 3, 1)).reshape(cout, 4 * cdec).astype(_MXU_DTYPE)
    bd = jnp.tile(params["bd"], 4).reshape(1, 4 * cdec).astype(jnp.float32)

    cost = pl.CostEstimate(
        flops=2 * m * (9 * cin * cmid + 9 * cmid * cout + cout * 4 * cdec),
        transcendentals=0,
        bytes_accessed=(2 * m * 4 * cin                      # bf16 input
                        + 2 * 9 * (cin * cmid + cmid * cout)  # bf16 conv weights
                        + 2 * cout * 4 * cdec                 # bf16 deconv weight
                        + 4 * m * 4 * cdec),                  # f32 output
    )

    # Scoped-VMEM budget from the actual resident buffers (scratch + operands +
    # f32 intermediates), with margin; kept within every generation's default
    # physical VMEM. At production sizes this is what keeps the fused design
    # compiling on v5e/v6e (defaults are 16/32 MiB).
    resident = (2 * x_packed.size
                + 2 * n * (h + 2) * (w + 2) * (cin + cmid)    # bf16 pad scratch
                + 2 * (w1.size + w2.size + wd.size)
                + 4 * m * (cmid + cout + 4 * cdec) * 3        # f32 intermediates
                + 4 * m * 4 * cdec)
    vmem_limit = int(min(max(2 * resident, 16 * 2 ** 20), 64 * 2 ** 20))

    y = pl.pallas_call(
        _center_kernel,
        out_shape=jax.ShapeDtypeStruct((m, 4 * cdec), jnp.float32),
        in_specs=[_VMEM] * 9,
        out_specs=_VMEM,
        scratch_shapes=[
            pltpu.VMEM((n, h + 2, w + 2, cin), _MXU_DTYPE),    # padded pool output
            pltpu.VMEM((n, h + 2, w + 2, cmid), _MXU_DTYPE),   # padded conv1 output
        ],
        compiler_params=pltpu.CompilerParams(vmem_limit_bytes=vmem_limit),
        cost_estimate=cost,
    )(x_packed, w1,
      params["g1"].reshape(1, cmid), params["beta1"].reshape(1, cmid),
      w2, params["g2"].reshape(1, cout), params["beta2"].reshape(1, cout),
      wd, bd)

    # Kernel output lanes are (dy, dx, c): one boundary transpose straight to NCHW
    # (replaces the NHWC->NCHW transpose we needed anyway; no extra HBM pass).
    out = y.reshape(n, h, w, 2, 2, cdec)
    out = jnp.transpose(out, (0, 5, 1, 3, 2, 4)).reshape(n, cdec, 2 * h, 2 * w)
    return out


# --------------------------- Pure-JAX reference -----------------------------
def _reference(x_nchw, p):
    x = jnp.transpose(x_nchw, (0, 2, 3, 1)).astype(jnp.float32)
    x = jax.lax.reduce_window(x, -jnp.inf, jax.lax.max,
                              (1, 2, 2, 1), (1, 2, 2, 1), "VALID")

    def cbr(x, w, b, g, beta):
        y = jax.lax.conv_general_dilated(
            x, w, (1, 1), "SAME",
            dimension_numbers=("NHWC", "HWIO", "NHWC"),
            precision=jax.lax.Precision.HIGHEST) + b
        m = jnp.mean(y, axis=(0, 1, 2), keepdims=True)
        v = jnp.mean((y - m) ** 2, axis=(0, 1, 2), keepdims=True)
        return jnp.maximum((y - m) * jax.lax.rsqrt(v + 1e-5) * g + beta, 0.0)

    x = cbr(x, p["w1"], p["b1"], p["g1"], p["beta1"])
    x = cbr(x, p["w2"], p["b2"], p["g2"], p["beta2"])
    n, h, w, _ = x.shape
    co = p["wd"].shape[1]
    out = jnp.zeros((n, 2 * h, 2 * w, co), jnp.float32)
    for dy in range(2):
        for dx in range(2):
            y = jnp.einsum("nhwc,cd->nhwd", x, p["wd"][:, :, dy, dx],
                           precision=jax.lax.Precision.HIGHEST) + p["bd"]
            out = out.at[:, dy::2, dx::2, :].set(y)
    return jnp.transpose(out, (0, 3, 1, 2))


if __name__ == "__main__":
    key = jax.random.PRNGKey(0)
    kx, kp = jax.random.split(key)
    N, C_IN, H, W = 2, 4, 16, 16
    MID, OUT, DECONV = 8, 8, 4

    x = jax.random.normal(kx, (N, C_IN, H, W), jnp.float32)
    params = init_center2d_params(kp, C_IN, MID, OUT, DECONV)

    fwd = jax.jit(center2d_forward)
    y = jax.block_until_ready(fwd(x, params))
    assert y.shape == (N, DECONV, H, W), y.shape

    y_ref = _reference(x, params)
    err = float(jnp.max(jnp.abs(y - y_ref)))
    # bf16 MXU operands with f32 accumulation; 1e-2 tolerance absorbs this.
    assert jnp.allclose(y, y_ref, rtol=1e-2, atol=1e-2), f"max abs err {err}"

    print("KERNEL_OK")
</pallas_src>

<mosaic_0001>
module attributes {stable_mosaic.version = 11 : i64} {
  func.func @_center_kernel(%arg0: memref<16x2x8x8xbf16, #tpu.memory_space<vmem>>, %arg1: memref<9x4x8xbf16, #tpu.memory_space<vmem>>, %arg2: memref<1x8xf32, #tpu.memory_space<vmem>>, %arg3: memref<1x8xf32, #tpu.memory_space<vmem>>, %arg4: memref<9x8x8xbf16, #tpu.memory_space<vmem>>, %arg5: memref<1x8xf32, #tpu.memory_space<vmem>>, %arg6: memref<1x8xf32, #tpu.memory_space<vmem>>, %arg7: memref<8x16xbf16, #tpu.memory_space<vmem>>, %arg8: memref<1x16xf32, #tpu.memory_space<vmem>>, %arg9: memref<128x16xf32, #tpu.memory_space<vmem>>, %arg10: memref<2x10x10x4xbf16, #tpu.memory_space<vmem>>, %arg11: memref<2x10x10x8xbf16, #tpu.memory_space<vmem>>) attributes {dimension_semantics = [], scalar_prefetch = 0 : i64, scratch_operands = 2 : i64, tpu.core_type = #tpu.core_type<tc>} {
    %c0 = arith.constant 0 : index
    %c0_0 = arith.constant 0 : index
    %c0_1 = arith.constant 0 : index
    %c0_2 = arith.constant 0 : index
    %0 = vector.load %arg0[%c0, %c0_0, %c0_1, %c0_2] : memref<16x2x8x8xbf16, #tpu.memory_space<vmem>>, vector<16x2x8x8xbf16>
    %1 = vector.extract_strided_slice %0 {offsets = [0, 0, 0, 0], sizes = [16, 1, 8, 8], strides = [1, 1, 1, 1]} : vector<16x2x8x8xbf16> to vector<16x1x8x8xbf16>
    %2 = vector.shape_cast %1 : vector<16x1x8x8xbf16> to vector<16x8x8xbf16>
    %3 = vector.extract_strided_slice %0 {offsets = [0, 1, 0, 0], sizes = [16, 1, 8, 8], strides = [1, 1, 1, 1]} : vector<16x2x8x8xbf16> to vector<16x1x8x8xbf16>
    %4 = vector.shape_cast %3 : vector<16x1x8x8xbf16> to vector<16x8x8xbf16>
    %5 = arith.maximumf %2, %4 : vector<16x8x8xbf16>
    %6 = vector.extract_strided_slice %5 {offsets = [0, 0, 0], sizes = [16, 8, 4], strides = [1, 1, 1]} : vector<16x8x8xbf16> to vector<16x8x4xbf16>
    %7 = vector.extract_strided_slice %5 {offsets = [0, 0, 4], sizes = [16, 8, 4], strides = [1, 1, 1]} : vector<16x8x8xbf16> to vector<16x8x4xbf16>
    %8 = arith.maximumf %6, %7 : vector<16x8x4xbf16>
    %9 = vector.shape_cast %8 : vector<16x8x4xbf16> to vector<2x8x8x4xbf16>
    %cst = arith.constant 0.000000e+00 : bf16
    %10 = vector.broadcast %cst : bf16 to vector<2x1x10x4xbf16>
    %c0_3 = arith.constant 0 : index
    %c0_4 = arith.constant 0 : index
    %c0_5 = arith.constant 0 : index
    %c0_6 = arith.constant 0 : index
    %11 = vector.load %arg10[%c0_3, %c0_4, %c0_5, %c0_6] : memref<2x10x10x4xbf16, #tpu.memory_space<vmem>>, vector<2x1x10x4xbf16>
    tpu.vector_store %arg10[%c0_3, %c0_4, %c0_5, %c0_6], %10 {strides = array<i32>} : memref<2x10x10x4xbf16, #tpu.memory_space<vmem>>, vector<2x1x10x4xbf16>,
    %cst_7 = arith.constant 0.000000e+00 : bf16
    %12 = vector.broadcast %cst_7 : bf16 to vector<2x1x10x4xbf16>
    %c0_8 = arith.constant 0 : index
    %c9 = arith.constant 9 : index
    %c0_9 = arith.constant 0 : index
    %c0_10 = arith.constant 0 : index
    %13 = vector.load %arg10[%c0_8, %c9, %c0_9, %c0_10] : memref<2x10x10x4xbf16, #tpu.memory_space<vmem>>, vector<2x1x10x4xbf16>
    tpu.vector_store %arg10[%c0_8, %c9, %c0_9, %c0_10], %12 {strides = array<i32>} : memref<2x10x10x4xbf16, #tpu.memory_space<vmem>>, vector<2x1x10x4xbf16>,
    %cst_11 = arith.constant 0.000000e+00 : bf16
    %14 = vector.broadcast %cst_11 : bf16 to vector<2x10x1x4xbf16>
    %c0_12 = arith.constant 0 : index
    %c0_13 = arith.constant 0 : index
    %c0_14 = arith.constant 0 : index
    %c0_15 = arith.constant 0 : index
    %15 = vector.load %arg10[%c0_12, %c0_13, %c0_14, %c0_15] : memref<2x10x10x4xbf16, #tpu.memory_space<vmem>>, vector<2x10x1x4xbf16>
    tpu.vector_store %arg10[%c0_12, %c0_13, %c0_14, %c0_15], %14 {strides = array<i32>} : memref<2x10x10x4xbf16, #tpu.memory_space<vmem>>, vector<2x10x1x4xbf16>,
    %cst_16 = arith.constant 0.000000e+00 : bf16
    %16 = vector.broadcast %cst_16 : bf16 to vector<2x10x1x4xbf16>
    %c0_17 = arith.constant 0 : index
    %c0_18 = arith.constant 0 : index
    %c9_19 = arith.constant 9 : index
    %c0_20 = arith.constant 0 : index
    %17 = vector.load %arg10[%c0_17, %c0_18, %c9_19, %c0_20] : memref<2x10x10x4xbf16, #tpu.memory_space<vmem>>, vector<2x10x1x4xbf16>
    tpu.vector_store %arg10[%c0_17, %c0_18, %c9_19, %c0_20], %16 {strides = array<i32>} : memref<2x10x10x4xbf16, #tpu.memory_space<vmem>>, vector<2x10x1x4xbf16>,
    %c0_21 = arith.constant 0 : index
    %c1 = arith.constant 1 : index
    %c1_22 = arith.constant 1 : index
    %c0_23 = arith.constant 0 : index
    %18 = vector.load %arg10[%c0_21, %c1, %c1_22, %c0_23] : memref<2x10x10x4xbf16, #tpu.memory_space<vmem>>, vector<2x8x8x4xbf16>
    tpu.vector_store %arg10[%c0_21, %c1, %c1_22, %c0_23], %9 {strides = array<i32>} : memref<2x10x10x4xbf16, #tpu.memory_space<vmem>>, vector<2x8x8x4xbf16>,
    %cst_24 = arith.constant 0.000000e+00 : f32
    %19 = vector.broadcast %cst_24 : f32 to vector<128x8xf32>
    %c0_25 = arith.constant 0 : index
    %c0_26 = arith.constant 0 : index
    %c0_27 = arith.constant 0 : index
    %c0_28 = arith.constant 0 : index
    %20 = vector.load %arg10[%c0_25, %c0_26, %c0_27, %c0_28] : memref<2x10x10x4xbf16, #tpu.memory_space<vmem>>, vector<2x8x8x4xbf16>
    %21 = vector.shape_cast %20 : vector<2x8x8x4xbf16> to vector<128x4xbf16>
    %c0_29 = arith.constant 0 : index
    %c0_30 = arith.constant 0 : index
    %c0_31 = arith.constant 0 : index
    %22 = vector.load %arg1[%c0_29, %c0_30, %c0_31] : memref<9x4x8xbf16, #tpu.memory_space<vmem>>, vector<1x4x8xbf16>
    %23 = vector.shape_cast %22 : vector<1x4x8xbf16> to vector<4x8xbf16>
    %cst_32 = arith.constant dense<0.000000e+00> : vector<128x8xf32>
    %24 = tpu.matmul %21, %23, %cst_32 {dimension_numbers = #tpu.dot_dimension_numbers<[1], [0], [0], [1], [0, 0, 1, 1], [], []>} : vector<128x4xbf16>, vector<4x8xbf16>, vector<128x8xf32> -> vector<128x8xf32>
    %25 = arith.addf %19, %24 : vector<128x8xf32>
    %c0_33 = arith.constant 0 : index
    %c0_34 = arith.constant 0 : index
    %c1_35 = arith.constant 1 : index
    %c0_36 = arith.constant 0 : index
    %26 = vector.load %arg10[%c0_33, %c0_34, %c1_35, %c0_36] : memref<2x10x10x4xbf16, #tpu.memory_space<vmem>>, vector<2x8x8x4xbf16>
    %27 = vector.shape_cast %26 : vector<2x8x8x4xbf16> to vector<128x4xbf16>
    %c1_37 = arith.constant 1 : index
    %c0_38 = arith.constant 0 : index
    %c0_39 = arith.constant 0 : index
    %28 = vector.load %arg1[%c1_37, %c0_38, %c0_39] : memref<9x4x8xbf16, #tpu.memory_space<vmem>>, vector<1x4x8xbf16>
    %29 = vector.shape_cast %28 : vector<1x4x8xbf16> to vector<4x8xbf16>
    %cst_40 = arith.constant dense<0.000000e+00> : vector<128x8xf32>
    %30 = tpu.matmul %27, %29, %cst_40 {dimension_numbers = #tpu.dot_dimension_numbers<[1], [0], [0], [1], [0, 0, 1, 1], [], []>} : vector<128x4xbf16>, vector<4x8xbf16>, vector<128x8xf32> -> vector<128x8xf32>
    %31 = arith.addf %25, %30 : vector<128x8xf32>
    %c0_41 = arith.constant 0 : index
    %c0_42 = arith.constant 0 : index
    %c2 = arith.constant 2 : index
    %c0_43 = arith.constant 0 : index
    %32 = vector.load %arg10[%c0_41, %c0_42, %c2, %c0_43] : memref<2x10x10x4xbf16, #tpu.memory_space<vmem>>, vector<2x8x8x4xbf16>
    %33 = vector.shape_cast %32 : vector<2x8x8x4xbf16> to vector<128x4xbf16>
    %c2_44 = arith.constant 2 : index
    %c0_45 = arith.constant 0 : index
    %c0_46 = arith.constant 0 : index
    %34 = vector.load %arg1[%c2_44, %c0_45, %c0_46] : memref<9x4x8xbf16, #tpu.memory_space<vmem>>, vector<1x4x8xbf16>
    %35 = vector.shape_cast %34 : vector<1x4x8xbf16> to vector<4x8xbf16>
    %cst_47 = arith.constant dense<0.000000e+00> : vector<128x8xf32>
    %36 = tpu.matmul %33, %35, %cst_47 {dimension_numbers = #tpu.dot_dimension_numbers<[1], [0], [0], [1], [0, 0, 1, 1], [], []>} : vector<128x4xbf16>, vector<4x8xbf16>, vector<128x8xf32> -> vector<128x8xf32>
    %37 = arith.addf %31, %36 : vector<128x8xf32>
    %c0_48 = arith.constant 0 : index
    %c1_49 = arith.constant 1 : index
    %c0_50 = arith.constant 0 : index
    %c0_51 = arith.constant 0 : index
    %38 = vector.load %arg10[%c0_48, %c1_49, %c0_50, %c0_51] : memref<2x10x10x4xbf16, #tpu.memory_space<vmem>>, vector<2x8x8x4xbf16>
    %39 = vector.shape_cast %38 : vector<2x8x8x4xbf16> to vector<128x4xbf16>
    %c3 = arith.constant 3 : index
    %c0_52 = arith.constant 0 : index
    %c0_53 = arith.constant 0 : index
    %40 = vector.load %arg1[%c3, %c0_52, %c0_53] : memref<9x4x8xbf16, #tpu.memory_space<vmem>>, vector<1x4x8xbf16>
    %41 = vector.shape_cast %40 : vector<1x4x8xbf16> to vector<4x8xbf16>
    %cst_54 = arith.constant dense<0.000000e+00> : vector<128x8xf32>
    %42 = tpu.matmul %39, %41, %cst_54 {dimension_numbers = #tpu.dot_dimension_numbers<[1], [0], [0], [1], [0, 0, 1, 1], [], []>} : vector<128x4xbf16>, vector<4x8xbf16>, vector<128x8xf32> -> vector<128x8xf32>
    %43 = arith.addf %37, %42 : vector<128x8xf32>
    %c0_55 = arith.constant 0 : index
    %c1_56 = arith.constant 1 : index
    %c1_57 = arith.constant 1 : index
    %c0_58 = arith.constant 0 : index
    %44 = vector.load %arg10[%c0_55, %c1_56, %c1_57, %c0_58] : memref<2x10x10x4xbf16, #tpu.memory_space<vmem>>, vector<2x8x8x4xbf16>
    %45 = vector.shape_cast %44 : vector<2x8x8x4xbf16> to vector<128x4xbf16>
    %c4 = arith.constant 4 : index
    %c0_59 = arith.constant 0 : index
    %c0_60 = arith.constant 0 : index
    %46 = vector.load %arg1[%c4, %c0_59, %c0_60] : memref<9x4x8xbf16, #tpu.memory_space<vmem>>, vector<1x4x8xbf16>
    %47 = vector.shape_cast %46 : vector<1x4x8xbf16> to vector<4x8xbf16>
    %cst_61 = arith.constant dense<0.000000e+00> : vector<128x8xf32>
    %48 = tpu.matmul %45, %47, %cst_61 {dimension_numbers = #tpu.dot_dimension_numbers<[1], [0], [0], [1], [0, 0, 1, 1], [], []>} : vector<128x4xbf16>, vector<4x8xbf16>, vector<128x8xf32> -> vector<128x8xf32>
    %49 = arith.addf %43, %48 : vector<128x8xf32>
    %c0_62 = arith.constant 0 : index
    %c1_63 = arith.constant 1 : index
    %c2_64 = arith.constant 2 : index
    %c0_65 = arith.constant 0 : index
    %50 = vector.load %arg10[%c0_62, %c1_63, %c2_64, %c0_65] : memref<2x10x10x4xbf16, #tpu.memory_space<vmem>>, vector<2x8x8x4xbf16>
    %51 = vector.shape_cast %50 : vector<2x8x8x4xbf16> to vector<128x4xbf16>
    %c5 = arith.constant 5 : index
    %c0_66 = arith.constant 0 : index
    %c0_67 = arith.constant 0 : index
    %52 = vector.load %arg1[%c5, %c0_66, %c0_67] : memref<9x4x8xbf16, #tpu.memory_space<vmem>>, vector<1x4x8xbf16>
    %53 = vector.shape_cast %52 : vector<1x4x8xbf16> to vector<4x8xbf16>
    %cst_68 = arith.constant dense<0.000000e+00> : vector<128x8xf32>
    %54 = tpu.matmul %51, %53, %cst_68 {dimension_numbers = #tpu.dot_dimension_numbers<[1], [0], [0], [1], [0, 0, 1, 1], [], []>} : vector<128x4xbf16>, vector<4x8xbf16>, vector<128x8xf32> -> vector<128x8xf32>
    %55 = arith.addf %49, %54 : vector<128x8xf32>
    %c0_69 = arith.constant 0 : index
    %c2_70 = arith.constant 2 : index
    %c0_71 = arith.constant 0 : index
    %c0_72 = arith.constant 0 : index
    %56 = vector.load %arg10[%c0_69, %c2_70, %c0_71, %c0_72] : memref<2x10x10x4xbf16, #tpu.memory_space<vmem>>, vector<2x8x8x4xbf16>
    %57 = vector.shape_cast %56 : vector<2x8x8x4xbf16> to vector<128x4xbf16>
    %c6 = arith.constant 6 : index
    %c0_73 = arith.constant 0 : index
    %c0_74 = arith.constant 0 : index
    %58 = vector.load %arg1[%c6, %c0_73, %c0_74] : memref<9x4x8xbf16, #tpu.memory_space<vmem>>, vector<1x4x8xbf16>
    %59 = vector.shape_cast %58 : vector<1x4x8xbf16> to vector<4x8xbf16>
    %cst_75 = arith.constant dense<0.000000e+00> : vector<128x8xf32>
    %60 = tpu.matmul %57, %59, %cst_75 {dimension_numbers = #tpu.dot_dimension_numbers<[1], [0], [0], [1], [0, 0, 1, 1], [], []>} : vector<128x4xbf16>, vector<4x8xbf16>, vector<128x8xf32> -> vector<128x8xf32>
    %61 = arith.addf %55, %60 : vector<128x8xf32>
    %c0_76 = arith.constant 0 : index
    %c2_77 = arith.constant 2 : index
    %c1_78 = arith.constant 1 : index
    %c0_79 = arith.constant 0 : index
    %62 = vector.load %arg10[%c0_76, %c2_77, %c1_78, %c0_79] : memref<2x10x10x4xbf16, #tpu.memory_space<vmem>>, vector<2x8x8x4xbf16>
    %63 = vector.shape_cast %62 : vector<2x8x8x4xbf16> to vector<128x4xbf16>
    %c7 = arith.constant 7 : index
    %c0_80 = arith.constant 0 : index
    %c0_81 = arith.constant 0 : index
    %64 = vector.load %arg1[%c7, %c0_80, %c0_81] : memref<9x4x8xbf16, #tpu.memory_space<vmem>>, vector<1x4x8xbf16>
    %65 = vector.shape_cast %64 : vector<1x4x8xbf16> to vector<4x8xbf16>
    %cst_82 = arith.constant dense<0.000000e+00> : vector<128x8xf32>
    %66 = tpu.matmul %63, %65, %cst_82 {dimension_numbers = #tpu.dot_dimension_numbers<[1], [0], [0], [1], [0, 0, 1, 1], [], []>} : vector<128x4xbf16>, vector<4x8xbf16>, vector<128x8xf32> -> vector<128x8xf32>
    %67 = arith.addf %61, %66 : vector<128x8xf32>
    %c0_83 = arith.constant 0 : index
    %c2_84 = arith.constant 2 : index
    %c2_85 = arith.constant 2 : index
    %c0_86 = arith.constant 0 : index
    %68 = vector.load %arg10[%c0_83, %c2_84, %c2_85, %c0_86] : memref<2x10x10x4xbf16, #tpu.memory_space<vmem>>, vector<2x8x8x4xbf16>
    %69 = vector.shape_cast %68 : vector<2x8x8x4xbf16> to vector<128x4xbf16>
    %c8 = arith.constant 8 : index
    %c0_87 = arith.constant 0 : index
    %c0_88 = arith.constant 0 : index
    %70 = vector.load %arg1[%c8, %c0_87, %c0_88] : memref<9x4x8xbf16, #tpu.memory_space<vmem>>, vector<1x4x8xbf16>
    %71 = vector.shape_cast %70 : vector<1x4x8xbf16> to vector<4x8xbf16>
    %cst_89 = arith.constant dense<0.000000e+00> : vector<128x8xf32>
    %72 = tpu.matmul %69, %71, %cst_89 {dimension_numbers = #tpu.dot_dimension_numbers<[1], [0], [0], [1], [0, 0, 1, 1], [], []>} : vector<128x4xbf16>, vector<4x8xbf16>, vector<128x8xf32> -> vector<128x8xf32>
    %73 = arith.addf %67, %72 : vector<128x8xf32>
    %c0_90 = arith.constant 0 : index
    %c0_91 = arith.constant 0 : index
    %74 = vector.load %arg2[%c0_90, %c0_91] : memref<1x8xf32, #tpu.memory_space<vmem>>, vector<1x8xf32>
    %c0_92 = arith.constant 0 : index
    %c0_93 = arith.constant 0 : index
    %75 = vector.load %arg3[%c0_92, %c0_93] : memref<1x8xf32, #tpu.memory_space<vmem>>, vector<1x8xf32>
    %cst_94 = arith.constant dense<0.000000e+00> : vector<8xf32>
    %76 = vector.multi_reduction <add>, %73, %cst_94 [0] : vector<128x8xf32> to vector<8xf32>
    %77 = vector.shape_cast %76 : vector<8xf32> to vector<1x8xf32>
    %78 = arith.mulf %73, %73 : vector<128x8xf32>
    %cst_95 = arith.constant dense<0.000000e+00> : vector<8xf32>
    %79 = vector.multi_reduction <add>, %78, %cst_95 [0] : vector<128x8xf32> to vector<8xf32>
    %80 = vector.shape_cast %79 : vector<8xf32> to vector<1x8xf32>
    %cst_96 = arith.constant 7.812500e-03 : f32
    %81 = vector.broadcast %cst_96 : f32 to vector<1x8xf32>
    %82 = arith.mulf %77, %81 : vector<1x8xf32>
    %cst_97 = arith.constant 7.812500e-03 : f32
    %83 = vector.broadcast %cst_97 : f32 to vector<1x8xf32>
    %84 = arith.mulf %80, %83 : vector<1x8xf32>
    %85 = arith.mulf %82, %82 : vector<1x8xf32>
    %86 = arith.subf %84, %85 : vector<1x8xf32>
    %cst_98 = arith.constant 9.99999974E-6 : f32
    %87 = vector.broadcast %cst_98 : f32 to vector<1x8xf32>
    %88 = arith.addf %86, %87 : vector<1x8xf32>
    %89 = math.rsqrt %88 : vector<1x8xf32>
    %90 = arith.mulf %74, %89 : vector<1x8xf32>
    %91 = arith.mulf %82, %90 : vector<1x8xf32>
    %92 = arith.subf %75, %91 : vector<1x8xf32>
    %93 = vector.broadcast %90 : vector<1x8xf32> to vector<128x8xf32>
    %94 = arith.mulf %73, %93 : vector<128x8xf32>
    %95 = vector.broadcast %92 : vector<1x8xf32> to vector<128x8xf32>
    %96 = arith.addf %94, %95 : vector<128x8xf32>
    %cst_99 = arith.constant 0.000000e+00 : f32
    %97 = vector.broadcast %cst_99 : f32 to vector<128x8xf32>
    %98 = arith.maximumf %96, %97 : vector<128x8xf32>
    %99 = vector.shape_cast %98 : vector<128x8xf32> to vector<2x8x8x8xf32>
    %100 = arith.truncf %99 : vector<2x8x8x8xf32> to vector<2x8x8x8xbf16>
    %cst_100 = arith.constant 0.000000e+00 : bf16
    %101 = vector.broadcast %cst_100 : bf16 to vector<2x1x10x8xbf16>
    %c0_101 = arith.constant 0 : index
    %c0_102 = arith.constant 0 : index
    %c0_103 = arith.constant 0 : index
    %c0_104 = arith.constant 0 : index
    %102 = vector.load %arg11[%c0_101, %c0_102, %c0_103, %c0_104] : memref<2x10x10x8xbf16, #tpu.memory_space<vmem>>, vector<2x1x10x8xbf16>
    tpu.vector_store %arg11[%c0_101, %c0_102, %c0_103, %c0_104], %101 {strides = array<i32>} : memref<2x10x10x8xbf16, #tpu.memory_space<vmem>>, vector<2x1x10x8xbf16>,
    %cst_105 = arith.constant 0.000000e+00 : bf16
    %103 = vector.broadcast %cst_105 : bf16 to vector<2x1x10x8xbf16>
    %c0_106 = arith.constant 0 : index
    %c9_107 = arith.constant 9 : index
    %c0_108 = arith.constant 0 : index
    %c0_109 = arith.constant 0 : index
    %104 = vector.load %arg11[%c0_106, %c9_107, %c0_108, %c0_109] : memref<2x10x10x8xbf16, #tpu.memory_space<vmem>>, vector<2x1x10x8xbf16>
    tpu.vector_store %arg11[%c0_106, %c9_107, %c0_108, %c0_109], %103 {strides = array<i32>} : memref<2x10x10x8xbf16, #tpu.memory_space<vmem>>, vector<2x1x10x8xbf16>,
    %cst_110 = arith.constant 0.000000e+00 : bf16
    %105 = vector.broadcast %cst_110 : bf16 to vector<2x10x1x8xbf16>
    %c0_111 = arith.constant 0 : index
    %c0_112 = arith.constant 0 : index
    %c0_113 = arith.constant 0 : index
    %c0_114 = arith.constant 0 : index
    %106 = vector.load %arg11[%c0_111, %c0_112, %c0_113, %c0_114] : memref<2x10x10x8xbf16, #tpu.memory_space<vmem>>, vector<2x10x1x8xbf16>
    tpu.vector_store %arg11[%c0_111, %c0_112, %c0_113, %c0_114], %105 {strides = array<i32>} : memref<2x10x10x8xbf16, #tpu.memory_space<vmem>>, vector<2x10x1x8xbf16>,
    %cst_115 = arith.constant 0.000000e+00 : bf16
    %107 = vector.broadcast %cst_115 : bf16 to vector<2x10x1x8xbf16>
    %c0_116 = arith.constant 0 : index
    %c0_117 = arith.constant 0 : index
    %c9_118 = arith.constant 9 : index
    %c0_119 = arith.constant 0 : index
    %108 = vector.load %arg11[%c0_116, %c0_117, %c9_118, %c0_119] : memref<2x10x10x8xbf16, #tpu.memory_space<vmem>>, vector<2x10x1x8xbf16>
    tpu.vector_store %arg11[%c0_116, %c0_117, %c9_118, %c0_119], %107 {strides = array<i32>} : memref<2x10x10x8xbf16, #tpu.memory_space<vmem>>, vector<2x10x1x8xbf16>,
    %c0_120 = arith.constant 0 : index
    %c1_121 = arith.constant 1 : index
    %c1_122 = arith.constant 1 : index
    %c0_123 = arith.constant 0 : index
    %109 = vector.load %arg11[%c0_120, %c1_121, %c1_122, %c0_123] : memref<2x10x10x8xbf16, #tpu.memory_space<vmem>>, vector<2x8x8x8xbf16>
    tpu.vector_store %arg11[%c0_120, %c1_121, %c1_122, %c0_123], %100 {strides = array<i32>} : memref<2x10x10x8xbf16, #tpu.memory_space<vmem>>, vector<2x8x8x8xbf16>,
    %cst_124 = arith.constant 0.000000e+00 : f32
    %110 = vector.broadcast %cst_124 : f32 to vector<128x8xf32>
    %c0_125 = arith.constant 0 : index
    %c0_126 = arith.constant 0 : index
    %c0_127 = arith.constant 0 : index
    %c0_128 = arith.constant 0 : index
    %111 = vector.load %arg11[%c0_125, %c0_126, %c0_127, %c0_128] : memref<2x10x10x8xbf16, #tpu.memory_space<vmem>>, vector<2x8x8x8xbf16>
    %112 = vector.shape_cast %111 : vector<2x8x8x8xbf16> to vector<128x8xbf16>
    %c0_129 = arith.constant 0 : index
    %c0_130 = arith.constant 0 : index
    %c0_131 = arith.constant 0 : index
    %113 = vector.load %arg4[%c0_129, %c0_130, %c0_131] : memref<9x8x8xbf16, #tpu.memory_space<vmem>>, vector<1x8x8xbf16>
    %114 = vector.shape_cast %113 : vector<1x8x8xbf16> to vector<8x8xbf16>
    %cst_132 = arith.constant dense<0.000000e+00> : vector<128x8xf32>
    %115 = tpu.matmul %112, %114, %cst_132 {dimension_numbers = #tpu.dot_dimension_numbers<[1], [0], [0], [1], [0, 0, 1, 1], [], []>} : vector<128x8xbf16>, vector<8x8xbf16>, vector<128x8xf32> -> vector<128x8xf32>
    %116 = arith.addf %110, %115 : vector<128x8xf32>
    %c0_133 = arith.constant 0 : index
    %c0_134 = arith.constant 0 : index
    %c1_135 = arith.constant 1 : index
    %c0_136 = arith.constant 0 : index
    %117 = vector.load %arg11[%c0_133, %c0_134, %c1_135, %c0_136] : memref<2x10x10x8xbf16, #tpu.memory_space<vmem>>, vector<2x8x8x8xbf16>
    %118 = vector.shape_cast %117 : vector<2x8x8x8xbf16> to vector<128x8xbf16>
    %c1_137 = arith.constant 1 : index
    %c0_138 = arith.constant 0 : index
    %c0_139 = arith.constant 0 : index
    %119 = vector.load %arg4[%c1_137, %c0_138, %c0_139] : memref<9x8x8xbf16, #tpu.memory_space<vmem>>, vector<1x8x8xbf16>
    %120 = vector.shape_cast %119 : vector<1x8x8xbf16> to vector<8x8xbf16>
    %cst_140 = arith.constant dense<0.000000e+00> : vector<128x8xf32>
    %121 = tpu.matmul %118, %120, %cst_140 {dimension_numbers = #tpu.dot_dimension_numbers<[1], [0], [0], [1], [0, 0, 1, 1], [], []>} : vector<128x8xbf16>, vector<8x8xbf16>, vector<128x8xf32> -> vector<128x8xf32>
    %122 = arith.addf %116, %121 : vector<128x8xf32>
    %c0_141 = arith.constant 0 : index
    %c0_142 = arith.constant 0 : index
    %c2_143 = arith.constant 2 : index
    %c0_144 = arith.constant 0 : index
    %123 = vector.load %arg11[%c0_141, %c0_142, %c2_143, %c0_144] : memref<2x10x10x8xbf16, #tpu.memory_space<vmem>>, vector<2x8x8x8xbf16>
    %124 = vector.shape_cast %123 : vector<2x8x8x8xbf16> to vector<128x8xbf16>
    %c2_145 = arith.constant 2 : index
    %c0_146 = arith.constant 0 : index
    %c0_147 = arith.constant 0 : index
    %125 = vector.load %arg4[%c2_145, %c0_146, %c0_147] : memref<9x8x8xbf16, #tpu.memory_space<vmem>>, vector<1x8x8xbf16>
    %126 = vector.shape_cast %125 : vector<1x8x8xbf16> to vector<8x8xbf16>
    %cst_148 = arith.constant dense<0.000000e+00> : vector<128x8xf32>
    %127 = tpu.matmul %124, %126, %cst_148 {dimension_numbers = #tpu.dot_dimension_numbers<[1], [0], [0], [1], [0, 0, 1, 1], [], []>} : vector<128x8xbf16>, vector<8x8xbf16>, vector<128x8xf32> -> vector<128x8xf32>
    %128 = arith.addf %122, %127 : vector<128x8xf32>
    %c0_149 = arith.constant 0 : index
    %c1_150 = arith.constant 1 : index
    %c0_151 = arith.constant 0 : index
    %c0_152 = arith.constant 0 : index
    %129 = vector.load %arg11[%c0_149, %c1_150, %c0_151, %c0_152] : memref<2x10x10x8xbf16, #tpu.memory_space<vmem>>, vector<2x8x8x8xbf16>
    %130 = vector.shape_cast %129 : vector<2x8x8x8xbf16> to vector<128x8xbf16>
    %c3_153 = arith.constant 3 : index
    %c0_154 = arith.constant 0 : index
    %c0_155 = arith.constant 0 : index
    %131 = vector.load %arg4[%c3_153, %c0_154, %c0_155] : memref<9x8x8xbf16, #tpu.memory_space<vmem>>, vector<1x8x8xbf16>
    %132 = vector.shape_cast %131 : vector<1x8x8xbf16> to vector<8x8xbf16>
    %cst_156 = arith.constant dense<0.000000e+00> : vector<128x8xf32>
    %133 = tpu.matmul %130, %132, %cst_156 {dimension_numbers = #tpu.dot_dimension_numbers<[1], [0], [0], [1], [0, 0, 1, 1], [], []>} : vector<128x8xbf16>, vector<8x8xbf16>, vector<128x8xf32> -> vector<128x8xf32>
    %134 = arith.addf %128, %133 : vector<128x8xf32>
    %c0_157 = arith.constant 0 : index
    %c1_158 = arith.constant 1 : index
    %c1_159 = arith.constant 1 : index
    %c0_160 = arith.constant 0 : index
    %135 = vector.load %arg11[%c0_157, %c1_158, %c1_159, %c0_160] : memref<2x10x10x8xbf16, #tpu.memory_space<vmem>>, vector<2x8x8x8xbf16>
    %136 = vector.shape_cast %135 : vector<2x8x8x8xbf16> to vector<128x8xbf16>
    %c4_161 = arith.constant 4 : index
    %c0_162 = arith.constant 0 : index
    %c0_163 = arith.constant 0 : index
    %137 = vector.load %arg4[%c4_161, %c0_162, %c0_163] : memref<9x8x8xbf16, #tpu.memory_space<vmem>>, vector<1x8x8xbf16>
    %138 = vector.shape_cast %137 : vector<1x8x8xbf16> to vector<8x8xbf16>
    %cst_164 = arith.constant dense<0.000000e+00> : vector<128x8xf32>
    %139 = tpu.matmul %136, %138, %cst_164 {dimension_numbers = #tpu.dot_dimension_numbers<[1], [0], [0], [1], [0, 0, 1, 1], [], []>} : vector<128x8xbf16>, vector<8x8xbf16>, vector<128x8xf32> -> vector<128x8xf32>
    %140 = arith.addf %134, %139 : vector<128x8xf32>
    %c0_165 = arith.constant 0 : index
    %c1_166 = arith.constant 1 : index
    %c2_167 = arith.constant 2 : index
    %c0_168 = arith.constant 0 : index
    %141 = vector.load %arg11[%c0_165, %c1_166, %c2_167, %c0_168] : memref<2x10x10x8xbf16, #tpu.memory_space<vmem>>, vector<2x8x8x8xbf16>
    %142 = vector.shape_cast %141 : vector<2x8x8x8xbf16> to vector<128x8xbf16>
    %c5_169 = arith.constant 5 : index
    %c0_170 = arith.constant 0 : index
    %c0_171 = arith.constant 0 : index
    %143 = vector.load %arg4[%c5_169, %c0_170, %c0_171] : memref<9x8x8xbf16, #tpu.memory_space<vmem>>, vector<1x8x8xbf16>
    %144 = vector.shape_cast %143 : vector<1x8x8xbf16> to vector<8x8xbf16>
    %cst_172 = arith.constant dense<0.000000e+00> : vector<128x8xf32>
    %145 = tpu.matmul %142, %144, %cst_172 {dimension_numbers = #tpu.dot_dimension_numbers<[1], [0], [0], [1], [0, 0, 1, 1], [], []>} : vector<128x8xbf16>, vector<8x8xbf16>, vector<128x8xf32> -> vector<128x8xf32>
    %146 = arith.addf %140, %145 : vector<128x8xf32>
    %c0_173 = arith.constant 0 : index
    %c2_174 = arith.constant 2 : index
    %c0_175 = arith.constant 0 : index
    %c0_176 = arith.constant 0 : index
    %147 = vector.load %arg11[%c0_173, %c2_174, %c0_175, %c0_176] : memref<2x10x10x8xbf16, #tpu.memory_space<vmem>>, vector<2x8x8x8xbf16>
    %148 = vector.shape_cast %147 : vector<2x8x8x8xbf16> to vector<128x8xbf16>
    %c6_177 = arith.constant 6 : index
    %c0_178 = arith.constant 0 : index
    %c0_179 = arith.constant 0 : index
    %149 = vector.load %arg4[%c6_177, %c0_178, %c0_179] : memref<9x8x8xbf16, #tpu.memory_space<vmem>>, vector<1x8x8xbf16>
    %150 = vector.shape_cast %149 : vector<1x8x8xbf16> to vector<8x8xbf16>
    %cst_180 = arith.constant dense<0.000000e+00> : vector<128x8xf32>
    %151 = tpu.matmul %148, %150, %cst_180 {dimension_numbers = #tpu.dot_dimension_numbers<[1], [0], [0], [1], [0, 0, 1, 1], [], []>} : vector<128x8xbf16>, vector<8x8xbf16>, vector<128x8xf32> -> vector<128x8xf32>
    %152 = arith.addf %146, %151 : vector<128x8xf32>
    %c0_181 = arith.constant 0 : index
    %c2_182 = arith.constant 2 : index
    %c1_183 = arith.constant 1 : index
    %c0_184 = arith.constant 0 : index
    %153 = vector.load %arg11[%c0_181, %c2_182, %c1_183, %c0_184] : memref<2x10x10x8xbf16, #tpu.memory_space<vmem>>, vector<2x8x8x8xbf16>
    %154 = vector.shape_cast %153 : vector<2x8x8x8xbf16> to vector<128x8xbf16>
    %c7_185 = arith.constant 7 : index
    %c0_186 = arith.constant 0 : index
    %c0_187 = arith.constant 0 : index
    %155 = vector.load %arg4[%c7_185, %c0_186, %c0_187] : memref<9x8x8xbf16, #tpu.memory_space<vmem>>, vector<1x8x8xbf16>
    %156 = vector.shape_cast %155 : vector<1x8x8xbf16> to vector<8x8xbf16>
    %cst_188 = arith.constant dense<0.000000e+00> : vector<128x8xf32>
    %157 = tpu.matmul %154, %156, %cst_188 {dimension_numbers = #tpu.dot_dimension_numbers<[1], [0], [0], [1], [0, 0, 1, 1], [], []>} : vector<128x8xbf16>, vector<8x8xbf16>, vector<128x8xf32> -> vector<128x8xf32>
    %158 = arith.addf %152, %157 : vector<128x8xf32>
    %c0_189 = arith.constant 0 : index
    %c2_190 = arith.constant 2 : index
    %c2_191 = arith.constant 2 : index
    %c0_192 = arith.constant 0 : index
    %159 = vector.load %arg11[%c0_189, %c2_190, %c2_191, %c0_192] : memref<2x10x10x8xbf16, #tpu.memory_space<vmem>>, vector<2x8x8x8xbf16>
    %160 = vector.shape_cast %159 : vector<2x8x8x8xbf16> to vector<128x8xbf16>
    %c8_193 = arith.constant 8 : index
    %c0_194 = arith.constant 0 : index
    %c0_195 = arith.constant 0 : index
    %161 = vector.load %arg4[%c8_193, %c0_194, %c0_195] : memref<9x8x8xbf16, #tpu.memory_space<vmem>>, vector<1x8x8xbf16>
    %162 = vector.shape_cast %161 : vector<1x8x8xbf16> to vector<8x8xbf16>
    %cst_196 = arith.constant dense<0.000000e+00> : vector<128x8xf32>
    %163 = tpu.matmul %160, %162, %cst_196 {dimension_numbers = #tpu.dot_dimension_numbers<[1], [0], [0], [1], [0, 0, 1, 1], [], []>} : vector<128x8xbf16>, vector<8x8xbf16>, vector<128x8xf32> -> vector<128x8xf32>
    %164 = arith.addf %158, %163 : vector<128x8xf32>
    %c0_197 = arith.constant 0 : index
    %c0_198 = arith.constant 0 : index
    %165 = vector.load %arg5[%c0_197, %c0_198] : memref<1x8xf32, #tpu.memory_space<vmem>>, vector<1x8xf32>
    %c0_199 = arith.constant 0 : index
    %c0_200 = arith.constant 0 : index
    %166 = vector.load %arg6[%c0_199, %c0_200] : memref<1x8xf32, #tpu.memory_space<vmem>>, vector<1x8xf32>
    %cst_201 = arith.constant dense<0.000000e+00> : vector<8xf32>
    %167 = vector.multi_reduction <add>, %164, %cst_201 [0] : vector<128x8xf32> to vector<8xf32>
    %168 = vector.shape_cast %167 : vector<8xf32> to vector<1x8xf32>
    %169 = arith.mulf %164, %164 : vector<128x8xf32>
    %cst_202 = arith.constant dense<0.000000e+00> : vector<8xf32>
    %170 = vector.multi_reduction <add>, %169, %cst_202 [0] : vector<128x8xf32> to vector<8xf32>
    %171 = vector.shape_cast %170 : vector<8xf32> to vector<1x8xf32>
    %cst_203 = arith.constant 7.812500e-03 : f32
    %172 = vector.broadcast %cst_203 : f32 to vector<1x8xf32>
    %173 = arith.mulf %168, %172 : vector<1x8xf32>
    %cst_204 = arith.constant 7.812500e-03 : f32
    %174 = vector.broadcast %cst_204 : f32 to vector<1x8xf32>
    %175 = arith.mulf %171, %174 : vector<1x8xf32>
    %176 = arith.mulf %173, %173 : vector<1x8xf32>
    %177 = arith.subf %175, %176 : vector<1x8xf32>
    %cst_205 = arith.constant 9.99999974E-6 : f32
    %178 = vector.broadcast %cst_205 : f32 to vector<1x8xf32>
    %179 = arith.addf %177, %178 : vector<1x8xf32>
    %180 = math.rsqrt %179 : vector<1x8xf32>
    %181 = arith.mulf %165, %180 : vector<1x8xf32>
    %182 = arith.mulf %173, %181 : vector<1x8xf32>
    %183 = arith.subf %166, %182 : vector<1x8xf32>
    %184 = vector.broadcast %181 : vector<1x8xf32> to vector<128x8xf32>
    %185 = arith.mulf %164, %184 : vector<128x8xf32>
    %186 = vector.broadcast %183 : vector<1x8xf32> to vector<128x8xf32>
    %187 = arith.addf %185, %186 : vector<128x8xf32>
    %cst_206 = arith.constant 0.000000e+00 : f32
    %188 = vector.broadcast %cst_206 : f32 to vector<128x8xf32>
    %189 = arith.maximumf %187, %188 : vector<128x8xf32>
    %190 = arith.truncf %189 : vector<128x8xf32> to vector<128x8xbf16>
    %c0_207 = arith.constant 0 : index
    %c0_208 = arith.constant 0 : index
    %191 = vector.load %arg7[%c0_207, %c0_208] : memref<8x16xbf16, #tpu.memory_space<vmem>>, vector<8x16xbf16>
    %cst_209 = arith.constant dense<0.000000e+00> : vector<128x16xf32>
    %192 = tpu.matmul %190, %191, %cst_209 {dimension_numbers = #tpu.dot_dimension_numbers<[1], [0], [0], [1], [0, 0, 1, 1], [], []>} : vector<128x8xbf16>, vector<8x16xbf16>, vector<128x16xf32> -> vector<128x16xf32>
    %c0_210 = arith.constant 0 : index
    %c0_211 = arith.constant 0 : index
    %193 = vector.load %arg8[%c0_210, %c0_211] : memref<1x16xf32, #tpu.memory_space<vmem>>, vector<1x16xf32>
    %194 = vector.broadcast %193 : vector<1x16xf32> to vector<128x16xf32>
    %195 = arith.addf %192, %194 : vector<128x16xf32>
    %c0_212 = arith.constant 0 : index
    %c0_213 = arith.constant 0 : index
    %196 = vector.load %arg9[%c0_212, %c0_213] : memref<128x16xf32, #tpu.memory_space<vmem>>, vector<128x16xf32>
    tpu.vector_store %arg9[%c0_212, %c0_213], %195 {strides = array<i32>} : memref<128x16xf32, #tpu.memory_space<vmem>>, vector<128x16xf32>,
    return
  }
}

</mosaic_0001>

<llo_original>
// kernel: tile.9
$region0: #{tile.9}
  %s0 = inlined_call_operand.vmem [shape: f32[4,4], index: 0, kind: input, shape index: {}]
  %s1 = inlined_call_operand.vmem [shape: f32[1,16], index: 1, kind: output, shape index: {}]
  $region1: #{tile.9} parent=0
    #allocation0 [shape = 'u8[4096]{0}', space=vmem, size = 0x1000, scoped, tag = 'scoped mem for output reshape']
    #allocation1 [shape = 'u8[4096]{0}', space=vmem, size = 0x1000, scoped, tag = 'scoped mem for input reshape']
    %s3 = sshll.u32 1, 4
    %s4 = ssub.s32 %s3, 1
    %v5 = vld [vmem:[%s0] sm:%s4]
    %6 = vst [vmem:[#allocation1] sm:%s4] %v5
    %v7 = vld [vmem:[#allocation1] sm:$0x1]
    %vm8 = vcmask 31744
    %9 = vst.msk [vmem:[#allocation0] sm:$0x1] %vm8, %v7
    %s10 = scalar_lea.vmem [#allocation1], 3
    %v11 = vld [vmem:[%s10] sm:$0x1]
    %12 = vrot.lane.b32.xlu0 %v11, 12
    %v13 = vpop.permute.xlu0 %12
    %vm14 = vcmask 130144
    %15 = vst.msk [vmem:[#allocation0] sm:$0x1] %vm14, %v13
    %s16 = scalar_lea.vmem [#allocation1], 2
    %v17 = vld [vmem:[%s16] sm:$0x1]
    %18 = vrot.lane.b32.xlu0 %v17, 8
    %v19 = vpop.permute.xlu0 %18
    %vm20 = vcmask 97344
    %21 = vst.msk [vmem:[#allocation0] sm:$0x1] %vm20, %v19
    %s22 = scalar_lea.vmem [#allocation1], 1
    %v23 = vld [vmem:[%s22] sm:$0x1]
    %24 = vrot.lane.b32.xlu0 %v23, 4
    %v25 = vpop.permute.xlu0 %24
    %vm26 = vcmask 64544
    %27 = vst.msk [vmem:[#allocation0] sm:$0x1] %vm26, %v25
    %s29 = sshll.u32 1, 1
    %s30 = ssub.s32 %s29, 1
    %v32 = vld [vmem:[#allocation0] sm:%s30]
    %s33 = sshll.u32 1, 1
    %s34 = ssub.s32 %s33, 1
    %35 = vst [vmem:[%s1] sm:%s34] %v32

// kernel: tile.8
$region0: #{tile.8}
  #allocation2 [shape = 's32[1]{0}', space=sflag, size = 0x4, scoped, tag = 'scoped memory for tile.8']
  %s0 = inlined_call_operand.hbm [shape: f32[4], index: 0, kind: input, shape index: {}]
  %s1 = inlined_call_operand.vmem [shape: f32[4,4], index: 1, kind: output, shape index: {}]
  $region1: #{tile.8} parent=0
    #allocation0 [shape = 'u8[512]{0}', space=vmem, size = 0x400, scoped, tag = 'operand span for operand 0']
    #allocation1 [shape = 's32[1]{0}', space=sflag, size = 0x4, scoped, tag = 'scoped memory for tile.8']
    %2 = vsyncpa [#allocation1], 0
    // Predicated region
    $region2: #{tile.8} parent=1 // pred_check
      _
    $region3: #{tile.8} parent=1 // pred_check_branch
      %4 = sbr.rel (0) target = $region5
    $region4: #{tile.8} parent=1 // pred_region
      %s6 = ssub.s32 16, 16
      %7 = vsyncadd [#allocation1], %s6
      %s9 = sshll.u32 [#allocation0], 4
      %s10 = int_to_ptr.vmem [resolvable:$true] %s9
      %12 = dma.hbm_to_vmem [thread:$0]  %s0, 16, %s10, [#allocation1]
    $region5: #{tile.8} parent=1 // pred_fallthru
      _
    // Predicated region
    $region6: #{tile.8} parent=1 // pred_check
      _
    $region7: #{tile.8} parent=1 // pred_check_branch
      %14 = sbr.rel (0) target = $region9
    $region8: #{tile.8} parent=1 // pred_region
      %15 = dma.done [#allocation1], 16
    $region9: #{tile.8} parent=1 // pred_fallthru
      _
    %v16 = vld [vmem:[#allocation0] ss:$0 sm:$0xff]
    %17 = vst [vmem:[%s1] sm:$0xf] %v16
    %18 = vsyncpa [#allocation1], 1

// kernel: center2d_forward.1
$region0: #{center2d_forward.1}
  #allocation0 [shape = 'u32[]', space=smem, size = 0x4, offset = 0x4, fixed_abs, tag = 'smem constant byte address 0x4 - core index']
  #allocation1 [shape = 'u32[144,128]{1,0:T(1,128)}', space=vmem, size = 0x12000, scoped, tag = 'internal scratch']
  #allocation2 [shape = 'bf16[2,10,10,4]{3,2,1,0:T(8,128)(2,1)}', space=vmem, size = 0x14000, scoped, tag = 'scratch operand']
  #allocation3 [shape = 'bf16[2,10,10,8]{3,2,1,0:T(8,128)(2,1)}', space=vmem, size = 0x14000, scoped, tag = 'scratch operand']
  %s0 = inlined_call_operand.vmem [shape: bf16[16,2,8,8], index: 0, kind: input, shape index: {}]
  %s1 = inlined_call_operand.vmem [shape: bf16[9,4,8], index: 1, kind: input, shape index: {}]
  %s2 = inlined_call_operand.vmem [shape: f32[1,8], index: 2, kind: input, shape index: {}]
  %s3 = inlined_call_operand.vmem [shape: f32[1,8], index: 3, kind: input, shape index: {}]
  %s4 = inlined_call_operand.vmem [shape: bf16[9,8,8], index: 4, kind: input, shape index: {}]
  %s5 = inlined_call_operand.vmem [shape: f32[1,8], index: 5, kind: input, shape index: {}]
  %s6 = inlined_call_operand.vmem [shape: f32[1,8], index: 6, kind: input, shape index: {}]
  %s7 = inlined_call_operand.vmem [shape: bf16[8,16], index: 7, kind: input, shape index: {}]
  %s8 = inlined_call_operand.vmem [shape: f32[1,16], index: 8, kind: input, shape index: {}]
  %s9 = inlined_call_operand.vmem [shape: f32[128,16], index: 9, kind: output, shape index: {}]
  %s10 = sld [smem:[#allocation0]]
  $region46: #{center2d_forward.1} parent=0
    _
  %s12 = ssub.s32 1, %s10
  %s13 = scalar_select 0, %s12, %s10
  // Predicated region
  $region2: #{center2d_forward.1} parent=0 // pred_check
    _
  $region3: #{center2d_forward.1} parent=0 // pred_check_branch
    %15 = sbr.rel (0) target = $region5
  $region4: #{center2d_forward.1} parent=0 // pred_region
    _
  $region5: #{center2d_forward.1} parent=0 // pred_fallthru
    _
  // Predicated region
  $region6: #{center2d_forward.1} parent=0 // pred_check
    _
  $region7: #{center2d_forward.1} parent=0 // pred_check_branch
    %17 = sbr.rel (0) target = $region9
  $region8: #{center2d_forward.1} parent=0 // pred_region
    _
  $region9: #{center2d_forward.1} parent=0 // pred_fallthru
    _
  // Predicated region
  $region10: #{center2d_forward.1} parent=0 // pred_check
    _
  $region11: #{center2d_forward.1} parent=0 // pred_check_branch
    %19 = sbr.rel (0) target = $region13
  $region12: #{center2d_forward.1} parent=0 // pred_region
    _
  $region13: #{center2d_forward.1} parent=0 // pred_fallthru
    _
  // Predicated region
  $region14: #{center2d_forward.1} parent=0 // pred_check
    _
  $region15: #{center2d_forward.1} parent=0 // pred_check_branch
    %21 = sbr.rel (0) target = $region17
  $region16: #{center2d_forward.1} parent=0 // pred_region
    _
  $region17: #{center2d_forward.1} parent=0 // pred_fallthru
    _
  // Predicated region
  $region18: #{center2d_forward.1} parent=0 // pred_check
    _
  $region19: #{center2d_forward.1} parent=0 // pred_check_branch
    %23 = sbr.rel (0) target = $region21
  $region20: #{center2d_forward.1} parent=0 // pred_region
    _
  $region21: #{center2d_forward.1} parent=0 // pred_fallthru
    _
  // Predicated region
  $region22: #{center2d_forward.1} parent=0 // pred_check
    _
  $region23: #{center2d_forward.1} parent=0 // pred_check_branch
    %25 = sbr.rel (0) target = $region25
  $region24: #{center2d_forward.1} parent=0 // pred_region
    _
  $region25: #{center2d_forward.1} parent=0 // pred_fallthru
    _
  // Predicated region
  $region26: #{center2d_forward.1} parent=0 // pred_check
    _
  $region27: #{center2d_forward.1} parent=0 // pred_check_branch
    %27 = sbr.rel (0) target = $region29
  $region28: #{center2d_forward.1} parent=0 // pred_region
    _
  $region29: #{center2d_forward.1} parent=0 // pred_fallthru
    _
  // Predicated region
  $region30: #{center2d_forward.1} parent=0 // pred_check
    _
  $region31: #{center2d_forward.1} parent=0 // pred_check_branch
    %29 = sbr.rel (0) target = $region33
  $region32: #{center2d_forward.1} parent=0 // pred_region
    _
  $region33: #{center2d_forward.1} parent=0 // pred_fallthru
    _
  // Predicated region
  $region34: #{center2d_forward.1} parent=0 // pred_check
    _
  $region35: #{center2d_forward.1} parent=0 // pred_check_branch
    %31 = sbr.rel (0) target = $region37
  $region36: #{center2d_forward.1} parent=0 // pred_region
    _
  $region37: #{center2d_forward.1} parent=0 // pred_fallthru
    _
  %v33 = vld [vmem:[%s0] sm:$0xf]
  %v34 = vld [vmem:[%s0 + $0x4] sm:$0xf]
  %v35 = vld [vmem:[%s0 + $0x8] sm:$0xf]
  %v36 = vld [vmem:[%s0 + $0xc] sm:$0xf]
  %v37 = vld [vmem:[%s0 + $0x10] sm:$0xf]
  %v38 = vld [vmem:[%s0 + $0x14] sm:$0xf]
  %v39 = vld [vmem:[%s0 + $0x18] sm:$0xf]
  %v40 = vld [vmem:[%s0 + $0x1c] sm:$0xf]
  %v41 = vld [vmem:[%s0 + $0x20] sm:$0xf]
  %v42 = vld [vmem:[%s0 + $0x24] sm:$0xf]
  %v43 = vld [vmem:[%s0 + $0x28] sm:$0xf]
  %v44 = vld [vmem:[%s0 + $0x2c] sm:$0xf]
  %v45 = vld [vmem:[%s0 + $0x30] sm:$0xf]
  %v46 = vld [vmem:[%s0 + $0x34] sm:$0xf]
  %v47 = vld [vmem:[%s0 + $0x38] sm:$0xf]
  %v48 = vld [vmem:[%s0 + $0x3c] sm:$0xf]
  %v49 = vld [vmem:[%s0 + $0x40] sm:$0xf]
  %v50 = vld [vmem:[%s0 + $0x44] sm:$0xf]
  %v51 = vld [vmem:[%s0 + $0x48] sm:$0xf]
  %v52 = vld [vmem:[%s0 + $0x4c] sm:$0xf]
  %v53 = vld [vmem:[%s0 + $0x50] sm:$0xf]
  %v54 = vld [vmem:[%s0 + $0x54] sm:$0xf]
  %v55 = vld [vmem:[%s0 + $0x58] sm:$0xf]
  %v56 = vld [vmem:[%s0 + $0x5c] sm:$0xf]
  %v57 = vld [vmem:[%s0 + $0x60] sm:$0xf]
  %v58 = vld [vmem:[%s0 + $0x64] sm:$0xf]
  %v59 = vld [vmem:[%s0 + $0x68] sm:$0xf]
  %v60 = vld [vmem:[%s0 + $0x6c] sm:$0xf]
  %v61 = vld [vmem:[%s0 + $0x70] sm:$0xf]
  %v62 = vld [vmem:[%s0 + $0x74] sm:$0xf]
  %v63 = vld [vmem:[%s0 + $0x78] sm:$0xf]
  %v64 = vld [vmem:[%s0 + $0x7c] sm:$0xf]
  %v65 = vmax.bf16 %v33, %v34
  %v66 = vmax.bf16 %v35, %v36
  %v67 = vmax.bf16 %v37, %v38
  %v68 = vmax.bf16 %v39, %v40
  %v69 = vmax.bf16 %v41, %v42
  %v70 = vmax.bf16 %v43, %v44
  %v71 = vmax.bf16 %v45, %v46
  %v72 = vmax.bf16 %v47, %v48
  %v73 = vmax.bf16 %v49, %v50
  %v74 = vmax.bf16 %v51, %v52
  %v75 = vmax.bf16 %v53, %v54
  %v76 = vmax.bf16 %v55, %v56
  %v77 = vmax.bf16 %v57, %v58
  %v78 = vmax.bf16 %v59, %v60
  %v79 = vmax.bf16 %v61, %v62
  %v80 = vmax.bf16 %v63, %v64
  %97 = vrot.lane.b32.xlu0 %v65, 124
  %v98 = vpop.permute.xlu0 %97
  %99 = vrot.lane.b32.xlu0 %v66, 124
  %v100 = vpop.permute.xlu0 %99
  %101 = vrot.lane.b32.xlu0 %v67, 124
  %v102 = vpop.permute.xlu0 %101
  %103 = vrot.lane.b32.xlu0 %v68, 124
  %v104 = vpop.permute.xlu0 %103
  %105 = vrot.lane.b32.xlu0 %v69, 124
  %v106 = vpop.permute.xlu0 %105
  %107 = vrot.lane.b32.xlu0 %v70, 124
  %v108 = vpop.permute.xlu0 %107
  %109 = vrot.lane.b32.xlu0 %v71, 124
  %v110 = vpop.permute.xlu0 %109
  %111 = vrot.lane.b32.xlu0 %v72, 124
  %v112 = vpop.permute.xlu0 %111
  %113 = vrot.lane.b32.xlu0 %v73, 124
  %v114 = vpop.permute.xlu0 %113
  %115 = vrot.lane.b32.xlu0 %v74, 124
  %v116 = vpop.permute.xlu0 %115
  %117 = vrot.lane.b32.xlu0 %v75, 124
  %v118 = vpop.permute.xlu0 %117
  %119 = vrot.lane.b32.xlu0 %v76, 124
  %v120 = vpop.permute.xlu0 %119
  %121 = vrot.lane.b32.xlu0 %v77, 124
  %v122 = vpop.permute.xlu0 %121
  %123 = vrot.lane.b32.xlu0 %v78, 124
  %v124 = vpop.permute.xlu0 %123
  %125 = vrot.lane.b32.xlu0 %v79, 124
  %v126 = vpop.permute.xlu0 %125
  %127 = vrot.lane.b32.xlu0 %v80, 124
  %v128 = vpop.permute.xlu0 %127
  %v145 = vmax.bf16 %v65, %v98
  %v146 = vmax.bf16 %v66, %v100
  %v147 = vmax.bf16 %v67, %v102
  %v148 = vmax.bf16 %v68, %v104
  %v149 = vmax.bf16 %v69, %v106
  %v150 = vmax.bf16 %v70, %v108
  %v151 = vmax.bf16 %v71, %v110
  %v152 = vmax.bf16 %v72, %v112
  %v153 = vmax.bf16 %v73, %v114
  %v154 = vmax.bf16 %v74, %v116
  %v155 = vmax.bf16 %v75, %v118
  %v156 = vmax.bf16 %v76, %v120
  %v157 = vmax.bf16 %v77, %v122
  %v158 = vmax.bf16 %v78, %v124
  %v159 = vmax.bf16 %v79, %v126
  %v160 = vmax.bf16 %v80, %v128
  %vm161 = vcmask 27648
  %162 = vst.msk [vmem:[#allocation2] sm:$0xf] %vm161, 0
  %vm163 = vcmask 24576
  %164 = vst.msk [vmem:[#allocation2 + $0x4] sm:$0x1] %vm163, 0
  %165 = vst.msk [vmem:[#allocation2 + $0x50] sm:$0xf] %vm161, 0
  %166 = vst.msk [vmem:[#allocation2 + $0x54] sm:$0x1] %vm163, 0
  %s167 = scalar_lea.vmem [#allocation2], 72
  %168 = vst.msk [vmem:[%s167] sm:$0xf] %vm161, 0
  %169 = vst.msk [vmem:[%s167 + $0x4] sm:$0x1] %vm163, 0
  %170 = vst.msk [vmem:[%s167 + $0x50] sm:$0xf] %vm161, 0
  %171 = vst.msk [vmem:[%s167 + $0x54] sm:$0x1] %vm163, 0
  %vm172 = vcmask 24576
  %vm173 = vsmask.f32 256
  %vm174 = vmand %vm172, %vm173
  %v175 = vld [vmem:[#allocation2] sm:$0x1]
  %v176 = vsel %vm174, 0, %v175
  %177 = vst [vmem:[#allocation2] sm:$0x1] %v176
  %v178 = vld [vmem:[#allocation2 + $0x8] sm:$0x1]
  %v179 = vsel %vm174, 0, %v178
  %180 = vst [vmem:[#allocation2 + $0x8] sm:$0x1] %v179
  %v181 = vld [vmem:[#allocation2 + $0x10] sm:$0x1]
  %v182 = vsel %vm174, 0, %v181
  %183 = vst [vmem:[#allocation2 + $0x10] sm:$0x1] %v182
  %v184 = vld [vmem:[#allocation2 + $0x18] sm:$0x1]
  %v185 = vsel %vm174, 0, %v184
  %186 = vst [vmem:[#allocation2 + $0x18] sm:$0x1] %v185
  %v187 = vld [vmem:[#allocation2 + $0x20] sm:$0x1]
  %v188 = vsel %vm174, 0, %v187
  %189 = vst [vmem:[#allocation2 + $0x20] sm:$0x1] %v188
  %v190 = vld [vmem:[#allocation2 + $0x28] sm:$0x1]
  %v191 = vsel %vm174, 0, %v190
  %192 = vst [vmem:[#allocation2 + $0x28] sm:$0x1] %v191
  %v193 = vld [vmem:[#allocation2 + $0x30] sm:$0x1]
  %v194 = vsel %vm174, 0, %v193
  %195 = vst [vmem:[#allocation2 + $0x30] sm:$0x1] %v194
  %v196 = vld [vmem:[#allocation2 + $0x38] sm:$0x1]
  %v197 = vsel %vm174, 0, %v196
  %198 = vst [vmem:[#allocation2 + $0x38] sm:$0x1] %v197
  %v199 = vld [vmem:[#allocation2 + $0x40] sm:$0x1]
  %v200 = vsel %vm174, 0, %v199
  %201 = vst [vmem:[#allocation2 + $0x40] sm:$0x1] %v200
  %v202 = vld [vmem:[#allocation2 + $0x48] sm:$0x1]
  %v203 = vsel %vm174, 0, %v202
  %204 = vst [vmem:[#allocation2 + $0x48] sm:$0x1] %v203
  %v205 = vld [vmem:[#allocation2 + $0x50] sm:$0x1]
  %v206 = vsel %vm174, 0, %v205
  %207 = vst [vmem:[#allocation2 + $0x50] sm:$0x1] %v206
  %v208 = vld [vmem:[#allocation2 + $0x58] sm:$0x1]
  %v209 = vsel %vm174, 0, %v208
  %210 = vst [vmem:[#allocation2 + $0x58] sm:$0x1] %v209
  %v211 = vld [vmem:[#allocation2 + $0x60] sm:$0x1]
  %v212 = vsel %vm174, 0, %v211
  %213 = vst [vmem:[#allocation2 + $0x60] sm:$0x1] %v212
  %v214 = vld [vmem:[#allocation2 + $0x68] sm:$0x1]
  %v215 = vsel %vm174, 0, %v214
  %216 = vst [vmem:[#allocation2 + $0x68] sm:$0x1] %v215
  %v217 = vld [vmem:[#allocation2 + $0x70] sm:$0x1]
  %v218 = vsel %vm174, 0, %v217
  %219 = vst [vmem:[#allocation2 + $0x70] sm:$0x1] %v218
  %v220 = vld [vmem:[#allocation2 + $0x78] sm:$0x1]
  %v221 = vsel %vm174, 0, %v220
  %222 = vst [vmem:[#allocation2 + $0x78] sm:$0x1] %v221
  %v223 = vld [vmem:[#allocation2 + $0x80] sm:$0x1]
  %v224 = vsel %vm174, 0, %v223
  %225 = vst [vmem:[#allocation2 + $0x80] sm:$0x1] %v224
  %v226 = vld [vmem:[#allocation2 + $0x88] sm:$0x1]
  %v227 = vsel %vm174, 0, %v226
  %228 = vst [vmem:[#allocation2 + $0x88] sm:$0x1] %v227
  %v229 = vld [vmem:[#allocation2 + $0x90] sm:$0x1]
  %v230 = vsel %vm174, 0, %v229
  %231 = vst [vmem:[#allocation2 + $0x90] sm:$0x1] %v230
  %v232 = vld [vmem:[#allocation2 + $0x98] sm:$0x1]
  %v233 = vsel %vm174, 0, %v232
  %234 = vst [vmem:[#allocation2 + $0x98] sm:$0x1] %v233
  %vm235 = vsmask.f32 7938
  %vm236 = vmand %vm172, %vm235
  %v237 = vld [vmem:[#allocation2 + $0x4] sm:$0x1]
  %v238 = vsel %vm236, 0, %v237
  %239 = vst [vmem:[#allocation2 + $0x4] sm:$0x1] %v238
  %v240 = vld [vmem:[#allocation2 + $0xc] sm:$0x1]
  %v241 = vsel %vm236, 0, %v240
  %242 = vst [vmem:[#allocation2 + $0xc] sm:$0x1] %v241
  %v243 = vld [vmem:[#allocation2 + $0x14] sm:$0x1]
  %v244 = vsel %vm236, 0, %v243
  %245 = vst [vmem:[#allocation2 + $0x14] sm:$0x1] %v244
  %v246 = vld [vmem:[#allocation2 + $0x1c] sm:$0x1]
  %v247 = vsel %vm236, 0, %v246
  %248 = vst [vmem:[#allocation2 + $0x1c] sm:$0x1] %v247
  %v249 = vld [vmem:[#allocation2 + $0x24] sm:$0x1]
  %v250 = vsel %vm236, 0, %v249
  %251 = vst [vmem:[#allocation2 + $0x24] sm:$0x1] %v250
  %v252 = vld [vmem:[#allocation2 + $0x2c] sm:$0x1]
  %v253 = vsel %vm236, 0, %v252
  %254 = vst [vmem:[#allocation2 + $0x2c] sm:$0x1] %v253
  %v255 = vld [vmem:[#allocation2 + $0x34] sm:$0x1]
  %v256 = vsel %vm236, 0, %v255
  %257 = vst [vmem:[#allocation2 + $0x34] sm:$0x1] %v256
  %v258 = vld [vmem:[#allocation2 + $0x3c] sm:$0x1]
  %v259 = vsel %vm236, 0, %v258
  %260 = vst [vmem:[#allocation2 + $0x3c] sm:$0x1] %v259
  %v261 = vld [vmem:[#allocation2 + $0x44] sm:$0x1]
  %v262 = vsel %vm236, 0, %v261
  %263 = vst [vmem:[#allocation2 + $0x44] sm:$0x1] %v262
  %v264 = vld [vmem:[#allocation2 + $0x4c] sm:$0x1]
  %v265 = vsel %vm236, 0, %v264
  %266 = vst [vmem:[#allocation2 + $0x4c] sm:$0x1] %v265
  %v267 = vld [vmem:[#allocation2 + $0x54] sm:$0x1]
  %v268 = vsel %vm236, 0, %v267
  %269 = vst [vmem:[#allocation2 + $0x54] sm:$0x1] %v268
  %v270 = vld [vmem:[#allocation2 + $0x5c] sm:$0x1]
  %v271 = vsel %vm236, 0, %v270
  %272 = vst [vmem:[#allocation2 + $0x5c] sm:$0x1] %v271
  %v273 = vld [vmem:[#allocation2 + $0x64] sm:$0x1]
  %v274 = vsel %vm236, 0, %v273
  %275 = vst [vmem:[#allocation2 + $0x64] sm:$0x1] %v274
  %v276 = vld [vmem:[#allocation2 + $0x6c] sm:$0x1]
  %v277 = vsel %vm236, 0, %v276
  %278 = vst [vmem:[#allocation2 + $0x6c] sm:$0x1] %v277
  %v279 = vld [vmem:[#allocation2 + $0x74] sm:$0x1]
  %v280 = vsel %vm236, 0, %v279
  %281 = vst [vmem:[#allocation2 + $0x74] sm:$0x1] %v280
  %v282 = vld [vmem:[#allocation2 + $0x7c] sm:$0x1]
  %v283 = vsel %vm236, 0, %v282
  %284 = vst [vmem:[#allocation2 + $0x7c] sm:$0x1] %v283
  %v285 = vld [vmem:[#allocation2 + $0x84] sm:$0x1]
  %v286 = vsel %vm236, 0, %v285
  %287 = vst [vmem:[#allocation2 + $0x84] sm:$0x1] %v286
  %v288 = vld [vmem:[#allocation2 + $0x8c] sm:$0x1]
  %v289 = vsel %vm236, 0, %v288
  %290 = vst [vmem:[#allocation2 + $0x8c] sm:$0x1] %v289
  %v291 = vld [vmem:[#allocation2 + $0x94] sm:$0x1]
  %v292 = vsel %vm236, 0, %v291
  %293 = vst [vmem:[#allocation2 + $0x94] sm:$0x1] %v292
  %v294 = vld [vmem:[#allocation2 + $0x9c] sm:$0x1]
  %v295 = vsel %vm236, 0, %v294
  %296 = vst [vmem:[#allocation2 + $0x9c] sm:$0x1] %v295
  %v298 = vshrl.u32 %v145, 16
  %v300 = vrot.slane %v298, 7
  %v301 = vshll.u32 %v145, 16
  %v303 = vor.u32 %v300, %v301
  %v304 = vrot.slane %v300, 4
  %v306 = vshrl.u32 %v146, 16
  %v308 = vrot.slane %v306, 7
  %v309 = vshll.u32 %v146, 16
  %v311 = vor.u32 %v308, %v309
  %v312 = vrot.slane %v308, 4
  %v314 = vshrl.u32 %v147, 16
  %v316 = vrot.slane %v314, 7
  %v317 = vshll.u32 %v147, 16
  %v319 = vor.u32 %v316, %v317
  %v320 = vrot.slane %v316, 4
  %v322 = vshrl.u32 %v148, 16
  %v324 = vrot.slane %v322, 7
  %v325 = vshll.u32 %v148, 16
  %v327 = vor.u32 %v324, %v325
  %v328 = vrot.slane %v324, 4
  %v330 = vshrl.u32 %v149, 16
  %v332 = vrot.slane %v330, 7
  %v333 = vshll.u32 %v149, 16
  %v335 = vor.u32 %v332, %v333
  %v336 = vrot.slane %v332, 4
  %v338 = vshrl.u32 %v150, 16
  %v340 = vrot.slane %v338, 7
  %v341 = vshll.u32 %v150, 16
  %v343 = vor.u32 %v340, %v341
  %v344 = vrot.slane %v340, 4
  %v346 = vshrl.u32 %v151, 16
  %v348 = vrot.slane %v346, 7
  %v349 = vshll.u32 %v151, 16
  %v351 = vor.u32 %v348, %v349
  %v352 = vrot.slane %v348, 4
  %v354 = vshrl.u32 %v152, 16
  %v356 = vrot.slane %v354, 7
  %v357 = vshll.u32 %v152, 16
  %v359 = vor.u32 %v356, %v357
  %v360 = vrot.slane %v356, 4
  %v362 = vshrl.u32 %v153, 16
  %v364 = vrot.slane %v362, 7
  %v365 = vshll.u32 %v153, 16
  %v367 = vor.u32 %v364, %v365
  %v368 = vrot.slane %v364, 4
  %v370 = vshrl.u32 %v154, 16
  %v372 = vrot.slane %v370, 7
  %v373 = vshll.u32 %v154, 16
  %v375 = vor.u32 %v372, %v373
  %v376 = vrot.slane %v372, 4
  %v378 = vshrl.u32 %v155, 16
  %v380 = vrot.slane %v378, 7
  %v381 = vshll.u32 %v155, 16
  %v383 = vor.u32 %v380, %v381
  %v384 = vrot.slane %v380, 4
  %v386 = vshrl.u32 %v156, 16
  %v388 = vrot.slane %v386, 7
  %v389 = vshll.u32 %v156, 16
  %v391 = vor.u32 %v388, %v389
  %v392 = vrot.slane %v388, 4
  %v394 = vshrl.u32 %v157, 16
  %v396 = vrot.slane %v394, 7
  %v397 = vshll.u32 %v157, 16
  %v399 = vor.u32 %v396, %v397
  %v400 = vrot.slane %v396, 4
  %v402 = vshrl.u32 %v158, 16
  %v404 = vrot.slane %v402, 7
  %v405 = vshll.u32 %v158, 16
  %v407 = vor.u32 %v404, %v405
  %v408 = vrot.slane %v404, 4
  %v410 = vshrl.u32 %v159, 16
  %v412 = vrot.slane %v410, 7
  %v413 = vshll.u32 %v159, 16
  %v415 = vor.u32 %v412, %v413
  %v416 = vrot.slane %v412, 4
  %v418 = vshrl.u32 %v160, 16
  %v420 = vrot.slane %v418, 7
  %v421 = vshll.u32 %v160, 16
  %v423 = vor.u32 %v420, %v421
  %v424 = vrot.slane %v420, 4
  %s457 = scalar_lea.vmem [#allocation2], 8
  %vm458 = vcmask 27648
  %vm459 = vmand %vm458, %vm235
  %v460 = vld [vmem:[%s457] sm:$0xf]
  %v461 = vsel %vm459, %v303, %v460
  %462 = vst [vmem:[%s457] sm:$0xf] %v461
  %v463 = vld [vmem:[%s457 + $0x4] sm:$0x1]
  %v464 = vsel %vm174, %v304, %v463
  %465 = vst [vmem:[%s457 + $0x4] sm:$0x1] %v464
  %v466 = vld [vmem:[%s457 + $0x8] sm:$0xf]
  %v467 = vsel %vm459, %v311, %v466
  %468 = vst [vmem:[%s457 + $0x8] sm:$0xf] %v467
  %v469 = vld [vmem:[%s457 + $0xc] sm:$0x1]
  %v470 = vsel %vm174, %v312, %v469
  %471 = vst [vmem:[%s457 + $0xc] sm:$0x1] %v470
  %v472 = vld [vmem:[%s457 + $0x10] sm:$0xf]
  %v473 = vsel %vm459, %v319, %v472
  %474 = vst [vmem:[%s457 + $0x10] sm:$0xf] %v473
  %v475 = vld [vmem:[%s457 + $0x14] sm:$0x1]
  %v476 = vsel %vm174, %v320, %v475
  %477 = vst [vmem:[%s457 + $0x14] sm:$0x1] %v476
  %v478 = vld [vmem:[%s457 + $0x18] sm:$0xf]
  %v479 = vsel %vm459, %v327, %v478
  %480 = vst [vmem:[%s457 + $0x18] sm:$0xf] %v479
  %v481 = vld [vmem:[%s457 + $0x1c] sm:$0x1]
  %v482 = vsel %vm174, %v328, %v481
  %483 = vst [vmem:[%s457 + $0x1c] sm:$0x1] %v482
  %v484 = vld [vmem:[%s457 + $0x20] sm:$0xf]
  %v485 = vsel %vm459, %v335, %v484
  %486 = vst [vmem:[%s457 + $0x20] sm:$0xf] %v485
  %v487 = vld [vmem:[%s457 + $0x24] sm:$0x1]
  %v488 = vsel %vm174, %v336, %v487
  %489 = vst [vmem:[%s457 + $0x24] sm:$0x1] %v488
  %v490 = vld [vmem:[%s457 + $0x28] sm:$0xf]
  %v491 = vsel %vm459, %v343, %v490
  %492 = vst [vmem:[%s457 + $0x28] sm:$0xf] %v491
  %v493 = vld [vmem:[%s457 + $0x2c] sm:$0x1]
  %v494 = vsel %vm174, %v344, %v493
  %495 = vst [vmem:[%s457 + $0x2c] sm:$0x1] %v494
  %v496 = vld [vmem:[%s457 + $0x30] sm:$0xf]
  %v497 = vsel %vm459, %v351, %v496
  %498 = vst [vmem:[%s457 + $0x30] sm:$0xf] %v497
  %v499 = vld [vmem:[%s457 + $0x34] sm:$0x1]
  %v500 = vsel %vm174, %v352, %v499
  %501 = vst [vmem:[%s457 + $0x34] sm:$0x1] %v500
  %v502 = vld [vmem:[%s457 + $0x38] sm:$0xf]
  %v503 = vsel %vm459, %v359, %v502
  %504 = vst [vmem:[%s457 + $0x38] sm:$0xf] %v503
  %v505 = vld [vmem:[%s457 + $0x3c] sm:$0x1]
  %v506 = vsel %vm174, %v360, %v505
  %507 = vst [vmem:[%s457 + $0x3c] sm:$0x1] %v506
  %v508 = vld [vmem:[%s457 + $0x50] sm:$0xf]
  %v509 = vsel %vm459, %v367, %v508
  %510 = vst [vmem:[%s457 + $0x50] sm:$0xf] %v509
  %v511 = vld [vmem:[%s457 + $0x54] sm:$0x1]
  %v512 = vsel %vm174, %v368, %v511
  %513 = vst [vmem:[%s457 + $0x54] sm:$0x1] %v512
  %v514 = vld [vmem:[%s457 + $0x58] sm:$0xf]
  %v515 = vsel %vm459, %v375, %v514
  %516 = vst [vmem:[%s457 + $0x58] sm:$0xf] %v515
  %v517 = vld [vmem:[%s457 + $0x5c] sm:$0x1]
  %v518 = vsel %vm174, %v376, %v517
  %519 = vst [vmem:[%s457 + $0x5c] sm:$0x1] %v518
  %v520 = vld [vmem:[%s457 + $0x60] sm:$0xf]
  %v521 = vsel %vm459, %v383, %v520
  %522 = vst [vmem:[%s457 + $0x60] sm:$0xf] %v521
  %v523 = vld [vmem:[%s457 + $0x64] sm:$0x1]
  %v524 = vsel %vm174, %v384, %v523
  %525 = vst [vmem:[%s457 + $0x64] sm:$0x1] %v524
  %v526 = vld [vmem:[%s457 + $0x68] sm:$0xf]
  %v527 = vsel %vm459, %v391, %v526
  %528 = vst [vmem:[%s457 + $0x68] sm:$0xf] %v527
  %v529 = vld [vmem:[%s457 + $0x6c] sm:$0x1]
  %v530 = vsel %vm174, %v392, %v529
  %531 = vst [vmem:[%s457 + $0x6c] sm:$0x1] %v530
  %v532 = vld [vmem:[%s457 + $0x70] sm:$0xf]
  %v533 = vsel %vm459, %v399, %v532
  %534 = vst [vmem:[%s457 + $0x70] sm:$0xf] %v533
  %v535 = vld [vmem:[%s457 + $0x74] sm:$0x1]
  %v536 = vsel %vm174, %v400, %v535
  %537 = vst [vmem:[%s457 + $0x74] sm:$0x1] %v536
  %v538 = vld [vmem:[%s457 + $0x78] sm:$0xf]
  %v539 = vsel %vm459, %v407, %v538
  %540 = vst [vmem:[%s457 + $0x78] sm:$0xf] %v539
  %v541 = vld [vmem:[%s457 + $0x7c] sm:$0x1]
  %v542 = vsel %vm174, %v408, %v541
  %543 = vst [vmem:[%s457 + $0x7c] sm:$0x1] %v542
  %v544 = vld [vmem:[%s457 + $0x80] sm:$0xf]
  %v545 = vsel %vm459, %v415, %v544
  %546 = vst [vmem:[%s457 + $0x80] sm:$0xf] %v545
  %v547 = vld [vmem:[%s457 + $0x84] sm:$0x1]
  %v548 = vsel %vm174, %v416, %v547
  %549 = vst [vmem:[%s457 + $0x84] sm:$0x1] %v548
  %v550 = vld [vmem:[%s457 + $0x88] sm:$0xf]
  %v551 = vsel %vm459, %v423, %v550
  %552 = vst [vmem:[%s457 + $0x88] sm:$0xf] %v551
  %v553 = vld [vmem:[%s457 + $0x8c] sm:$0x1]
  %v554 = vsel %vm174, %v424, %v553
  %555 = vst [vmem:[%s457 + $0x8c] sm:$0x1] %v554
  %v556 = vld [vmem:[#allocation2] sm:$0xf]
  %v557 = vld [vmem:[#allocation2 + $0x8] sm:$0xf]
  %v558 = vld [vmem:[#allocation2 + $0x10] sm:$0xf]
  %v559 = vld [vmem:[#allocation2 + $0x18] sm:$0xf]
  %v560 = vld [vmem:[#allocation2 + $0x20] sm:$0xf]
  %v561 = vld [vmem:[#allocation2 + $0x28] sm:$0xf]
  %v562 = vld [vmem:[#allocation2 + $0x30] sm:$0xf]
  %v563 = vld [vmem:[#allocation2 + $0x38] sm:$0xf]
  %v564 = vld [vmem:[#allocation2 + $0x50] sm:$0xf]
  %v565 = vld [vmem:[#allocation2 + $0x58] sm:$0xf]
  %v566 = vld [vmem:[#allocation2 + $0x60] sm:$0xf]
  %v567 = vld [vmem:[#allocation2 + $0x68] sm:$0xf]
  %v568 = vld [vmem:[#allocation2 + $0x70] sm:$0xf]
  %v569 = vld [vmem:[#allocation2 + $0x78] sm:$0xf]
  %v570 = vld [vmem:[#allocation2 + $0x80] sm:$0xf]
  %v571 = vld [vmem:[#allocation2 + $0x88] sm:$0xf]
  %v572 = vld [vmem:[%s1] sm:$0x3]
  %v573 = vld [vmem:[#allocation2 + $0x4] sm:$0x1]
  %v574 = vld [vmem:[#allocation2 + $0xc] sm:$0x1]
  %v575 = vld [vmem:[#allocation2 + $0x14] sm:$0x1]
  %v576 = vld [vmem:[#allocation2 + $0x1c] sm:$0x1]
  %v577 = vld [vmem:[#allocation2 + $0x24] sm:$0x1]
  %v578 = vld [vmem:[#allocation2 + $0x2c] sm:$0x1]
  %v579 = vld [vmem:[#allocation2 + $0x34] sm:$0x1]
  %v580 = vld [vmem:[#allocation2 + $0x3c] sm:$0x1]
  %v581 = vld [vmem:[#allocation2 + $0x54] sm:$0x1]
  %v582 = vld [vmem:[#allocation2 + $0x5c] sm:$0x1]
  %v583 = vld [vmem:[#allocation2 + $0x64] sm:$0x1]
  %v584 = vld [vmem:[#allocation2 + $0x6c] sm:$0x1]
  %v585 = vld [vmem:[#allocation2 + $0x74] sm:$0x1]
  %v586 = vld [vmem:[#allocation2 + $0x7c] sm:$0x1]
  %v587 = vld [vmem:[#allocation2 + $0x84] sm:$0x1]
  %v588 = vld [vmem:[#allocation2 + $0x8c] sm:$0x1]
  %vm589 = vsmask.f32 3328
  %vm590 = vsmask.f32 7440
  %vm591 = vmor %vm589, %vm590
  %v593 = vshrl.u32 %v556, 16
  %v595 = vrot.slane %v593, 4
  %v596 = vshll.u32 %v556, 16
  %v598 = vrot.slane %v596, 5
  %v599 = vor.u32 %v595, %v598
  %v600 = vrot.slane %v599, 4
  %v602 = vshll.u32 %v573, 16
  %v604 = vrot.slane %v602, 5
  %v605 = vsel %vm591, %v600, %v604
  %v607 = vshrl.u32 %v557, 16
  %v609 = vrot.slane %v607, 4
  %v610 = vshll.u32 %v557, 16
  %v612 = vrot.slane %v610, 5
  %v613 = vor.u32 %v609, %v612
  %v614 = vrot.slane %v613, 4
  %v616 = vshll.u32 %v574, 16
  %v618 = vrot.slane %v616, 5
  %v619 = vsel %vm591, %v614, %v618
  %v621 = vshrl.u32 %v558, 16
  %v623 = vrot.slane %v621, 4
  %v624 = vshll.u32 %v558, 16
  %v626 = vrot.slane %v624, 5
  %v627 = vor.u32 %v623, %v626
  %v628 = vrot.slane %v627, 4
  %v630 = vshll.u32 %v575, 16
  %v632 = vrot.slane %v630, 5
  %v633 = vsel %vm591, %v628, %v632
  %v635 = vshrl.u32 %v559, 16
  %v637 = vrot.slane %v635, 4
  %v638 = vshll.u32 %v559, 16
  %v640 = vrot.slane %v638, 5
  %v641 = vor.u32 %v637, %v640
  %v642 = vrot.slane %v641, 4
  %v644 = vshll.u32 %v576, 16
  %v646 = vrot.slane %v644, 5
  %v647 = vsel %vm591, %v642, %v646
  %v649 = vshrl.u32 %v560, 16
  %v651 = vrot.slane %v649, 4
  %v652 = vshll.u32 %v560, 16
  %v654 = vrot.slane %v652, 5
  %v655 = vor.u32 %v651, %v654
  %v656 = vrot.slane %v655, 4
  %v658 = vshll.u32 %v577, 16
  %v660 = vrot.slane %v658, 5
  %v661 = vsel %vm591, %v656, %v660
  %v663 = vshrl.u32 %v561, 16
  %v665 = vrot.slane %v663, 4
  %v666 = vshll.u32 %v561, 16
  %v668 = vrot.slane %v666, 5
  %v669 = vor.u32 %v665, %v668
  %v670 = vrot.slane %v669, 4
  %v672 = vshll.u32 %v578, 16
  %v674 = vrot.slane %v672, 5
  %v675 = vsel %vm591, %v670, %v674
  %v677 = vshrl.u32 %v562, 16
  %v679 = vrot.slane %v677, 4
  %v680 = vshll.u32 %v562, 16
  %v682 = vrot.slane %v680, 5
  %v683 = vor.u32 %v679, %v682
  %v684 = vrot.slane %v683, 4
  %v686 = vshll.u32 %v579, 16
  %v688 = vrot.slane %v686, 5
  %v689 = vsel %vm591, %v684, %v688
  %v691 = vshrl.u32 %v563, 16
  %v693 = vrot.slane %v691, 4
  %v694 = vshll.u32 %v563, 16
  %v696 = vrot.slane %v694, 5
  %v697 = vor.u32 %v693, %v696
  %v698 = vrot.slane %v697, 4
  %v700 = vshll.u32 %v580, 16
  %v702 = vrot.slane %v700, 5
  %v703 = vsel %vm591, %v698, %v702
  %v705 = vshrl.u32 %v564, 16
  %v707 = vrot.slane %v705, 4
  %v708 = vshll.u32 %v564, 16
  %v710 = vrot.slane %v708, 5
  %v711 = vor.u32 %v707, %v710
  %v712 = vrot.slane %v711, 4
  %v714 = vshll.u32 %v581, 16
  %v716 = vrot.slane %v714, 5
  %v717 = vsel %vm591, %v712, %v716
  %v719 = vshrl.u32 %v565, 16
  %v721 = vrot.slane %v719, 4
  %v722 = vshll.u32 %v565, 16
  %v724 = vrot.slane %v722, 5
  %v725 = vor.u32 %v721, %v724
  %v726 = vrot.slane %v725, 4
  %v728 = vshll.u32 %v582, 16
  %v730 = vrot.slane %v728, 5
  %v731 = vsel %vm591, %v726, %v730
  %v733 = vshrl.u32 %v566, 16
  %v735 = vrot.slane %v733, 4
  %v736 = vshll.u32 %v566, 16
  %v738 = vrot.slane %v736, 5
  %v739 = vor.u32 %v735, %v738
  %v740 = vrot.slane %v739, 4
  %v742 = vshll.u32 %v583, 16
  %v744 = vrot.slane %v742, 5
  %v745 = vsel %vm591, %v740, %v744
  %v747 = vshrl.u32 %v567, 16
  %v749 = vrot.slane %v747, 4
  %v750 = vshll.u32 %v567, 16
  %v752 = vrot.slane %v750, 5
  %v753 = vor.u32 %v749, %v752
  %v754 = vrot.slane %v753, 4
  %v756 = vshll.u32 %v584, 16
  %v758 = vrot.slane %v756, 5
  %v759 = vsel %vm591, %v754, %v758
  %v761 = vshrl.u32 %v568, 16
  %v763 = vrot.slane %v761, 4
  %v764 = vshll.u32 %v568, 16
  %v766 = vrot.slane %v764, 5
  %v767 = vor.u32 %v763, %v766
  %v768 = vrot.slane %v767, 4
  %v770 = vshll.u32 %v585, 16
  %v772 = vrot.slane %v770, 5
  %v773 = vsel %vm591, %v768, %v772
  %v775 = vshrl.u32 %v569, 16
  %v777 = vrot.slane %v775, 4
  %v778 = vshll.u32 %v569, 16
  %v780 = vrot.slane %v778, 5
  %v781 = vor.u32 %v777, %v780
  %v782 = vrot.slane %v781, 4
  %v784 = vshll.u32 %v586, 16
  %v786 = vrot.slane %v784, 5
  %v787 = vsel %vm591, %v782, %v786
  %v789 = vshrl.u32 %v570, 16
  %v791 = vrot.slane %v789, 4
  %v792 = vshll.u32 %v570, 16
  %v794 = vrot.slane %v792, 5
  %v795 = vor.u32 %v791, %v794
  %v796 = vrot.slane %v795, 4
  %v798 = vshll.u32 %v587, 16
  %v800 = vrot.slane %v798, 5
  %v801 = vsel %vm591, %v796, %v800
  %v803 = vshrl.u32 %v571, 16
  %v805 = vrot.slane %v803, 4
  %v806 = vshll.u32 %v571, 16
  %v808 = vrot.slane %v806, 5
  %v809 = vor.u32 %v805, %v808
  %v810 = vrot.slane %v809, 4
  %v812 = vshll.u32 %v588, 16
  %v814 = vrot.slane %v812, 5
  %v815 = vsel %vm591, %v810, %v814
  %s816 = scalar_lea.vmem %s1, 2
  %v817 = vld [vmem:[%s816] sm:$0x3]
  %v818 = vunpack.c.l.b16 %v605
  %v819 = vunpack.c.l.b16 %v619
  %v820 = vunpack.c.l.b16 %v633
  %v821 = vunpack.c.l.b16 %v647
  %v822 = vunpack.c.l.b16 %v661
  %v823 = vunpack.c.l.b16 %v675
  %v824 = vunpack.c.l.b16 %v689
  %v825 = vunpack.c.l.b16 %v703
  %v826 = vunpack.c.l.b16 %v717
  %v827 = vunpack.c.l.b16 %v731
  %v828 = vunpack.c.l.b16 %v745
  %v829 = vunpack.c.l.b16 %v759
  %v830 = vunpack.c.l.b16 %v773
  %v831 = vunpack.c.l.b16 %v787
  %v832 = vunpack.c.l.b16 %v801
  %v833 = vunpack.c.l.b16 %v815
  %v834 = vpack.c.b16 %v819, %v818
  %v835 = vpack.c.b16 %v821, %v820
  %v836 = vpack.c.b16 %v823, %v822
  %v837 = vpack.c.b16 %v825, %v824
  %v838 = vpack.c.b16 %v827, %v826
  %v839 = vpack.c.b16 %v829, %v828
  %v840 = vpack.c.b16 %v831, %v830
  %v841 = vpack.c.b16 %v833, %v832
  %vm842 = vcmask 31744
  %v844 = vsel %vm842, %v834, 0
  %v847 = vsel %vm842, %v835, 0
  %v850 = vsel %vm842, %v836, 0
  %v853 = vsel %vm842, %v837, 0
  %v856 = vsel %vm842, %v838, 0
  %v859 = vsel %vm842, %v839, 0
  %v862 = vsel %vm842, %v840, 0
  %v865 = vsel %vm842, %v841, 0
  %vm867 = vcmask 1041408
  %v869 = vsel %vm867, %v817, 0
  %871 = vmatprep.subr.bf16.mxu0 0
  %872 = vmatpush1.bf16.msra.mxu0 0
  %873 = vmatprep.subr.bf16.mxu0 0
  %874 = vmatpush1.bf16.msra.mxu0 0
  %875 = vmatprep.subr.bf16.mxu0 0
  %876 = vmatpush1.bf16.msra.mxu0 0
  %877 = vmatprep.subr.bf16.mxu0 0
  %878 = vmatpush1.bf16.msra.mxu0 0
  %879 = vmatprep.subr.bf16.mxu0 0
  %880 = vmatpush1.bf16.msra.mxu0 0
  %881 = vmatprep.subr.bf16.mxu0 0
  %882 = vmatpush1.bf16.msra.mxu0 0
  %883 = vmatprep.subr.bf16.mxu0 0
  %884 = vmatpush1.bf16.msra.mxu0 0
  %885 = vmatprep.subr.bf16.mxu0 0
  %886 = vmatpush1.bf16.msra.mxu0 %v869
  %887 = vmatprep.subr.bf16.mxu0 0
  %888 = vmatpush2.bf16.msra.mxu0 0
  %889 = vmatprep.subr.bf16.mxu0 0
  %890 = vmatpush2.bf16.msra.mxu0 0
  %891 = vmatprep.subr.bf16.mxu0 0
  %892 = vmatpush2.bf16.msra.mxu0 0
  %893 = vmatprep.subr.bf16.mxu0 0
  %894 = vmatpush2.bf16.msra.mxu0 0
  %895 = vmatprep.subr.bf16.mxu0 0
  %896 = vmatpush2.bf16.msra.mxu0 0
  %897 = vmatprep.subr.bf16.mxu0 0
  %898 = vmatpush2.bf16.msra.mxu0 0
  %899 = vmatprep.subr.bf16.mxu0 0
  %900 = vmatpush2.bf16.msra.mxu0 0
  %901 = vmatprep.subr.bf16.mxu0 0
  %902 = vmatpush2.bf16.msra.mxu0 0
  %903 = vmatprep.mubr.bf16.mxu0 0
  %904 = vmatmul.mubr.bf16.gmra.mxu0 %v844
  %v905 = vpop.f32.mrf.mxu0
  %v906 = vadd.f32 0.0, %v905
  %v907 = vpop.f32.mrf.mxu0
  %v908 = vpop.f32.mrf.mxu0
  %v909 = vadd.f32 0.0, %v908
  %v910 = vpop.f32.mrf.mxu0
  %911 = vmatprep.mubr.bf16.mxu0 0
  %912 = vmatmul.mubr.bf16.gmra.mxu0 %v847
  %v913 = vpop.f32.mrf.mxu0
  %v914 = vadd.f32 0.0, %v913
  %v915 = vpop.f32.mrf.mxu0
  %v916 = vpop.f32.mrf.mxu0
  %v917 = vadd.f32 0.0, %v916
  %v918 = vpop.f32.mrf.mxu0
  %919 = vmatprep.mubr.bf16.mxu0 0
  %920 = vmatmul.mubr.bf16.gmra.mxu0 %v850
  %v921 = vpop.f32.mrf.mxu0
  %v922 = vadd.f32 0.0, %v921
  %v923 = vpop.f32.mrf.mxu0
  %v924 = vpop.f32.mrf.mxu0
  %v925 = vadd.f32 0.0, %v924
  %v926 = vpop.f32.mrf.mxu0
  %927 = vmatprep.mubr.bf16.mxu0 0
  %928 = vmatmul.mubr.bf16.gmra.mxu0 %v853
  %v929 = vpop.f32.mrf.mxu0
  %v930 = vadd.f32 0.0, %v929
  %v931 = vpop.f32.mrf.mxu0
  %v932 = vpop.f32.mrf.mxu0
  %v933 = vadd.f32 0.0, %v932
  %v934 = vpop.f32.mrf.mxu0
  %935 = vmatprep.mubr.bf16.mxu0 0
  %936 = vmatmul.mubr.bf16.gmra.mxu0 %v856
  %v937 = vpop.f32.mrf.mxu0
  %v938 = vadd.f32 0.0, %v937
  %v939 = vpop.f32.mrf.mxu0
  %v940 = vpop.f32.mrf.mxu0
  %v941 = vadd.f32 0.0, %v940
  %v942 = vpop.f32.mrf.mxu0
  %943 = vmatprep.mubr.bf16.mxu0 0
  %944 = vmatmul.mubr.bf16.gmra.mxu0 %v859
  %v945 = vpop.f32.mrf.mxu0
  %v946 = vadd.f32 0.0, %v945
  %v947 = vpop.f32.mrf.mxu0
  %v948 = vpop.f32.mrf.mxu0
  %v949 = vadd.f32 0.0, %v948
  %v950 = vpop.f32.mrf.mxu0
  %951 = vmatprep.mubr.bf16.mxu0 0
  %952 = vmatmul.mubr.bf16.gmra.mxu0 %v862
  %v953 = vpop.f32.mrf.mxu0
  %v954 = vadd.f32 0.0, %v953
  %v955 = vpop.f32.mrf.mxu0
  %v956 = vpop.f32.mrf.mxu0
  %v957 = vadd.f32 0.0, %v956
  %v958 = vpop.f32.mrf.mxu0
  %959 = vmatprep.mubr.bf16.mxu0 0
  %960 = vmatmul.mubr.bf16.gmra.mxu0 %v865
  %v961 = vpop.f32.mrf.mxu0
  %v962 = vadd.f32 0.0, %v961
  %v963 = vpop.f32.mrf.mxu0
  %v964 = vpop.f32.mrf.mxu0
  %v965 = vadd.f32 0.0, %v964
  %v966 = vpop.f32.mrf.mxu0
  %967 = vdwg.mxu0
  %v984 = vunpack.c.l.b16 %v556
  %v985 = vunpack.c.l.b16 %v557
  %v986 = vunpack.c.l.b16 %v558
  %v987 = vunpack.c.l.b16 %v559
  %v988 = vunpack.c.l.b16 %v560
  %v989 = vunpack.c.l.b16 %v561
  %v990 = vunpack.c.l.b16 %v562
  %v991 = vunpack.c.l.b16 %v563
  %v992 = vunpack.c.l.b16 %v564
  %v993 = vunpack.c.l.b16 %v565
  %v994 = vunpack.c.l.b16 %v566
  %v995 = vunpack.c.l.b16 %v567
  %v996 = vunpack.c.l.b16 %v568
  %v997 = vunpack.c.l.b16 %v569
  %v998 = vunpack.c.l.b16 %v570
  %v999 = vunpack.c.l.b16 %v571
  %v1000 = vpack.c.b16 %v985, %v984
  %v1001 = vpack.c.b16 %v987, %v986
  %v1002 = vpack.c.b16 %v989, %v988
  %v1003 = vpack.c.b16 %v991, %v990
  %v1004 = vpack.c.b16 %v993, %v992
  %v1005 = vpack.c.b16 %v995, %v994
  %v1006 = vpack.c.b16 %v997, %v996
  %v1007 = vpack.c.b16 %v999, %v998
  %v1009 = vsel %vm842, %v1000, 0
  %v1012 = vsel %vm842, %v1001, 0
  %v1015 = vsel %vm842, %v1002, 0
  %v1018 = vsel %vm842, %v1003, 0
  %v1021 = vsel %vm842, %v1004, 0
  %v1024 = vsel %vm842, %v1005, 0
  %v1027 = vsel %vm842, %v1006, 0
  %v1030 = vsel %vm842, %v1007, 0
  %v1033 = vsel %vm867, %v572, 0
  %1035 = vmatprep.subr.bf16.mxu0 0
  %1036 = vmatpush1.bf16.msra.mxu0 0
  %1037 = vmatprep.subr.bf16.mxu0 0
  %1038 = vmatpush1.bf16.msra.mxu0 0
  %1039 = vmatprep.subr.bf16.mxu0 0
  %1040 = vmatpush1.bf16.msra.mxu0 0
  %1041 = vmatprep.subr.bf16.mxu0 0
  %1042 = vmatpush1.bf16.msra.mxu0 0
  %1043 = vmatprep.subr.bf16.mxu0 0
  %1044 = vmatpush1.bf16.msra.mxu0 0
  %1045 = vmatprep.subr.bf16.mxu0 0
  %1046 = vmatpush1.bf16.msra.mxu0 0
  %1047 = vmatprep.subr.bf16.mxu0 0
  %1048 = vmatpush1.bf16.msra.mxu0 0
  %1049 = vmatprep.subr.bf16.mxu0 0
  %1050 = vmatpush1.bf16.msra.mxu0 %v1033
  %1051 = vmatprep.subr.bf16.mxu0 0
  %1052 = vmatpush2.bf16.msra.mxu0 0
  %1053 = vmatprep.subr.bf16.mxu0 0
  %1054 = vmatpush2.bf16.msra.mxu0 0
  %1055 = vmatprep.subr.bf16.mxu0 0
  %1056 = vmatpush2.bf16.msra.mxu0 0
  %1057 = vmatprep.subr.bf16.mxu0 0
  %1058 = vmatpush2.bf16.msra.mxu0 0
  %1059 = vmatprep.subr.bf16.mxu0 0
  %1060 = vmatpush2.bf16.msra.mxu0 0
  %1061 = vmatprep.subr.bf16.mxu0 0
  %1062 = vmatpush2.bf16.msra.mxu0 0
  %1063 = vmatprep.subr.bf16.mxu0 0
  %1064 = vmatpush2.bf16.msra.mxu0 0
  %1065 = vmatprep.subr.bf16.mxu0 0
  %1066 = vmatpush2.bf16.msra.mxu0 0
  %1067 = vmatprep.mubr.bf16.mxu0 0
  %1068 = vmatmul.mubr.bf16.gmra.mxu0 %v1009
  %v1069 = vpop.f32.mrf.mxu0
  %v1070 = vadd.f32 %v906, %v1069
  %v1071 = vpop.f32.mrf.mxu0
  %v1072 = vpop.f32.mrf.mxu0
  %v1073 = vadd.f32 %v909, %v1072
  %v1074 = vpop.f32.mrf.mxu0
  %1075 = vmatprep.mubr.bf16.mxu0 0
  %1076 = vmatmul.mubr.bf16.gmra.mxu0 %v1012
  %v1077 = vpop.f32.mrf.mxu0
  %v1078 = vadd.f32 %v914, %v1077
  %v1079 = vpop.f32.mrf.mxu0
  %v1080 = vpop.f32.mrf.mxu0
  %v1081 = vadd.f32 %v917, %v1080
  %v1082 = vpop.f32.mrf.mxu0
  %1083 = vmatprep.mubr.bf16.mxu0 0
  %1084 = vmatmul.mubr.bf16.gmra.mxu0 %v1015
  %v1085 = vpop.f32.mrf.mxu0
  %v1086 = vadd.f32 %v922, %v1085
  %v1087 = vpop.f32.mrf.mxu0
  %v1088 = vpop.f32.mrf.mxu0
  %v1089 = vadd.f32 %v925, %v1088
  %v1090 = vpop.f32.mrf.mxu0
  %1091 = vmatprep.mubr.bf16.mxu0 0
  %1092 = vmatmul.mubr.bf16.gmra.mxu0 %v1018
  %v1093 = vpop.f32.mrf.mxu0
  %v1094 = vadd.f32 %v930, %v1093
  %v1095 = vpop.f32.mrf.mxu0
  %v1096 = vpop.f32.mrf.mxu0
  %v1097 = vadd.f32 %v933, %v1096
  %v1098 = vpop.f32.mrf.mxu0
  %1099 = vmatprep.mubr.bf16.mxu0 0
  %1100 = vmatmul.mubr.bf16.gmra.mxu0 %v1021
  %v1101 = vpop.f32.mrf.mxu0
  %v1102 = vadd.f32 %v938, %v1101
  %v1103 = vpop.f32.mrf.mxu0
  %v1104 = vpop.f32.mrf.mxu0
  %v1105 = vadd.f32 %v941, %v1104
  %v1106 = vpop.f32.mrf.mxu0
  %1107 = vmatprep.mubr.bf16.mxu0 0
  %1108 = vmatmul.mubr.bf16.gmra.mxu0 %v1024
  %v1109 = vpop.f32.mrf.mxu0
  %v1110 = vadd.f32 %v946, %v1109
  %v1111 = vpop.f32.mrf.mxu0
  %v1112 = vpop.f32.mrf.mxu0
  %v1113 = vadd.f32 %v949, %v1112
  %v1114 = vpop.f32.mrf.mxu0
  %1115 = vmatprep.mubr.bf16.mxu0 0
  %1116 = vmatmul.mubr.bf16.gmra.mxu0 %v1027
  %v1117 = vpop.f32.mrf.mxu0
  %v1118 = vadd.f32 %v954, %v1117
  %v1119 = vpop.f32.mrf.mxu0
  %v1120 = vpop.f32.mrf.mxu0
  %v1121 = vadd.f32 %v957, %v1120
  %v1122 = vpop.f32.mrf.mxu0
  %1123 = vmatprep.mubr.bf16.mxu0 0
  %1124 = vmatmul.mubr.bf16.gmra.mxu0 %v1030
  %v1125 = vpop.f32.mrf.mxu0
  %v1126 = vadd.f32 %v962, %v1125
  %v1127 = vpop.f32.mrf.mxu0
  %v1128 = vpop.f32.mrf.mxu0
  %v1129 = vadd.f32 %v965, %v1128
  %v1130 = vpop.f32.mrf.mxu0
  %1131 = vdwg.mxu0
  %v1132 = vld [vmem:[#allocation2] sm:$0xe]
  %v1133 = vld [vmem:[#allocation2 + $0x8] sm:$0xe]
  %v1134 = vld [vmem:[#allocation2 + $0x10] sm:$0xe]
  %v1135 = vld [vmem:[#allocation2 + $0x18] sm:$0xe]
  %v1136 = vld [vmem:[#allocation2 + $0x20] sm:$0xe]
  %v1137 = vld [vmem:[#allocation2 + $0x28] sm:$0xe]
  %v1138 = vld [vmem:[#allocation2 + $0x30] sm:$0xe]
  %v1139 = vld [vmem:[#allocation2 + $0x38] sm:$0xe]
  %v1140 = vld [vmem:[#allocation2 + $0x50] sm:$0xe]
  %v1141 = vld [vmem:[#allocation2 + $0x58] sm:$0xe]
  %v1142 = vld [vmem:[#allocation2 + $0x60] sm:$0xe]
  %v1143 = vld [vmem:[#allocation2 + $0x68] sm:$0xe]
  %v1144 = vld [vmem:[#allocation2 + $0x70] sm:$0xe]
  %v1145 = vld [vmem:[#allocation2 + $0x78] sm:$0xe]
  %v1146 = vld [vmem:[#allocation2 + $0x80] sm:$0xe]
  %v1147 = vld [vmem:[#allocation2 + $0x88] sm:$0xe]
  %vm1180 = vcmask 1042432
  %vm1181 = vcmask 1046532
  %vm1182 = vmor %vm1180, %vm1181
  %v1183 = vrot.slane %v1132, 5
  %v1184 = vrot.slane %v1183, 4
  %v1185 = vrot.slane %v573, 5
  %v1186 = vsel %vm1182, %v1184, %v1185
  %v1187 = vrot.slane %v1133, 5
  %v1188 = vrot.slane %v1187, 4
  %v1189 = vrot.slane %v574, 5
  %v1190 = vsel %vm1182, %v1188, %v1189
  %v1191 = vrot.slane %v1134, 5
  %v1192 = vrot.slane %v1191, 4
  %v1193 = vrot.slane %v575, 5
  %v1194 = vsel %vm1182, %v1192, %v1193
  %v1195 = vrot.slane %v1135, 5
  %v1196 = vrot.slane %v1195, 4
  %v1197 = vrot.slane %v576, 5
  %v1198 = vsel %vm1182, %v1196, %v1197
  %v1199 = vrot.slane %v1136, 5
  %v1200 = vrot.slane %v1199, 4
  %v1201 = vrot.slane %v577, 5
  %v1202 = vsel %vm1182, %v1200, %v1201
  %v1203 = vrot.slane %v1137, 5
  %v1204 = vrot.slane %v1203, 4
  %v1205 = vrot.slane %v578, 5
  %v1206 = vsel %vm1182, %v1204, %v1205
  %v1207 = vrot.slane %v1138, 5
  %v1208 = vrot.slane %v1207, 4
  %v1209 = vrot.slane %v579, 5
  %v1210 = vsel %vm1182, %v1208, %v1209
  %v1211 = vrot.slane %v1139, 5
  %v1212 = vrot.slane %v1211, 4
  %v1213 = vrot.slane %v580, 5
  %v1214 = vsel %vm1182, %v1212, %v1213
  %v1215 = vrot.slane %v1140, 5
  %v1216 = vrot.slane %v1215, 4
  %v1217 = vrot.slane %v581, 5
  %v1218 = vsel %vm1182, %v1216, %v1217
  %v1219 = vrot.slane %v1141, 5
  %v1220 = vrot.slane %v1219, 4
  %v1221 = vrot.slane %v582, 5
  %v1222 = vsel %vm1182, %v1220, %v1221
  %v1223 = vrot.slane %v1142, 5
  %v1224 = vrot.slane %v1223, 4
  %v1225 = vrot.slane %v583, 5
  %v1226 = vsel %vm1182, %v1224, %v1225
  %v1227 = vrot.slane %v1143, 5
  %v1228 = vrot.slane %v1227, 4
  %v1229 = vrot.slane %v584, 5
  %v1230 = vsel %vm1182, %v1228, %v1229
  %v1231 = vrot.slane %v1144, 5
  %v1232 = vrot.slane %v1231, 4
  %v1233 = vrot.slane %v585, 5
  %v1234 = vsel %vm1182, %v1232, %v1233
  %v1235 = vrot.slane %v1145, 5
  %v1236 = vrot.slane %v1235, 4
  %v1237 = vrot.slane %v586, 5
  %v1238 = vsel %vm1182, %v1236, %v1237
  %v1239 = vrot.slane %v1146, 5
  %v1240 = vrot.slane %v1239, 4
  %v1241 = vrot.slane %v587, 5
  %v1242 = vsel %vm1182, %v1240, %v1241
  %v1243 = vrot.slane %v1147, 5
  %v1244 = vrot.slane %v1243, 4
  %v1245 = vrot.slane %v588, 5
  %v1246 = vsel %vm1182, %v1244, %v1245
  %s1247 = scalar_lea.vmem %s1, 4
  %v1248 = vld [vmem:[%s1247] sm:$0x3]
  %v1249 = vunpack.c.l.b16 %v1186
  %v1250 = vunpack.c.l.b16 %v1190
  %v1251 = vunpack.c.l.b16 %v1194
  %v1252 = vunpack.c.l.b16 %v1198
  %v1253 = vunpack.c.l.b16 %v1202
  %v1254 = vunpack.c.l.b16 %v1206
  %v1255 = vunpack.c.l.b16 %v1210
  %v1256 = vunpack.c.l.b16 %v1214
  %v1257 = vunpack.c.l.b16 %v1218
  %v1258 = vunpack.c.l.b16 %v1222
  %v1259 = vunpack.c.l.b16 %v1226
  %v1260 = vunpack.c.l.b16 %v1230
  %v1261 = vunpack.c.l.b16 %v1234
  %v1262 = vunpack.c.l.b16 %v1238
  %v1263 = vunpack.c.l.b16 %v1242
  %v1264 = vunpack.c.l.b16 %v1246
  %v1265 = vpack.c.b16 %v1250, %v1249
  %v1266 = vpack.c.b16 %v1252, %v1251
  %v1267 = vpack.c.b16 %v1254, %v1253
  %v1268 = vpack.c.b16 %v1256, %v1255
  %v1269 = vpack.c.b16 %v1258, %v1257
  %v1270 = vpack.c.b16 %v1260, %v1259
  %v1271 = vpack.c.b16 %v1262, %v1261
  %v1272 = vpack.c.b16 %v1264, %v1263
  %v1274 = vsel %vm842, %v1265, 0
  %v1277 = vsel %vm842, %v1266, 0
  %v1280 = vsel %vm842, %v1267, 0
  %v1283 = vsel %vm842, %v1268, 0
  %v1286 = vsel %vm842, %v1269, 0
  %v1289 = vsel %vm842, %v1270, 0
  %v1292 = vsel %vm842, %v1271, 0
  %v1295 = vsel %vm842, %v1272, 0
  %v1298 = vsel %vm867, %v1248, 0
  %1300 = vmatprep.subr.bf16.mxu0 0
  %1301 = vmatpush1.bf16.msra.mxu0 0
  %1302 = vmatprep.subr.bf16.mxu0 0
  %1303 = vmatpush1.bf16.msra.mxu0 0
  %1304 = vmatprep.subr.bf16.mxu0 0
  %1305 = vmatpush1.bf16.msra.mxu0 0
  %1306 = vmatprep.subr.bf16.mxu0 0
  %1307 = vmatpush1.bf16.msra.mxu0 0
  %1308 = vmatprep.subr.bf16.mxu0 0
  %1309 = vmatpush1.bf16.msra.mxu0 0
  %1310 = vmatprep.subr.bf16.mxu0 0
  %1311 = vmatpush1.bf16.msra.mxu0 0
  %1312 = vmatprep.subr.bf16.mxu0 0
  %1313 = vmatpush1.bf16.msra.mxu0 0
  %1314 = vmatprep.subr.bf16.mxu0 0
  %1315 = vmatpush1.bf16.msra.mxu0 %v1298
  %1316 = vmatprep.subr.bf16.mxu0 0
  %1317 = vmatpush2.bf16.msra.mxu0 0
  %1318 = vmatprep.subr.bf16.mxu0 0
  %1319 = vmatpush2.bf16.msra.mxu0 0
  %1320 = vmatprep.subr.bf16.mxu0 0
  %1321 = vmatpush2.bf16.msra.mxu0 0
  %1322 = vmatprep.subr.bf16.mxu0 0
  %1323 = vmatpush2.bf16.msra.mxu0 0
  %1324 = vmatprep.subr.bf16.mxu0 0
  %1325 = vmatpush2.bf16.msra.mxu0 0
  %1326 = vmatprep.subr.bf16.mxu0 0
  %1327 = vmatpush2.bf16.msra.mxu0 0
  %1328 = vmatprep.subr.bf16.mxu0 0
  %1329 = vmatpush2.bf16.msra.mxu0 0
  %1330 = vmatprep.subr.bf16.mxu0 0
  %1331 = vmatpush2.bf16.msra.mxu0 0
  %1332 = vmatprep.mubr.bf16.mxu0 0
  %1333 = vmatmul.mubr.bf16.gmra.mxu0 %v1274
  %v1334 = vpop.f32.mrf.mxu0
  %v1335 = vadd.f32 0.0, %v1334
  %v1336 = vpop.f32.mrf.mxu0
  %v1337 = vpop.f32.mrf.mxu0
  %v1338 = vadd.f32 0.0, %v1337
  %v1339 = vpop.f32.mrf.mxu0
  %1340 = vmatprep.mubr.bf16.mxu0 0
  %1341 = vmatmul.mubr.bf16.gmra.mxu0 %v1277
  %v1342 = vpop.f32.mrf.mxu0
  %v1343 = vadd.f32 0.0, %v1342
  %v1344 = vpop.f32.mrf.mxu0
  %v1345 = vpop.f32.mrf.mxu0
  %v1346 = vadd.f32 0.0, %v1345
  %v1347 = vpop.f32.mrf.mxu0
  %1348 = vmatprep.mubr.bf16.mxu0 0
  %1349 = vmatmul.mubr.bf16.gmra.mxu0 %v1280
  %v1350 = vpop.f32.mrf.mxu0
  %v1351 = vadd.f32 0.0, %v1350
  %v1352 = vpop.f32.mrf.mxu0
  %v1353 = vpop.f32.mrf.mxu0
  %v1354 = vadd.f32 0.0, %v1353
  %v1355 = vpop.f32.mrf.mxu0
  %1356 = vmatprep.mubr.bf16.mxu0 0
  %1357 = vmatmul.mubr.bf16.gmra.mxu0 %v1283
  %v1358 = vpop.f32.mrf.mxu0
  %v1359 = vadd.f32 0.0, %v1358
  %v1360 = vpop.f32.mrf.mxu0
  %v1361 = vpop.f32.mrf.mxu0
  %v1362 = vadd.f32 0.0, %v1361
  %v1363 = vpop.f32.mrf.mxu0
  %1364 = vmatprep.mubr.bf16.mxu0 0
  %1365 = vmatmul.mubr.bf16.gmra.mxu0 %v1286
  %v1366 = vpop.f32.mrf.mxu0
  %v1367 = vadd.f32 0.0, %v1366
  %v1368 = vpop.f32.mrf.mxu0
  %v1369 = vpop.f32.mrf.mxu0
  %v1370 = vadd.f32 0.0, %v1369
  %v1371 = vpop.f32.mrf.mxu0
  %1372 = vmatprep.mubr.bf16.mxu0 0
  %1373 = vmatmul.mubr.bf16.gmra.mxu0 %v1289
  %v1374 = vpop.f32.mrf.mxu0
  %v1375 = vadd.f32 0.0, %v1374
  %v1376 = vpop.f32.mrf.mxu0
  %v1377 = vpop.f32.mrf.mxu0
  %v1378 = vadd.f32 0.0, %v1377
  %v1379 = vpop.f32.mrf.mxu0
  %1380 = vmatprep.mubr.bf16.mxu0 0
  %1381 = vmatmul.mubr.bf16.gmra.mxu0 %v1292
  %v1382 = vpop.f32.mrf.mxu0
  %v1383 = vadd.f32 0.0, %v1382
  %v1384 = vpop.f32.mrf.mxu0
  %v1385 = vpop.f32.mrf.mxu0
  %v1386 = vadd.f32 0.0, %v1385
  %v1387 = vpop.f32.mrf.mxu0
  %1388 = vmatprep.mubr.bf16.mxu0 0
  %1389 = vmatmul.mubr.bf16.gmra.mxu0 %v1295
  %v1390 = vpop.f32.mrf.mxu0
  %v1391 = vadd.f32 0.0, %v1390
  %v1392 = vpop.f32.mrf.mxu0
  %v1393 = vpop.f32.mrf.mxu0
  %v1394 = vadd.f32 0.0, %v1393
  %v1395 = vpop.f32.mrf.mxu0
  %1396 = vdwg.mxu0
  %v1397 = vadd.f32 %v1070, %v1335
  %v1398 = vadd.f32 %v1073, %v1338
  %v1399 = vadd.f32 %v1078, %v1343
  %v1400 = vadd.f32 %v1081, %v1346
  %v1401 = vadd.f32 %v1086, %v1351
  %v1402 = vadd.f32 %v1089, %v1354
  %v1403 = vadd.f32 %v1094, %v1359
  %v1404 = vadd.f32 %v1097, %v1362
  %v1405 = vadd.f32 %v1102, %v1367
  %v1406 = vadd.f32 %v1105, %v1370
  %v1407 = vadd.f32 %v1110, %v1375
  %v1408 = vadd.f32 %v1113, %v1378
  %v1409 = vadd.f32 %v1118, %v1383
  %v1410 = vadd.f32 %v1121, %v1386
  %v1411 = vadd.f32 %v1126, %v1391
  %v1412 = vadd.f32 %v1129, %v1394
  %v1413 = vld [vmem:[%s457] sm:$0xf]
  %v1414 = vld [vmem:[%s457 + $0x8] sm:$0xf]
  %v1415 = vld [vmem:[%s457 + $0x10] sm:$0xf]
  %v1416 = vld [vmem:[%s457 + $0x18] sm:$0xf]
  %v1417 = vld [vmem:[%s457 + $0x20] sm:$0xf]
  %v1418 = vld [vmem:[%s457 + $0x28] sm:$0xf]
  %v1419 = vld [vmem:[%s457 + $0x30] sm:$0xf]
  %v1420 = vld [vmem:[%s457 + $0x38] sm:$0xf]
  %v1421 = vld [vmem:[%s457 + $0x50] sm:$0xf]
  %v1422 = vld [vmem:[%s457 + $0x58] sm:$0xf]
  %v1423 = vld [vmem:[%s457 + $0x60] sm:$0xf]
  %v1424 = vld [vmem:[%s457 + $0x68] sm:$0xf]
  %v1425 = vld [vmem:[%s457 + $0x70] sm:$0xf]
  %v1426 = vld [vmem:[%s457 + $0x78] sm:$0xf]
  %v1427 = vld [vmem:[%s457 + $0x80] sm:$0xf]
  %v1428 = vld [vmem:[%s457 + $0x88] sm:$0xf]
  %s1429 = scalar_lea.vmem %s1, 6
  %v1430 = vld [vmem:[%s1429] sm:$0x3]
  %v1447 = vunpack.c.l.b16 %v1413
  %v1448 = vunpack.c.l.b16 %v1414
  %v1449 = vunpack.c.l.b16 %v1415
  %v1450 = vunpack.c.l.b16 %v1416
  %v1451 = vunpack.c.l.b16 %v1417
  %v1452 = vunpack.c.l.b16 %v1418
  %v1453 = vunpack.c.l.b16 %v1419
  %v1454 = vunpack.c.l.b16 %v1420
  %v1455 = vunpack.c.l.b16 %v1421
  %v1456 = vunpack.c.l.b16 %v1422
  %v1457 = vunpack.c.l.b16 %v1423
  %v1458 = vunpack.c.l.b16 %v1424
  %v1459 = vunpack.c.l.b16 %v1425
  %v1460 = vunpack.c.l.b16 %v1426
  %v1461 = vunpack.c.l.b16 %v1427
  %v1462 = vunpack.c.l.b16 %v1428
  %v1463 = vpack.c.b16 %v1448, %v1447
  %v1464 = vpack.c.b16 %v1450, %v1449
  %v1465 = vpack.c.b16 %v1452, %v1451
  %v1466 = vpack.c.b16 %v1454, %v1453
  %v1467 = vpack.c.b16 %v1456, %v1455
  %v1468 = vpack.c.b16 %v1458, %v1457
  %v1469 = vpack.c.b16 %v1460, %v1459
  %v1470 = vpack.c.b16 %v1462, %v1461
  %v1472 = vsel %vm842, %v1463, 0
  %v1475 = vsel %vm842, %v1464, 0
  %v1478 = vsel %vm842, %v1465, 0
  %v1481 = vsel %vm842, %v1466, 0
  %v1484 = vsel %vm842, %v1467, 0
  %v1487 = vsel %vm842, %v1468, 0
  %v1490 = vsel %vm842, %v1469, 0
  %v1493 = vsel %vm842, %v1470, 0
  %v1496 = vsel %vm867, %v1430, 0
  %1498 = vmatprep.subr.bf16.mxu0 0
  %1499 = vmatpush1.bf16.msra.mxu0 0
  %1500 = vmatprep.subr.bf16.mxu0 0
  %1501 = vmatpush1.bf16.msra.mxu0 0
  %1502 = vmatprep.subr.bf16.mxu0 0
  %1503 = vmatpush1.bf16.msra.mxu0 0
  %1504 = vmatprep.subr.bf16.mxu0 0
  %1505 = vmatpush1.bf16.msra.mxu0 0
  %1506 = vmatprep.subr.bf16.mxu0 0
  %1507 = vmatpush1.bf16.msra.mxu0 0
  %1508 = vmatprep.subr.bf16.mxu0 0
  %1509 = vmatpush1.bf16.msra.mxu0 0
  %1510 = vmatprep.subr.bf16.mxu0 0
  %1511 = vmatpush1.bf16.msra.mxu0 0
  %1512 = vmatprep.subr.bf16.mxu0 0
  %1513 = vmatpush1.bf16.msra.mxu0 %v1496
  %1514 = vmatprep.subr.bf16.mxu0 0
  %1515 = vmatpush2.bf16.msra.mxu0 0
  %1516 = vmatprep.subr.bf16.mxu0 0
  %1517 = vmatpush2.bf16.msra.mxu0 0
  %1518 = vmatprep.subr.bf16.mxu0 0
  %1519 = vmatpush2.bf16.msra.mxu0 0
  %1520 = vmatprep.subr.bf16.mxu0 0
  %1521 = vmatpush2.bf16.msra.mxu0 0
  %1522 = vmatprep.subr.bf16.mxu0 0
  %1523 = vmatpush2.bf16.msra.mxu0 0
  %1524 = vmatprep.subr.bf16.mxu0 0
  %1525 = vmatpush2.bf16.msra.mxu0 0
  %1526 = vmatprep.subr.bf16.mxu0 0
  %1527 = vmatpush2.bf16.msra.mxu0 0
  %1528 = vmatprep.subr.bf16.mxu0 0
  %1529 = vmatpush2.bf16.msra.mxu0 0
  %1530 = vmatprep.mubr.bf16.mxu0 0
  %1531 = vmatmul.mubr.bf16.gmra.mxu0 %v1472
  %v1532 = vpop.f32.mrf.mxu0
  %v1533 = vadd.f32 0.0, %v1532
  %v1534 = vpop.f32.mrf.mxu0
  %v1535 = vpop.f32.mrf.mxu0
  %v1536 = vadd.f32 0.0, %v1535
  %v1537 = vpop.f32.mrf.mxu0
  %1538 = vmatprep.mubr.bf16.mxu0 0
  %1539 = vmatmul.mubr.bf16.gmra.mxu0 %v1475
  %v1540 = vpop.f32.mrf.mxu0
  %v1541 = vadd.f32 0.0, %v1540
  %v1542 = vpop.f32.mrf.mxu0
  %v1543 = vpop.f32.mrf.mxu0
  %v1544 = vadd.f32 0.0, %v1543
  %v1545 = vpop.f32.mrf.mxu0
  %1546 = vmatprep.mubr.bf16.mxu0 0
  %1547 = vmatmul.mubr.bf16.gmra.mxu0 %v1478
  %v1548 = vpop.f32.mrf.mxu0
  %v1549 = vadd.f32 0.0, %v1548
  %v1550 = vpop.f32.mrf.mxu0
  %v1551 = vpop.f32.mrf.mxu0
  %v1552 = vadd.f32 0.0, %v1551
  %v1553 = vpop.f32.mrf.mxu0
  %1554 = vmatprep.mubr.bf16.mxu0 0
  %1555 = vmatmul.mubr.bf16.gmra.mxu0 %v1481
  %v1556 = vpop.f32.mrf.mxu0
  %v1557 = vadd.f32 0.0, %v1556
  %v1558 = vpop.f32.mrf.mxu0
  %v1559 = vpop.f32.mrf.mxu0
  %v1560 = vadd.f32 0.0, %v1559
  %v1561 = vpop.f32.mrf.mxu0
  %1562 = vmatprep.mubr.bf16.mxu0 0
  %1563 = vmatmul.mubr.bf16.gmra.mxu0 %v1484
  %v1564 = vpop.f32.mrf.mxu0
  %v1565 = vadd.f32 0.0, %v1564
  %v1566 = vpop.f32.mrf.mxu0
  %v1567 = vpop.f32.mrf.mxu0
  %v1568 = vadd.f32 0.0, %v1567
  %v1569 = vpop.f32.mrf.mxu0
  %1570 = vmatprep.mubr.bf16.mxu0 0
  %1571 = vmatmul.mubr.bf16.gmra.mxu0 %v1487
  %v1572 = vpop.f32.mrf.mxu0
  %v1573 = vadd.f32 0.0, %v1572
  %v1574 = vpop.f32.mrf.mxu0
  %v1575 = vpop.f32.mrf.mxu0
  %v1576 = vadd.f32 0.0, %v1575
  %v1577 = vpop.f32.mrf.mxu0
  %1578 = vmatprep.mubr.bf16.mxu0 0
  %1579 = vmatmul.mubr.bf16.gmra.mxu0 %v1490
  %v1580 = vpop.f32.mrf.mxu0
  %v1581 = vadd.f32 0.0, %v1580
  %v1582 = vpop.f32.mrf.mxu0
  %v1583 = vpop.f32.mrf.mxu0
  %v1584 = vadd.f32 0.0, %v1583
  %v1585 = vpop.f32.mrf.mxu0
  %1586 = vmatprep.mubr.bf16.mxu0 0
  %1587 = vmatmul.mubr.bf16.gmra.mxu0 %v1493
  %v1588 = vpop.f32.mrf.mxu0
  %v1589 = vadd.f32 0.0, %v1588
  %v1590 = vpop.f32.mrf.mxu0
  %v1591 = vpop.f32.mrf.mxu0
  %v1592 = vadd.f32 0.0, %v1591
  %v1593 = vpop.f32.mrf.mxu0
  %1594 = vdwg.mxu0
  %v1595 = vadd.f32 %v1397, %v1533
  %v1596 = vadd.f32 %v1398, %v1536
  %v1597 = vadd.f32 %v1399, %v1541
  %v1598 = vadd.f32 %v1400, %v1544
  %v1599 = vadd.f32 %v1401, %v1549
  %v1600 = vadd.f32 %v1402, %v1552
  %v1601 = vadd.f32 %v1403, %v1557
  %v1602 = vadd.f32 %v1404, %v1560
  %v1603 = vadd.f32 %v1405, %v1565
  %v1604 = vadd.f32 %v1406, %v1568
  %v1605 = vadd.f32 %v1407, %v1573
  %v1606 = vadd.f32 %v1408, %v1576
  %v1607 = vadd.f32 %v1409, %v1581
  %v1608 = vadd.f32 %v1410, %v1584
  %v1609 = vadd.f32 %v1411, %v1589
  %v1610 = vadd.f32 %v1412, %v1592
  %v1611 = vld [vmem:[%s457] sm:$0xf]
  %v1612 = vld [vmem:[%s457 + $0x4] sm:$0x1]
  %v1613 = vld [vmem:[%s457 + $0x8] sm:$0xf]
  %v1614 = vld [vmem:[%s457 + $0xc] sm:$0x1]
  %v1615 = vld [vmem:[%s457 + $0x10] sm:$0xf]
  %v1616 = vld [vmem:[%s457 + $0x14] sm:$0x1]
  %v1617 = vld [vmem:[%s457 + $0x18] sm:$0xf]
  %v1618 = vld [vmem:[%s457 + $0x1c] sm:$0x1]
  %v1619 = vld [vmem:[%s457 + $0x20] sm:$0xf]
  %v1620 = vld [vmem:[%s457 + $0x24] sm:$0x1]
  %v1621 = vld [vmem:[%s457 + $0x28] sm:$0xf]
  %v1622 = vld [vmem:[%s457 + $0x2c] sm:$0x1]
  %v1623 = vld [vmem:[%s457 + $0x30] sm:$0xf]
  %v1624 = vld [vmem:[%s457 + $0x34] sm:$0x1]
  %v1625 = vld [vmem:[%s457 + $0x38] sm:$0xf]
  %v1626 = vld [vmem:[%s457 + $0x3c] sm:$0x1]
  %v1627 = vld [vmem:[%s457 + $0x50] sm:$0xf]
  %v1628 = vld [vmem:[%s457 + $0x54] sm:$0x1]
  %v1629 = vld [vmem:[%s457 + $0x58] sm:$0xf]
  %v1630 = vld [vmem:[%s457 + $0x5c] sm:$0x1]
  %v1631 = vld [vmem:[%s457 + $0x60] sm:$0xf]
  %v1632 = vld [vmem:[%s457 + $0x64] sm:$0x1]
  %v1633 = vld [vmem:[%s457 + $0x68] sm:$0xf]
  %v1634 = vld [vmem:[%s457 + $0x6c] sm:$0x1]
  %v1635 = vld [vmem:[%s457 + $0x70] sm:$0xf]
  %v1636 = vld [vmem:[%s457 + $0x74] sm:$0x1]
  %v1637 = vld [vmem:[%s457 + $0x78] sm:$0xf]
  %v1638 = vld [vmem:[%s457 + $0x7c] sm:$0x1]
  %v1639 = vld [vmem:[%s457 + $0x80] sm:$0xf]
  %v1640 = vld [vmem:[%s457 + $0x84] sm:$0x1]
  %v1641 = vld [vmem:[%s457 + $0x88] sm:$0xf]
  %v1642 = vld [vmem:[%s457 + $0x8c] sm:$0x1]
  %v1644 = vshrl.u32 %v1611, 16
  %v1646 = vrot.slane %v1644, 4
  %v1647 = vshll.u32 %v1611, 16
  %v1649 = vrot.slane %v1647, 5
  %v1650 = vor.u32 %v1646, %v1649
  %v1651 = vrot.slane %v1650, 4
  %v1653 = vshll.u32 %v1612, 16
  %v1655 = vrot.slane %v1653, 5
  %v1656 = vsel %vm591, %v1651, %v1655
  %v1658 = vshrl.u32 %v1613, 16
  %v1660 = vrot.slane %v1658, 4
  %v1661 = vshll.u32 %v1613, 16
  %v1663 = vrot.slane %v1661, 5
  %v1664 = vor.u32 %v1660, %v1663
  %v1665 = vrot.slane %v1664, 4
  %v1667 = vshll.u32 %v1614, 16
  %v1669 = vrot.slane %v1667, 5
  %v1670 = vsel %vm591, %v1665, %v1669
  %v1672 = vshrl.u32 %v1615, 16
  %v1674 = vrot.slane %v1672, 4
  %v1675 = vshll.u32 %v1615, 16
  %v1677 = vrot.slane %v1675, 5
  %v1678 = vor.u32 %v1674, %v1677
  %v1679 = vrot.slane %v1678, 4
  %v1681 = vshll.u32 %v1616, 16
  %v1683 = vrot.slane %v1681, 5
  %v1684 = vsel %vm591, %v1679, %v1683
  %v1686 = vshrl.u32 %v1617, 16
  %v1688 = vrot.slane %v1686, 4
  %v1689 = vshll.u32 %v1617, 16
  %v1691 = vrot.slane %v1689, 5
  %v1692 = vor.u32 %v1688, %v1691
  %v1693 = vrot.slane %v1692, 4
  %v1695 = vshll.u32 %v1618, 16
  %v1697 = vrot.slane %v1695, 5
  %v1698 = vsel %vm591, %v1693, %v1697
  %v1700 = vshrl.u32 %v1619, 16
  %v1702 = vrot.slane %v1700, 4
  %v1703 = vshll.u32 %v1619, 16
  %v1705 = vrot.slane %v1703, 5
  %v1706 = vor.u32 %v1702, %v1705
  %v1707 = vrot.slane %v1706, 4
  %v1709 = vshll.u32 %v1620, 16
  %v1711 = vrot.slane %v1709, 5
  %v1712 = vsel %vm591, %v1707, %v1711
  %v1714 = vshrl.u32 %v1621, 16
  %v1716 = vrot.slane %v1714, 4
  %v1717 = vshll.u32 %v1621, 16
  %v1719 = vrot.slane %v1717, 5
  %v1720 = vor.u32 %v1716, %v1719
  %v1721 = vrot.slane %v1720, 4
  %v1723 = vshll.u32 %v1622, 16
  %v1725 = vrot.slane %v1723, 5
  %v1726 = vsel %vm591, %v1721, %v1725
  %v1728 = vshrl.u32 %v1623, 16
  %v1730 = vrot.slane %v1728, 4
  %v1731 = vshll.u32 %v1623, 16
  %v1733 = vrot.slane %v1731, 5
  %v1734 = vor.u32 %v1730, %v1733
  %v1735 = vrot.slane %v1734, 4
  %v1737 = vshll.u32 %v1624, 16
  %v1739 = vrot.slane %v1737, 5
  %v1740 = vsel %vm591, %v1735, %v1739
  %v1742 = vshrl.u32 %v1625, 16
  %v1744 = vrot.slane %v1742, 4
  %v1745 = vshll.u32 %v1625, 16
  %v1747 = vrot.slane %v1745, 5
  %v1748 = vor.u32 %v1744, %v1747
  %v1749 = vrot.slane %v1748, 4
  %v1751 = vshll.u32 %v1626, 16
  %v1753 = vrot.slane %v1751, 5
  %v1754 = vsel %vm591, %v1749, %v1753
  %v1756 = vshrl.u32 %v1627, 16
  %v1758 = vrot.slane %v1756, 4
  %v1759 = vshll.u32 %v1627, 16
  %v1761 = vrot.slane %v1759, 5
  %v1762 = vor.u32 %v1758, %v1761
  %v1763 = vrot.slane %v1762, 4
  %v1765 = vshll.u32 %v1628, 16
  %v1767 = vrot.slane %v1765, 5
  %v1768 = vsel %vm591, %v1763, %v1767
  %v1770 = vshrl.u32 %v1629, 16
  %v1772 = vrot.slane %v1770, 4
  %v1773 = vshll.u32 %v1629, 16
  %v1775 = vrot.slane %v1773, 5
  %v1776 = vor.u32 %v1772, %v1775
  %v1777 = vrot.slane %v1776, 4
  %v1779 = vshll.u32 %v1630, 16
  %v1781 = vrot.slane %v1779, 5
  %v1782 = vsel %vm591, %v1777, %v1781
  %v1784 = vshrl.u32 %v1631, 16
  %v1786 = vrot.slane %v1784, 4
  %v1787 = vshll.u32 %v1631, 16
  %v1789 = vrot.slane %v1787, 5
  %v1790 = vor.u32 %v1786, %v1789
  %v1791 = vrot.slane %v1790, 4
  %v1793 = vshll.u32 %v1632, 16
  %v1795 = vrot.slane %v1793, 5
  %v1796 = vsel %vm591, %v1791, %v1795
  %v1798 = vshrl.u32 %v1633, 16
  %v1800 = vrot.slane %v1798, 4
  %v1801 = vshll.u32 %v1633, 16
  %v1803 = vrot.slane %v1801, 5
  %v1804 = vor.u32 %v1800, %v1803
  %v1805 = vrot.slane %v1804, 4
  %v1807 = vshll.u32 %v1634, 16
  %v1809 = vrot.slane %v1807, 5
  %v1810 = vsel %vm591, %v1805, %v1809
  %v1812 = vshrl.u32 %v1635, 16
  %v1814 = vrot.slane %v1812, 4
  %v1815 = vshll.u32 %v1635, 16
  %v1817 = vrot.slane %v1815, 5
  %v1818 = vor.u32 %v1814, %v1817
  %v1819 = vrot.slane %v1818, 4
  %v1821 = vshll.u32 %v1636, 16
  %v1823 = vrot.slane %v1821, 5
  %v1824 = vsel %vm591, %v1819, %v1823
  %v1826 = vshrl.u32 %v1637, 16
  %v1828 = vrot.slane %v1826, 4
  %v1829 = vshll.u32 %v1637, 16
  %v1831 = vrot.slane %v1829, 5
  %v1832 = vor.u32 %v1828, %v1831
  %v1833 = vrot.slane %v1832, 4
  %v1835 = vshll.u32 %v1638, 16
  %v1837 = vrot.slane %v1835, 5
  %v1838 = vsel %vm591, %v1833, %v1837
  %v1840 = vshrl.u32 %v1639, 16
  %v1842 = vrot.slane %v1840, 4
  %v1843 = vshll.u32 %v1639, 16
  %v1845 = vrot.slane %v1843, 5
  %v1846 = vor.u32 %v1842, %v1845
  %v1847 = vrot.slane %v1846, 4
  %v1849 = vshll.u32 %v1640, 16
  %v1851 = vrot.slane %v1849, 5
  %v1852 = vsel %vm591, %v1847, %v1851
  %v1854 = vshrl.u32 %v1641, 16
  %v1856 = vrot.slane %v1854, 4
  %v1857 = vshll.u32 %v1641, 16
  %v1859 = vrot.slane %v1857, 5
  %v1860 = vor.u32 %v1856, %v1859
  %v1861 = vrot.slane %v1860, 4
  %v1863 = vshll.u32 %v1642, 16
  %v1865 = vrot.slane %v1863, 5
  %v1866 = vsel %vm591, %v1861, %v1865
  %s1867 = scalar_lea.vmem %s1, 8
  %v1868 = vld [vmem:[%s1867] sm:$0x3]
  %v1869 = vunpack.c.l.b16 %v1656
  %v1870 = vunpack.c.l.b16 %v1670
  %v1871 = vunpack.c.l.b16 %v1684
  %v1872 = vunpack.c.l.b16 %v1698
  %v1873 = vunpack.c.l.b16 %v1712
  %v1874 = vunpack.c.l.b16 %v1726
  %v1875 = vunpack.c.l.b16 %v1740
  %v1876 = vunpack.c.l.b16 %v1754
  %v1877 = vunpack.c.l.b16 %v1768
  %v1878 = vunpack.c.l.b16 %v1782
  %v1879 = vunpack.c.l.b16 %v1796
  %v1880 = vunpack.c.l.b16 %v1810
  %v1881 = vunpack.c.l.b16 %v1824
  %v1882 = vunpack.c.l.b16 %v1838
  %v1883 = vunpack.c.l.b16 %v1852
  %v1884 = vunpack.c.l.b16 %v1866
  %v1885 = vpack.c.b16 %v1870, %v1869
  %v1886 = vpack.c.b16 %v1872, %v1871
  %v1887 = vpack.c.b16 %v1874, %v1873
  %v1888 = vpack.c.b16 %v1876, %v1875
  %v1889 = vpack.c.b16 %v1878, %v1877
  %v1890 = vpack.c.b16 %v1880, %v1879
  %v1891 = vpack.c.b16 %v1882, %v1881
  %v1892 = vpack.c.b16 %v1884, %v1883
  %v1894 = vsel %vm842, %v1885, 0
  %v1897 = vsel %vm842, %v1886, 0
  %v1900 = vsel %vm842, %v1887, 0
  %v1903 = vsel %vm842, %v1888, 0
  %v1906 = vsel %vm842, %v1889, 0
  %v1909 = vsel %vm842, %v1890, 0
  %v1912 = vsel %vm842, %v1891, 0
  %v1915 = vsel %vm842, %v1892, 0
  %v1918 = vsel %vm867, %v1868, 0
  %1920 = vmatprep.subr.bf16.mxu0 0
  %1921 = vmatpush1.bf16.msra.mxu0 0
  %1922 = vmatprep.subr.bf16.mxu0 0
  %1923 = vmatpush1.bf16.msra.mxu0 0
  %1924 = vmatprep.subr.bf16.mxu0 0
  %1925 = vmatpush1.bf16.msra.mxu0 0
  %1926 = vmatprep.subr.bf16.mxu0 0
  %1927 = vmatpush1.bf16.msra.mxu0 0
  %1928 = vmatprep.subr.bf16.mxu0 0
  %1929 = vmatpush1.bf16.msra.mxu0 0
  %1930 = vmatprep.subr.bf16.mxu0 0
  %1931 = vmatpush1.bf16.msra.mxu0 0
  %1932 = vmatprep.subr.bf16.mxu0 0
  %1933 = vmatpush1.bf16.msra.mxu0 0
  %1934 = vmatprep.subr.bf16.mxu0 0
  %1935 = vmatpush1.bf16.msra.mxu0 %v1918
  %1936 = vmatprep.subr.bf16.mxu0 0
  %1937 = vmatpush2.bf16.msra.mxu0 0
  %1938 = vmatprep.subr.bf16.mxu0 0
  %1939 = vmatpush2.bf16.msra.mxu0 0
  %1940 = vmatprep.subr.bf16.mxu0 0
  %1941 = vmatpush2.bf16.msra.mxu0 0
  %1942 = vmatprep.subr.bf16.mxu0 0
  %1943 = vmatpush2.bf16.msra.mxu0 0
  %1944 = vmatprep.subr.bf16.mxu0 0
  %1945 = vmatpush2.bf16.msra.mxu0 0
  %1946 = vmatprep.subr.bf16.mxu0 0
  %1947 = vmatpush2.bf16.msra.mxu0 0
  %1948 = vmatprep.subr.bf16.mxu0 0
  %1949 = vmatpush2.bf16.msra.mxu0 0
  %1950 = vmatprep.subr.bf16.mxu0 0
  %1951 = vmatpush2.bf16.msra.mxu0 0
  %1952 = vmatprep.mubr.bf16.mxu0 0
  %1953 = vmatmul.mubr.bf16.gmra.mxu0 %v1894
  %v1954 = vpop.f32.mrf.mxu0
  %v1955 = vadd.f32 0.0, %v1954
  %v1956 = vpop.f32.mrf.mxu0
  %v1957 = vpop.f32.mrf.mxu0
  %v1958 = vadd.f32 0.0, %v1957
  %v1959 = vpop.f32.mrf.mxu0
  %1960 = vmatprep.mubr.bf16.mxu0 0
  %1961 = vmatmul.mubr.bf16.gmra.mxu0 %v1897
  %v1962 = vpop.f32.mrf.mxu0
  %v1963 = vadd.f32 0.0, %v1962
  %v1964 = vpop.f32.mrf.mxu0
  %v1965 = vpop.f32.mrf.mxu0
  %v1966 = vadd.f32 0.0, %v1965
  %v1967 = vpop.f32.mrf.mxu0
  %1968 = vmatprep.mubr.bf16.mxu0 0
  %1969 = vmatmul.mubr.bf16.gmra.mxu0 %v1900
  %v1970 = vpop.f32.mrf.mxu0
  %v1971 = vadd.f32 0.0, %v1970
  %v1972 = vpop.f32.mrf.mxu0
  %v1973 = vpop.f32.mrf.mxu0
  %v1974 = vadd.f32 0.0, %v1973
  %v1975 = vpop.f32.mrf.mxu0
  %1976 = vmatprep.mubr.bf16.mxu0 0
  %1977 = vmatmul.mubr.bf16.gmra.mxu0 %v1903
  %v1978 = vpop.f32.mrf.mxu0
  %v1979 = vadd.f32 0.0, %v1978
  %v1980 = vpop.f32.mrf.mxu0
  %v1981 = vpop.f32.mrf.mxu0
  %v1982 = vadd.f32 0.0, %v1981
  %v1983 = vpop.f32.mrf.mxu0
  %1984 = vmatprep.mubr.bf16.mxu0 0
  %1985 = vmatmul.mubr.bf16.gmra.mxu0 %v1906
  %v1986 = vpop.f32.mrf.mxu0
  %v1987 = vadd.f32 0.0, %v1986
  %v1988 = vpop.f32.mrf.mxu0
  %v1989 = vpop.f32.mrf.mxu0
  %v1990 = vadd.f32 0.0, %v1989
  %v1991 = vpop.f32.mrf.mxu0
  %1992 = vmatprep.mubr.bf16.mxu0 0
  %1993 = vmatmul.mubr.bf16.gmra.mxu0 %v1909
  %v1994 = vpop.f32.mrf.mxu0
  %v1995 = vadd.f32 0.0, %v1994
  %v1996 = vpop.f32.mrf.mxu0
  %v1997 = vpop.f32.mrf.mxu0
  %v1998 = vadd.f32 0.0, %v1997
  %v1999 = vpop.f32.mrf.mxu0
  %2000 = vmatprep.mubr.bf16.mxu0 0
  %2001 = vmatmul.mubr.bf16.gmra.mxu0 %v1912
  %v2002 = vpop.f32.mrf.mxu0
  %v2003 = vadd.f32 0.0, %v2002
  %v2004 = vpop.f32.mrf.mxu0
  %v2005 = vpop.f32.mrf.mxu0
  %v2006 = vadd.f32 0.0, %v2005
  %v2007 = vpop.f32.mrf.mxu0
  %2008 = vmatprep.mubr.bf16.mxu0 0
  %2009 = vmatmul.mubr.bf16.gmra.mxu0 %v1915
  %v2010 = vpop.f32.mrf.mxu0
  %v2011 = vadd.f32 0.0, %v2010
  %v2012 = vpop.f32.mrf.mxu0
  %v2013 = vpop.f32.mrf.mxu0
  %v2014 = vadd.f32 0.0, %v2013
  %v2015 = vpop.f32.mrf.mxu0
  %2016 = vdwg.mxu0
  %v2017 = vadd.f32 %v1595, %v1955
  %v2018 = vadd.f32 %v1596, %v1958
  %v2019 = vadd.f32 %v1597, %v1963
  %v2020 = vadd.f32 %v1598, %v1966
  %v2021 = vadd.f32 %v1599, %v1971
  %v2022 = vadd.f32 %v1600, %v1974
  %v2023 = vadd.f32 %v1601, %v1979
  %v2024 = vadd.f32 %v1602, %v1982
  %v2025 = vadd.f32 %v1603, %v1987
  %v2026 = vadd.f32 %v1604, %v1990
  %v2027 = vadd.f32 %v1605, %v1995
  %v2028 = vadd.f32 %v1606, %v1998
  %v2029 = vadd.f32 %v1607, %v2003
  %v2030 = vadd.f32 %v1608, %v2006
  %v2031 = vadd.f32 %v1609, %v2011
  %v2032 = vadd.f32 %v1610, %v2014
  %v2033 = vld [vmem:[%s457] sm:$0xe]
  %v2034 = vld [vmem:[%s457 + $0x8] sm:$0xe]
  %v2035 = vld [vmem:[%s457 + $0x10] sm:$0xe]
  %v2036 = vld [vmem:[%s457 + $0x18] sm:$0xe]
  %v2037 = vld [vmem:[%s457 + $0x20] sm:$0xe]
  %v2038 = vld [vmem:[%s457 + $0x28] sm:$0xe]
  %v2039 = vld [vmem:[%s457 + $0x30] sm:$0xe]
  %v2040 = vld [vmem:[%s457 + $0x38] sm:$0xe]
  %v2041 = vld [vmem:[%s457 + $0x50] sm:$0xe]
  %v2042 = vld [vmem:[%s457 + $0x58] sm:$0xe]
  %v2043 = vld [vmem:[%s457 + $0x60] sm:$0xe]
  %v2044 = vld [vmem:[%s457 + $0x68] sm:$0xe]
  %v2045 = vld [vmem:[%s457 + $0x70] sm:$0xe]
  %v2046 = vld [vmem:[%s457 + $0x78] sm:$0xe]
  %v2047 = vld [vmem:[%s457 + $0x80] sm:$0xe]
  %v2048 = vld [vmem:[%s457 + $0x88] sm:$0xe]
  %v2081 = vrot.slane %v2033, 5
  %v2082 = vrot.slane %v2081, 4
  %v2083 = vrot.slane %v1612, 5
  %v2084 = vsel %vm1182, %v2082, %v2083
  %v2085 = vrot.slane %v2034, 5
  %v2086 = vrot.slane %v2085, 4
  %v2087 = vrot.slane %v1614, 5
  %v2088 = vsel %vm1182, %v2086, %v2087
  %v2089 = vrot.slane %v2035, 5
  %v2090 = vrot.slane %v2089, 4
  %v2091 = vrot.slane %v1616, 5
  %v2092 = vsel %vm1182, %v2090, %v2091
  %v2093 = vrot.slane %v2036, 5
  %v2094 = vrot.slane %v2093, 4
  %v2095 = vrot.slane %v1618, 5
  %v2096 = vsel %vm1182, %v2094, %v2095
  %v2097 = vrot.slane %v2037, 5
  %v2098 = vrot.slane %v2097, 4
  %v2099 = vrot.slane %v1620, 5
  %v2100 = vsel %vm1182, %v2098, %v2099
  %v2101 = vrot.slane %v2038, 5
  %v2102 = vrot.slane %v2101, 4
  %v2103 = vrot.slane %v1622, 5
  %v2104 = vsel %vm1182, %v2102, %v2103
  %v2105 = vrot.slane %v2039, 5
  %v2106 = vrot.slane %v2105, 4
  %v2107 = vrot.slane %v1624, 5
  %v2108 = vsel %vm1182, %v2106, %v2107
  %v2109 = vrot.slane %v2040, 5
  %v2110 = vrot.slane %v2109, 4
  %v2111 = vrot.slane %v1626, 5
  %v2112 = vsel %vm1182, %v2110, %v2111
  %v2113 = vrot.slane %v2041, 5
  %v2114 = vrot.slane %v2113, 4
  %v2115 = vrot.slane %v1628, 5
  %v2116 = vsel %vm1182, %v2114, %v2115
  %v2117 = vrot.slane %v2042, 5
  %v2118 = vrot.slane %v2117, 4
  %v2119 = vrot.slane %v1630, 5
  %v2120 = vsel %vm1182, %v2118, %v2119
  %v2121 = vrot.slane %v2043, 5
  %v2122 = vrot.slane %v2121, 4
  %v2123 = vrot.slane %v1632, 5
  %v2124 = vsel %vm1182, %v2122, %v2123
  %v2125 = vrot.slane %v2044, 5
  %v2126 = vrot.slane %v2125, 4
  %v2127 = vrot.slane %v1634, 5
  %v2128 = vsel %vm1182, %v2126, %v2127
  %v2129 = vrot.slane %v2045, 5
  %v2130 = vrot.slane %v2129, 4
  %v2131 = vrot.slane %v1636, 5
  %v2132 = vsel %vm1182, %v2130, %v2131
  %v2133 = vrot.slane %v2046, 5
  %v2134 = vrot.slane %v2133, 4
  %v2135 = vrot.slane %v1638, 5
  %v2136 = vsel %vm1182, %v2134, %v2135
  %v2137 = vrot.slane %v2047, 5
  %v2138 = vrot.slane %v2137, 4
  %v2139 = vrot.slane %v1640, 5
  %v2140 = vsel %vm1182, %v2138, %v2139
  %v2141 = vrot.slane %v2048, 5
  %v2142 = vrot.slane %v2141, 4
  %v2143 = vrot.slane %v1642, 5
  %v2144 = vsel %vm1182, %v2142, %v2143
  %s2145 = scalar_lea.vmem %s1, 10
  %v2146 = vld [vmem:[%s2145] sm:$0x3]
  %v2147 = vunpack.c.l.b16 %v2084
  %v2148 = vunpack.c.l.b16 %v2088
  %v2149 = vunpack.c.l.b16 %v2092
  %v2150 = vunpack.c.l.b16 %v2096
  %v2151 = vunpack.c.l.b16 %v2100
  %v2152 = vunpack.c.l.b16 %v2104
  %v2153 = vunpack.c.l.b16 %v2108
  %v2154 = vunpack.c.l.b16 %v2112
  %v2155 = vunpack.c.l.b16 %v2116
  %v2156 = vunpack.c.l.b16 %v2120
  %v2157 = vunpack.c.l.b16 %v2124
  %v2158 = vunpack.c.l.b16 %v2128
  %v2159 = vunpack.c.l.b16 %v2132
  %v2160 = vunpack.c.l.b16 %v2136
  %v2161 = vunpack.c.l.b16 %v2140
  %v2162 = vunpack.c.l.b16 %v2144
  %v2163 = vpack.c.b16 %v2148, %v2147
  %v2164 = vpack.c.b16 %v2150, %v2149
  %v2165 = vpack.c.b16 %v2152, %v2151
  %v2166 = vpack.c.b16 %v2154, %v2153
  %v2167 = vpack.c.b16 %v2156, %v2155
  %v2168 = vpack.c.b16 %v2158, %v2157
  %v2169 = vpack.c.b16 %v2160, %v2159
  %v2170 = vpack.c.b16 %v2162, %v2161
  %v2172 = vsel %vm842, %v2163, 0
  %v2175 = vsel %vm842, %v2164, 0
  %v2178 = vsel %vm842, %v2165, 0
  %v2181 = vsel %vm842, %v2166, 0
  %v2184 = vsel %vm842, %v2167, 0
  %v2187 = vsel %vm842, %v2168, 0
  %v2190 = vsel %vm842, %v2169, 0
  %v2193 = vsel %vm842, %v2170, 0
  %v2196 = vsel %vm867, %v2146, 0
  %2198 = vmatprep.subr.bf16.mxu0 0
  %2199 = vmatpush1.bf16.msra.mxu0 0
  %2200 = vmatprep.subr.bf16.mxu0 0
  %2201 = vmatpush1.bf16.msra.mxu0 0
  %2202 = vmatprep.subr.bf16.mxu0 0
  %2203 = vmatpush1.bf16.msra.mxu0 0
  %2204 = vmatprep.subr.bf16.mxu0 0
  %2205 = vmatpush1.bf16.msra.mxu0 0
  %2206 = vmatprep.subr.bf16.mxu0 0
  %2207 = vmatpush1.bf16.msra.mxu0 0
  %2208 = vmatprep.subr.bf16.mxu0 0
  %2209 = vmatpush1.bf16.msra.mxu0 0
  %2210 = vmatprep.subr.bf16.mxu0 0
  %2211 = vmatpush1.bf16.msra.mxu0 0
  %2212 = vmatprep.subr.bf16.mxu0 0
  %2213 = vmatpush1.bf16.msra.mxu0 %v2196
  %2214 = vmatprep.subr.bf16.mxu0 0
  %2215 = vmatpush2.bf16.msra.mxu0 0
  %2216 = vmatprep.subr.bf16.mxu0 0
  %2217 = vmatpush2.bf16.msra.mxu0 0
  %2218 = vmatprep.subr.bf16.mxu0 0
  %2219 = vmatpush2.bf16.msra.mxu0 0
  %2220 = vmatprep.subr.bf16.mxu0 0
  %2221 = vmatpush2.bf16.msra.mxu0 0
  %2222 = vmatprep.subr.bf16.mxu0 0
  %2223 = vmatpush2.bf16.msra.mxu0 0
  %2224 = vmatprep.subr.bf16.mxu0 0
  %2225 = vmatpush2.bf16.msra.mxu0 0
  %2226 = vmatprep.subr.bf16.mxu0 0
  %2227 = vmatpush2.bf16.msra.mxu0 0
  %2228 = vmatprep.subr.bf16.mxu0 0
  %2229 = vmatpush2.bf16.msra.mxu0 0
  %2230 = vmatprep.mubr.bf16.mxu0 0
  %2231 = vmatmul.mubr.bf16.gmra.mxu0 %v2172
  %v2232 = vpop.f32.mrf.mxu0
  %v2233 = vadd.f32 0.0, %v2232
  %v2234 = vpop.f32.mrf.mxu0
  %v2235 = vpop.f32.mrf.mxu0
  %v2236 = vadd.f32 0.0, %v2235
  %v2237 = vpop.f32.mrf.mxu0
  %2238 = vmatprep.mubr.bf16.mxu0 0
  %2239 = vmatmul.mubr.bf16.gmra.mxu0 %v2175
  %v2240 = vpop.f32.mrf.mxu0
  %v2241 = vadd.f32 0.0, %v2240
  %v2242 = vpop.f32.mrf.mxu0
  %v2243 = vpop.f32.mrf.mxu0
  %v2244 = vadd.f32 0.0, %v2243
  %v2245 = vpop.f32.mrf.mxu0
  %2246 = vmatprep.mubr.bf16.mxu0 0
  %2247 = vmatmul.mubr.bf16.gmra.mxu0 %v2178
  %v2248 = vpop.f32.mrf.mxu0
  %v2249 = vadd.f32 0.0, %v2248
  %v2250 = vpop.f32.mrf.mxu0
  %v2251 = vpop.f32.mrf.mxu0
  %v2252 = vadd.f32 0.0, %v2251
  %v2253 = vpop.f32.mrf.mxu0
  %2254 = vmatprep.mubr.bf16.mxu0 0
  %2255 = vmatmul.mubr.bf16.gmra.mxu0 %v2181
  %v2256 = vpop.f32.mrf.mxu0
  %v2257 = vadd.f32 0.0, %v2256
  %v2258 = vpop.f32.mrf.mxu0
  %v2259 = vpop.f32.mrf.mxu0
  %v2260 = vadd.f32 0.0, %v2259
  %v2261 = vpop.f32.mrf.mxu0
  %2262 = vmatprep.mubr.bf16.mxu0 0
  %2263 = vmatmul.mubr.bf16.gmra.mxu0 %v2184
  %v2264 = vpop.f32.mrf.mxu0
  %v2265 = vadd.f32 0.0, %v2264
  %v2266 = vpop.f32.mrf.mxu0
  %v2267 = vpop.f32.mrf.mxu0
  %v2268 = vadd.f32 0.0, %v2267
  %v2269 = vpop.f32.mrf.mxu0
  %2270 = vmatprep.mubr.bf16.mxu0 0
  %2271 = vmatmul.mubr.bf16.gmra.mxu0 %v2187
  %v2272 = vpop.f32.mrf.mxu0
  %v2273 = vadd.f32 0.0, %v2272
  %v2274 = vpop.f32.mrf.mxu0
  %v2275 = vpop.f32.mrf.mxu0
  %v2276 = vadd.f32 0.0, %v2275
  %v2277 = vpop.f32.mrf.mxu0
  %2278 = vmatprep.mubr.bf16.mxu0 0
  %2279 = vmatmul.mubr.bf16.gmra.mxu0 %v2190
  %v2280 = vpop.f32.mrf.mxu0
  %v2281 = vadd.f32 0.0, %v2280
  %v2282 = vpop.f32.mrf.mxu0
  %v2283 = vpop.f32.mrf.mxu0
  %v2284 = vadd.f32 0.0, %v2283
  %v2285 = vpop.f32.mrf.mxu0
  %2286 = vmatprep.mubr.bf16.mxu0 0
  %2287 = vmatmul.mubr.bf16.gmra.mxu0 %v2193
  %v2288 = vpop.f32.mrf.mxu0
  %v2289 = vadd.f32 0.0, %v2288
  %v2290 = vpop.f32.mrf.mxu0
  %v2291 = vpop.f32.mrf.mxu0
  %v2292 = vadd.f32 0.0, %v2291
  %v2293 = vpop.f32.mrf.mxu0
  %2294 = vdwg.mxu0
  %v2295 = vadd.f32 %v2017, %v2233
  %v2296 = vadd.f32 %v2018, %v2236
  %v2297 = vadd.f32 %v2019, %v2241
  %v2298 = vadd.f32 %v2020, %v2244
  %v2299 = vadd.f32 %v2021, %v2249
  %v2300 = vadd.f32 %v2022, %v2252
  %v2301 = vadd.f32 %v2023, %v2257
  %v2302 = vadd.f32 %v2024, %v2260
  %v2303 = vadd.f32 %v2025, %v2265
  %v2304 = vadd.f32 %v2026, %v2268
  %v2305 = vadd.f32 %v2027, %v2273
  %v2306 = vadd.f32 %v2028, %v2276
  %v2307 = vadd.f32 %v2029, %v2281
  %v2308 = vadd.f32 %v2030, %v2284
  %v2309 = vadd.f32 %v2031, %v2289
  %v2310 = vadd.f32 %v2032, %v2292
  %s2311 = scalar_lea.vmem [#allocation2], 16
  %v2312 = vld [vmem:[%s2311] sm:$0xf]
  %v2313 = vld [vmem:[%s2311 + $0x8] sm:$0xf]
  %v2314 = vld [vmem:[%s2311 + $0x10] sm:$0xf]
  %v2315 = vld [vmem:[%s2311 + $0x18] sm:$0xf]
  %v2316 = vld [vmem:[%s2311 + $0x20] sm:$0xf]
  %v2317 = vld [vmem:[%s2311 + $0x28] sm:$0xf]
  %v2318 = vld [vmem:[%s2311 + $0x30] sm:$0xf]
  %v2319 = vld [vmem:[%s2311 + $0x38] sm:$0xf]
  %v2320 = vld [vmem:[%s2311 + $0x50] sm:$0xf]
  %v2321 = vld [vmem:[%s2311 + $0x58] sm:$0xf]
  %v2322 = vld [vmem:[%s2311 + $0x60] sm:$0xf]
  %v2323 = vld [vmem:[%s2311 + $0x68] sm:$0xf]
  %v2324 = vld [vmem:[%s2311 + $0x70] sm:$0xf]
  %v2325 = vld [vmem:[%s2311 + $0x78] sm:$0xf]
  %v2326 = vld [vmem:[%s2311 + $0x80] sm:$0xf]
  %v2327 = vld [vmem:[%s2311 + $0x88] sm:$0xf]
  %s2328 = scalar_lea.vmem %s1, 12
  %v2329 = vld [vmem:[%s2328] sm:$0x3]
  %v2346 = vunpack.c.l.b16 %v2312
  %v2347 = vunpack.c.l.b16 %v2313
  %v2348 = vunpack.c.l.b16 %v2314
  %v2349 = vunpack.c.l.b16 %v2315
  %v2350 = vunpack.c.l.b16 %v2316
  %v2351 = vunpack.c.l.b16 %v2317
  %v2352 = vunpack.c.l.b16 %v2318
  %v2353 = vunpack.c.l.b16 %v2319
  %v2354 = vunpack.c.l.b16 %v2320
  %v2355 = vunpack.c.l.b16 %v2321
  %v2356 = vunpack.c.l.b16 %v2322
  %v2357 = vunpack.c.l.b16 %v2323
  %v2358 = vunpack.c.l.b16 %v2324
  %v2359 = vunpack.c.l.b16 %v2325
  %v2360 = vunpack.c.l.b16 %v2326
  %v2361 = vunpack.c.l.b16 %v2327
  %v2362 = vpack.c.b16 %v2347, %v2346
  %v2363 = vpack.c.b16 %v2349, %v2348
  %v2364 = vpack.c.b16 %v2351, %v2350
  %v2365 = vpack.c.b16 %v2353, %v2352
  %v2366 = vpack.c.b16 %v2355, %v2354
  %v2367 = vpack.c.b16 %v2357, %v2356
  %v2368 = vpack.c.b16 %v2359, %v2358
  %v2369 = vpack.c.b16 %v2361, %v2360
  %v2371 = vsel %vm842, %v2362, 0
  %v2374 = vsel %vm842, %v2363, 0
  %v2377 = vsel %vm842, %v2364, 0
  %v2380 = vsel %vm842, %v2365, 0
  %v2383 = vsel %vm842, %v2366, 0
  %v2386 = vsel %vm842, %v2367, 0
  %v2389 = vsel %vm842, %v2368, 0
  %v2392 = vsel %vm842, %v2369, 0
  %v2395 = vsel %vm867, %v2329, 0
  %2397 = vmatprep.subr.bf16.mxu0 0
  %2398 = vmatpush1.bf16.msra.mxu0 0
  %2399 = vmatprep.subr.bf16.mxu0 0
  %2400 = vmatpush1.bf16.msra.mxu0 0
  %2401 = vmatprep.subr.bf16.mxu0 0
  %2402 = vmatpush1.bf16.msra.mxu0 0
  %2403 = vmatprep.subr.bf16.mxu0 0
  %2404 = vmatpush1.bf16.msra.mxu0 0
  %2405 = vmatprep.subr.bf16.mxu0 0
  %2406 = vmatpush1.bf16.msra.mxu0 0
  %2407 = vmatprep.subr.bf16.mxu0 0
  %2408 = vmatpush1.bf16.msra.mxu0 0
  %2409 = vmatprep.subr.bf16.mxu0 0
  %2410 = vmatpush1.bf16.msra.mxu0 0
  %2411 = vmatprep.subr.bf16.mxu0 0
  %2412 = vmatpush1.bf16.msra.mxu0 %v2395
  %2413 = vmatprep.subr.bf16.mxu0 0
  %2414 = vmatpush2.bf16.msra.mxu0 0
  %2415 = vmatprep.subr.bf16.mxu0 0
  %2416 = vmatpush2.bf16.msra.mxu0 0
  %2417 = vmatprep.subr.bf16.mxu0 0
  %2418 = vmatpush2.bf16.msra.mxu0 0
  %2419 = vmatprep.subr.bf16.mxu0 0
  %2420 = vmatpush2.bf16.msra.mxu0 0
  %2421 = vmatprep.subr.bf16.mxu0 0
  %2422 = vmatpush2.bf16.msra.mxu0 0
  %2423 = vmatprep.subr.bf16.mxu0 0
  %2424 = vmatpush2.bf16.msra.mxu0 0
  %2425 = vmatprep.subr.bf16.mxu0 0
  %2426 = vmatpush2.bf16.msra.mxu0 0
  %2427 = vmatprep.subr.bf16.mxu0 0
  %2428 = vmatpush2.bf16.msra.mxu0 0
  %2429 = vmatprep.mubr.bf16.mxu0 0
  %2430 = vmatmul.mubr.bf16.gmra.mxu0 %v2371
  %v2431 = vpop.f32.mrf.mxu0
  %v2432 = vadd.f32 0.0, %v2431
  %v2433 = vpop.f32.mrf.mxu0
  %v2434 = vpop.f32.mrf.mxu0
  %v2435 = vadd.f32 0.0, %v2434
  %v2436 = vpop.f32.mrf.mxu0
  %2437 = vmatprep.mubr.bf16.mxu0 0
  %2438 = vmatmul.mubr.bf16.gmra.mxu0 %v2374
  %v2439 = vpop.f32.mrf.mxu0
  %v2440 = vadd.f32 0.0, %v2439
  %v2441 = vpop.f32.mrf.mxu0
  %v2442 = vpop.f32.mrf.mxu0
  %v2443 = vadd.f32 0.0, %v2442
  %v2444 = vpop.f32.mrf.mxu0
  %2445 = vmatprep.mubr.bf16.mxu0 0
  %2446 = vmatmul.mubr.bf16.gmra.mxu0 %v2377
  %v2447 = vpop.f32.mrf.mxu0
  %v2448 = vadd.f32 0.0, %v2447
  %v2449 = vpop.f32.mrf.mxu0
  %v2450 = vpop.f32.mrf.mxu0
  %v2451 = vadd.f32 0.0, %v2450
  %v2452 = vpop.f32.mrf.mxu0
  %2453 = vmatprep.mubr.bf16.mxu0 0
  %2454 = vmatmul.mubr.bf16.gmra.mxu0 %v2380
  %v2455 = vpop.f32.mrf.mxu0
  %v2456 = vadd.f32 0.0, %v2455
  %v2457 = vpop.f32.mrf.mxu0
  %v2458 = vpop.f32.mrf.mxu0
  %v2459 = vadd.f32 0.0, %v2458
  %v2460 = vpop.f32.mrf.mxu0
  %2461 = vmatprep.mubr.bf16.mxu0 0
  %2462 = vmatmul.mubr.bf16.gmra.mxu0 %v2383
  %v2463 = vpop.f32.mrf.mxu0
  %v2464 = vadd.f32 0.0, %v2463
  %v2465 = vpop.f32.mrf.mxu0
  %v2466 = vpop.f32.mrf.mxu0
  %v2467 = vadd.f32 0.0, %v2466
  %v2468 = vpop.f32.mrf.mxu0
  %2469 = vmatprep.mubr.bf16.mxu0 0
  %2470 = vmatmul.mubr.bf16.gmra.mxu0 %v2386
  %v2471 = vpop.f32.mrf.mxu0
  %v2472 = vadd.f32 0.0, %v2471
  %v2473 = vpop.f32.mrf.mxu0
  %v2474 = vpop.f32.mrf.mxu0
  %v2475 = vadd.f32 0.0, %v2474
  %v2476 = vpop.f32.mrf.mxu0
  %2477 = vmatprep.mubr.bf16.mxu0 0
  %2478 = vmatmul.mubr.bf16.gmra.mxu0 %v2389
  %v2479 = vpop.f32.mrf.mxu0
  %v2480 = vadd.f32 0.0, %v2479
  %v2481 = vpop.f32.mrf.mxu0
  %v2482 = vpop.f32.mrf.mxu0
  %v2483 = vadd.f32 0.0, %v2482
  %v2484 = vpop.f32.mrf.mxu0
  %2485 = vmatprep.mubr.bf16.mxu0 0
  %2486 = vmatmul.mubr.bf16.gmra.mxu0 %v2392
  %v2487 = vpop.f32.mrf.mxu0
  %v2488 = vadd.f32 0.0, %v2487
  %v2489 = vpop.f32.mrf.mxu0
  %v2490 = vpop.f32.mrf.mxu0
  %v2491 = vadd.f32 0.0, %v2490
  %v2492 = vpop.f32.mrf.mxu0
  %2493 = vdwg.mxu0
  %v2494 = vadd.f32 %v2295, %v2432
  %v2495 = vadd.f32 %v2296, %v2435
  %v2496 = vadd.f32 %v2297, %v2440
  %v2497 = vadd.f32 %v2298, %v2443
  %v2498 = vadd.f32 %v2299, %v2448
  %v2499 = vadd.f32 %v2300, %v2451
  %v2500 = vadd.f32 %v2301, %v2456
  %v2501 = vadd.f32 %v2302, %v2459
  %v2502 = vadd.f32 %v2303, %v2464
  %v2503 = vadd.f32 %v2304, %v2467
  %v2504 = vadd.f32 %v2305, %v2472
  %v2505 = vadd.f32 %v2306, %v2475
  %v2506 = vadd.f32 %v2307, %v2480
  %v2507 = vadd.f32 %v2308, %v2483
  %v2508 = vadd.f32 %v2309, %v2488
  %v2509 = vadd.f32 %v2310, %v2491
  %v2510 = vld [vmem:[%s2311] sm:$0xf]
  %v2511 = vld [vmem:[%s2311 + $0x4] sm:$0x1]
  %v2512 = vld [vmem:[%s2311 + $0x8] sm:$0xf]
  %v2513 = vld [vmem:[%s2311 + $0xc] sm:$0x1]
  %v2514 = vld [vmem:[%s2311 + $0x10] sm:$0xf]
  %v2515 = vld [vmem:[%s2311 + $0x14] sm:$0x1]
  %v2516 = vld [vmem:[%s2311 + $0x18] sm:$0xf]
  %v2517 = vld [vmem:[%s2311 + $0x1c] sm:$0x1]
  %v2518 = vld [vmem:[%s2311 + $0x20] sm:$0xf]
  %v2519 = vld [vmem:[%s2311 + $0x24] sm:$0x1]
  %v2520 = vld [vmem:[%s2311 + $0x28] sm:$0xf]
  %v2521 = vld [vmem:[%s2311 + $0x2c] sm:$0x1]
  %v2522 = vld [vmem:[%s2311 + $0x30] sm:$0xf]
  %v2523 = vld [vmem:[%s2311 + $0x34] sm:$0x1]
  %v2524 = vld [vmem:[%s2311 + $0x38] sm:$0xf]
  %v2525 = vld [vmem:[%s2311 + $0x3c] sm:$0x1]
  %v2526 = vld [vmem:[%s2311 + $0x50] sm:$0xf]
  %v2527 = vld [vmem:[%s2311 + $0x54] sm:$0x1]
  %v2528 = vld [vmem:[%s2311 + $0x58] sm:$0xf]
  %v2529 = vld [vmem:[%s2311 + $0x5c] sm:$0x1]
  %v2530 = vld [vmem:[%s2311 + $0x60] sm:$0xf]
  %v2531 = vld [vmem:[%s2311 + $0x64] sm:$0x1]
  %v2532 = vld [vmem:[%s2311 + $0x68] sm:$0xf]
  %v2533 = vld [vmem:[%s2311 + $0x6c] sm:$0x1]
  %v2534 = vld [vmem:[%s2311 + $0x70] sm:$0xf]
  %v2535 = vld [vmem:[%s2311 + $0x74] sm:$0x1]
  %v2536 = vld [vmem:[%s2311 + $0x78] sm:$0xf]
  %v2537 = vld [vmem:[%s2311 + $0x7c] sm:$0x1]
  %v2538 = vld [vmem:[%s2311 + $0x80] sm:$0xf]
  %v2539 = vld [vmem:[%s2311 + $0x84] sm:$0x1]
  %v2540 = vld [vmem:[%s2311 + $0x88] sm:$0xf]
  %v2541 = vld [vmem:[%s2311 + $0x8c] sm:$0x1]
  %v2543 = vshrl.u32 %v2510, 16
  %v2545 = vrot.slane %v2543, 4
  %v2546 = vshll.u32 %v2510, 16
  %v2548 = vrot.slane %v2546, 5
  %v2549 = vor.u32 %v2545, %v2548
  %v2550 = vrot.slane %v2549, 4
  %v2552 = vshll.u32 %v2511, 16
  %v2554 = vrot.slane %v2552, 5
  %v2555 = vsel %vm591, %v2550, %v2554
  %v2557 = vshrl.u32 %v2512, 16
  %v2559 = vrot.slane %v2557, 4
  %v2560 = vshll.u32 %v2512, 16
  %v2562 = vrot.slane %v2560, 5
  %v2563 = vor.u32 %v2559, %v2562
  %v2564 = vrot.slane %v2563, 4
  %v2566 = vshll.u32 %v2513, 16
  %v2568 = vrot.slane %v2566, 5
  %v2569 = vsel %vm591, %v2564, %v2568
  %v2571 = vshrl.u32 %v2514, 16
  %v2573 = vrot.slane %v2571, 4
  %v2574 = vshll.u32 %v2514, 16
  %v2576 = vrot.slane %v2574, 5
  %v2577 = vor.u32 %v2573, %v2576
  %v2578 = vrot.slane %v2577, 4
  %v2580 = vshll.u32 %v2515, 16
  %v2582 = vrot.slane %v2580, 5
  %v2583 = vsel %vm591, %v2578, %v2582
  %v2585 = vshrl.u32 %v2516, 16
  %v2587 = vrot.slane %v2585, 4
  %v2588 = vshll.u32 %v2516, 16
  %v2590 = vrot.slane %v2588, 5
  %v2591 = vor.u32 %v2587, %v2590
  %v2592 = vrot.slane %v2591, 4
  %v2594 = vshll.u32 %v2517, 16
  %v2596 = vrot.slane %v2594, 5
  %v2597 = vsel %vm591, %v2592, %v2596
  %v2599 = vshrl.u32 %v2518, 16
  %v2601 = vrot.slane %v2599, 4
  %v2602 = vshll.u32 %v2518, 16
  %v2604 = vrot.slane %v2602, 5
  %v2605 = vor.u32 %v2601, %v2604
  %v2606 = vrot.slane %v2605, 4
  %v2608 = vshll.u32 %v2519, 16
  %v2610 = vrot.slane %v2608, 5
  %v2611 = vsel %vm591, %v2606, %v2610
  %v2613 = vshrl.u32 %v2520, 16
  %v2615 = vrot.slane %v2613, 4
  %v2616 = vshll.u32 %v2520, 16
  %v2618 = vrot.slane %v2616, 5
  %v2619 = vor.u32 %v2615, %v2618
  %v2620 = vrot.slane %v2619, 4
  %v2622 = vshll.u32 %v2521, 16
  %v2624 = vrot.slane %v2622, 5
  %v2625 = vsel %vm591, %v2620, %v2624
  %v2627 = vshrl.u32 %v2522, 16
  %v2629 = vrot.slane %v2627, 4
  %v2630 = vshll.u32 %v2522, 16
  %v2632 = vrot.slane %v2630, 5
  %v2633 = vor.u32 %v2629, %v2632
  %v2634 = vrot.slane %v2633, 4
  %v2636 = vshll.u32 %v2523, 16
  %v2638 = vrot.slane %v2636, 5
  %v2639 = vsel %vm591, %v2634, %v2638
  %v2641 = vshrl.u32 %v2524, 16
  %v2643 = vrot.slane %v2641, 4
  %v2644 = vshll.u32 %v2524, 16
  %v2646 = vrot.slane %v2644, 5
  %v2647 = vor.u32 %v2643, %v2646
  %v2648 = vrot.slane %v2647, 4
  %v2650 = vshll.u32 %v2525, 16
  %v2652 = vrot.slane %v2650, 5
  %v2653 = vsel %vm591, %v2648, %v2652
  %v2655 = vshrl.u32 %v2526, 16
  %v2657 = vrot.slane %v2655, 4
  %v2658 = vshll.u32 %v2526, 16
  %v2660 = vrot.slane %v2658, 5
  %v2661 = vor.u32 %v2657, %v2660
  %v2662 = vrot.slane %v2661, 4
  %v2664 = vshll.u32 %v2527, 16
  %v2666 = vrot.slane %v2664, 5
  %v2667 = vsel %vm591, %v2662, %v2666
  %v2669 = vshrl.u32 %v2528, 16
  %v2671 = vrot.slane %v2669, 4
  %v2672 = vshll.u32 %v2528, 16
  %v2674 = vrot.slane %v2672, 5
  %v2675 = vor.u32 %v2671, %v2674
  %v2676 = vrot.slane %v2675, 4
  %v2678 = vshll.u32 %v2529, 16
  %v2680 = vrot.slane %v2678, 5
  %v2681 = vsel %vm591, %v2676, %v2680
  %v2683 = vshrl.u32 %v2530, 16
  %v2685 = vrot.slane %v2683, 4
  %v2686 = vshll.u32 %v2530, 16
  %v2688 = vrot.slane %v2686, 5
  %v2689 = vor.u32 %v2685, %v2688
  %v2690 = vrot.slane %v2689, 4
  %v2692 = vshll.u32 %v2531, 16
  %v2694 = vrot.slane %v2692, 5
  %v2695 = vsel %vm591, %v2690, %v2694
  %v2697 = vshrl.u32 %v2532, 16
  %v2699 = vrot.slane %v2697, 4
  %v2700 = vshll.u32 %v2532, 16
  %v2702 = vrot.slane %v2700, 5
  %v2703 = vor.u32 %v2699, %v2702
  %v2704 = vrot.slane %v2703, 4
  %v2706 = vshll.u32 %v2533, 16
  %v2708 = vrot.slane %v2706, 5
  %v2709 = vsel %vm591, %v2704, %v2708
  %v2711 = vshrl.u32 %v2534, 16
  %v2713 = vrot.slane %v2711, 4
  %v2714 = vshll.u32 %v2534, 16
  %v2716 = vrot.slane %v2714, 5
  %v2717 = vor.u32 %v2713, %v2716
  %v2718 = vrot.slane %v2717, 4
  %v2720 = vshll.u32 %v2535, 16
  %v2722 = vrot.slane %v2720, 5
  %v2723 = vsel %vm591, %v2718, %v2722
  %v2725 = vshrl.u32 %v2536, 16
  %v2727 = vrot.slane %v2725, 4
  %v2728 = vshll.u32 %v2536, 16
  %v2730 = vrot.slane %v2728, 5
  %v2731 = vor.u32 %v2727, %v2730
  %v2732 = vrot.slane %v2731, 4
  %v2734 = vshll.u32 %v2537, 16
  %v2736 = vrot.slane %v2734, 5
  %v2737 = vsel %vm591, %v2732, %v2736
  %v2739 = vshrl.u32 %v2538, 16
  %v2741 = vrot.slane %v2739, 4
  %v2742 = vshll.u32 %v2538, 16
  %v2744 = vrot.slane %v2742, 5
  %v2745 = vor.u32 %v2741, %v2744
  %v2746 = vrot.slane %v2745, 4
  %v2748 = vshll.u32 %v2539, 16
  %v2750 = vrot.slane %v2748, 5
  %v2751 = vsel %vm591, %v2746, %v2750
  %v2753 = vshrl.u32 %v2540, 16
  %v2755 = vrot.slane %v2753, 4
  %v2756 = vshll.u32 %v2540, 16
  %v2758 = vrot.slane %v2756, 5
  %v2759 = vor.u32 %v2755, %v2758
  %v2760 = vrot.slane %v2759, 4
  %v2762 = vshll.u32 %v2541, 16
  %v2764 = vrot.slane %v2762, 5
  %v2765 = vsel %vm591, %v2760, %v2764
  %s2766 = scalar_lea.vmem %s1, 14
  %v2767 = vld [vmem:[%s2766] sm:$0x3]
  %v2768 = vunpack.c.l.b16 %v2555
  %v2769 = vunpack.c.l.b16 %v2569
  %v2770 = vunpack.c.l.b16 %v2583
  %v2771 = vunpack.c.l.b16 %v2597
  %v2772 = vunpack.c.l.b16 %v2611
  %v2773 = vunpack.c.l.b16 %v2625
  %v2774 = vunpack.c.l.b16 %v2639
  %v2775 = vunpack.c.l.b16 %v2653
  %v2776 = vunpack.c.l.b16 %v2667
  %v2777 = vunpack.c.l.b16 %v2681
  %v2778 = vunpack.c.l.b16 %v2695
  %v2779 = vunpack.c.l.b16 %v2709
  %v2780 = vunpack.c.l.b16 %v2723
  %v2781 = vunpack.c.l.b16 %v2737
  %v2782 = vunpack.c.l.b16 %v2751
  %v2783 = vunpack.c.l.b16 %v2765
  %v2784 = vpack.c.b16 %v2769, %v2768
  %v2785 = vpack.c.b16 %v2771, %v2770
  %v2786 = vpack.c.b16 %v2773, %v2772
  %v2787 = vpack.c.b16 %v2775, %v2774
  %v2788 = vpack.c.b16 %v2777, %v2776
  %v2789 = vpack.c.b16 %v2779, %v2778
  %v2790 = vpack.c.b16 %v2781, %v2780
  %v2791 = vpack.c.b16 %v2783, %v2782
  %v2793 = vsel %vm842, %v2784, 0
  %v2796 = vsel %vm842, %v2785, 0
  %v2799 = vsel %vm842, %v2786, 0
  %v2802 = vsel %vm842, %v2787, 0
  %v2805 = vsel %vm842, %v2788, 0
  %v2808 = vsel %vm842, %v2789, 0
  %v2811 = vsel %vm842, %v2790, 0
  %v2814 = vsel %vm842, %v2791, 0
  %v2817 = vsel %vm867, %v2767, 0
  %2819 = vmatprep.subr.bf16.mxu0 0
  %2820 = vmatpush1.bf16.msra.mxu0 0
  %2821 = vmatprep.subr.bf16.mxu0 0
  %2822 = vmatpush1.bf16.msra.mxu0 0
  %2823 = vmatprep.subr.bf16.mxu0 0
  %2824 = vmatpush1.bf16.msra.mxu0 0
  %2825 = vmatprep.subr.bf16.mxu0 0
  %2826 = vmatpush1.bf16.msra.mxu0 0
  %2827 = vmatprep.subr.bf16.mxu0 0
  %2828 = vmatpush1.bf16.msra.mxu0 0
  %2829 = vmatprep.subr.bf16.mxu0 0
  %2830 = vmatpush1.bf16.msra.mxu0 0
  %2831 = vmatprep.subr.bf16.mxu0 0
  %2832 = vmatpush1.bf16.msra.mxu0 0
  %2833 = vmatprep.subr.bf16.mxu0 0
  %2834 = vmatpush1.bf16.msra.mxu0 %v2817
  %2835 = vmatprep.subr.bf16.mxu0 0
  %2836 = vmatpush2.bf16.msra.mxu0 0
  %2837 = vmatprep.subr.bf16.mxu0 0
  %2838 = vmatpush2.bf16.msra.mxu0 0
  %2839 = vmatprep.subr.bf16.mxu0 0
  %2840 = vmatpush2.bf16.msra.mxu0 0
  %2841 = vmatprep.subr.bf16.mxu0 0
  %2842 = vmatpush2.bf16.msra.mxu0 0
  %2843 = vmatprep.subr.bf16.mxu0 0
  %2844 = vmatpush2.bf16.msra.mxu0 0
  %2845 = vmatprep.subr.bf16.mxu0 0
  %2846 = vmatpush2.bf16.msra.mxu0 0
  %2847 = vmatprep.subr.bf16.mxu0 0
  %2848 = vmatpush2.bf16.msra.mxu0 0
  %2849 = vmatprep.subr.bf16.mxu0 0
  %2850 = vmatpush2.bf16.msra.mxu0 0
  %2851 = vmatprep.mubr.bf16.mxu0 0
  %2852 = vmatmul.mubr.bf16.gmra.mxu0 %v2793
  %v2853 = vpop.f32.mrf.mxu0
  %v2854 = vadd.f32 0.0, %v2853
  %v2855 = vpop.f32.mrf.mxu0
  %v2856 = vpop.f32.mrf.mxu0
  %v2857 = vadd.f32 0.0, %v2856
  %v2858 = vpop.f32.mrf.mxu0
  %2859 = vmatprep.mubr.bf16.mxu0 0
  %2860 = vmatmul.mubr.bf16.gmra.mxu0 %v2796
  %v2861 = vpop.f32.mrf.mxu0
  %v2862 = vadd.f32 0.0, %v2861
  %v2863 = vpop.f32.mrf.mxu0
  %v2864 = vpop.f32.mrf.mxu0
  %v2865 = vadd.f32 0.0, %v2864
  %v2866 = vpop.f32.mrf.mxu0
  %2867 = vmatprep.mubr.bf16.mxu0 0
  %2868 = vmatmul.mubr.bf16.gmra.mxu0 %v2799
  %v2869 = vpop.f32.mrf.mxu0
  %v2870 = vadd.f32 0.0, %v2869
  %v2871 = vpop.f32.mrf.mxu0
  %v2872 = vpop.f32.mrf.mxu0
  %v2873 = vadd.f32 0.0, %v2872
  %v2874 = vpop.f32.mrf.mxu0
  %2875 = vmatprep.mubr.bf16.mxu0 0
  %2876 = vmatmul.mubr.bf16.gmra.mxu0 %v2802
  %v2877 = vpop.f32.mrf.mxu0
  %v2878 = vadd.f32 0.0, %v2877
  %v2879 = vpop.f32.mrf.mxu0
  %v2880 = vpop.f32.mrf.mxu0
  %v2881 = vadd.f32 0.0, %v2880
  %v2882 = vpop.f32.mrf.mxu0
  %2883 = vmatprep.mubr.bf16.mxu0 0
  %2884 = vmatmul.mubr.bf16.gmra.mxu0 %v2805
  %v2885 = vpop.f32.mrf.mxu0
  %v2886 = vadd.f32 0.0, %v2885
  %v2887 = vpop.f32.mrf.mxu0
  %v2888 = vpop.f32.mrf.mxu0
  %v2889 = vadd.f32 0.0, %v2888
  %v2890 = vpop.f32.mrf.mxu0
  %2891 = vmatprep.mubr.bf16.mxu0 0
  %2892 = vmatmul.mubr.bf16.gmra.mxu0 %v2808
  %v2893 = vpop.f32.mrf.mxu0
  %v2894 = vadd.f32 0.0, %v2893
  %v2895 = vpop.f32.mrf.mxu0
  %v2896 = vpop.f32.mrf.mxu0
  %v2897 = vadd.f32 0.0, %v2896
  %v2898 = vpop.f32.mrf.mxu0
  %2899 = vmatprep.mubr.bf16.mxu0 0
  %2900 = vmatmul.mubr.bf16.gmra.mxu0 %v2811
  %v2901 = vpop.f32.mrf.mxu0
  %v2902 = vadd.f32 0.0, %v2901
  %v2903 = vpop.f32.mrf.mxu0
  %v2904 = vpop.f32.mrf.mxu0
  %v2905 = vadd.f32 0.0, %v2904
  %v2906 = vpop.f32.mrf.mxu0
  %2907 = vmatprep.mubr.bf16.mxu0 0
  %2908 = vmatmul.mubr.bf16.gmra.mxu0 %v2814
  %v2909 = vpop.f32.mrf.mxu0
  %v2910 = vadd.f32 0.0, %v2909
  %v2911 = vpop.f32.mrf.mxu0
  %v2912 = vpop.f32.mrf.mxu0
  %v2913 = vadd.f32 0.0, %v2912
  %v2914 = vpop.f32.mrf.mxu0
  %2915 = vdwg.mxu0
  %v2916 = vadd.f32 %v2494, %v2854
  %v2917 = vadd.f32 %v2495, %v2857
  %v2918 = vadd.f32 %v2496, %v2862
  %v2919 = vadd.f32 %v2497, %v2865
  %v2920 = vadd.f32 %v2498, %v2870
  %v2921 = vadd.f32 %v2499, %v2873
  %v2922 = vadd.f32 %v2500, %v2878
  %v2923 = vadd.f32 %v2501, %v2881
  %v2924 = vadd.f32 %v2502, %v2886
  %v2925 = vadd.f32 %v2503, %v2889
  %v2926 = vadd.f32 %v2504, %v2894
  %v2927 = vadd.f32 %v2505, %v2897
  %v2928 = vadd.f32 %v2506, %v2902
  %v2929 = vadd.f32 %v2507, %v2905
  %v2930 = vadd.f32 %v2508, %v2910
  %v2931 = vadd.f32 %v2509, %v2913
  %v2932 = vld [vmem:[%s2311] sm:$0xe]
  %v2933 = vld [vmem:[%s2311 + $0x8] sm:$0xe]
  %v2934 = vld [vmem:[%s2311 + $0x10] sm:$0xe]
  %v2935 = vld [vmem:[%s2311 + $0x18] sm:$0xe]
  %v2936 = vld [vmem:[%s2311 + $0x20] sm:$0xe]
  %v2937 = vld [vmem:[%s2311 + $0x28] sm:$0xe]
  %v2938 = vld [vmem:[%s2311 + $0x30] sm:$0xe]
  %v2939 = vld [vmem:[%s2311 + $0x38] sm:$0xe]
  %v2940 = vld [vmem:[%s2311 + $0x50] sm:$0xe]
  %v2941 = vld [vmem:[%s2311 + $0x58] sm:$0xe]
  %v2942 = vld [vmem:[%s2311 + $0x60] sm:$0xe]
  %v2943 = vld [vmem:[%s2311 + $0x68] sm:$0xe]
  %v2944 = vld [vmem:[%s2311 + $0x70] sm:$0xe]
  %v2945 = vld [vmem:[%s2311 + $0x78] sm:$0xe]
  %v2946 = vld [vmem:[%s2311 + $0x80] sm:$0xe]
  %v2947 = vld [vmem:[%s2311 + $0x88] sm:$0xe]
  %v2980 = vrot.slane %v2932, 5
  %v2981 = vrot.slane %v2980, 4
  %v2982 = vrot.slane %v2511, 5
  %v2983 = vsel %vm1182, %v2981, %v2982
  %v2984 = vrot.slane %v2933, 5
  %v2985 = vrot.slane %v2984, 4
  %v2986 = vrot.slane %v2513, 5
  %v2987 = vsel %vm1182, %v2985, %v2986
  %v2988 = vrot.slane %v2934, 5
  %v2989 = vrot.slane %v2988, 4
  %v2990 = vrot.slane %v2515, 5
  %v2991 = vsel %vm1182, %v2989, %v2990
  %v2992 = vrot.slane %v2935, 5
  %v2993 = vrot.slane %v2992, 4
  %v2994 = vrot.slane %v2517, 5
  %v2995 = vsel %vm1182, %v2993, %v2994
  %v2996 = vrot.slane %v2936, 5
  %v2997 = vrot.slane %v2996, 4
  %v2998 = vrot.slane %v2519, 5
  %v2999 = vsel %vm1182, %v2997, %v2998
  %v3000 = vrot.slane %v2937, 5
  %v3001 = vrot.slane %v3000, 4
  %v3002 = vrot.slane %v2521, 5
  %v3003 = vsel %vm1182, %v3001, %v3002
  %v3004 = vrot.slane %v2938, 5
  %v3005 = vrot.slane %v3004, 4
  %v3006 = vrot.slane %v2523, 5
  %v3007 = vsel %vm1182, %v3005, %v3006
  %v3008 = vrot.slane %v2939, 5
  %v3009 = vrot.slane %v3008, 4
  %v3010 = vrot.slane %v2525, 5
  %v3011 = vsel %vm1182, %v3009, %v3010
  %v3012 = vrot.slane %v2940, 5
  %v3013 = vrot.slane %v3012, 4
  %v3014 = vrot.slane %v2527, 5
  %v3015 = vsel %vm1182, %v3013, %v3014
  %v3016 = vrot.slane %v2941, 5
  %v3017 = vrot.slane %v3016, 4
  %v3018 = vrot.slane %v2529, 5
  %v3019 = vsel %vm1182, %v3017, %v3018
  %v3020 = vrot.slane %v2942, 5
  %v3021 = vrot.slane %v3020, 4
  %v3022 = vrot.slane %v2531, 5
  %v3023 = vsel %vm1182, %v3021, %v3022
  %v3024 = vrot.slane %v2943, 5
  %v3025 = vrot.slane %v3024, 4
  %v3026 = vrot.slane %v2533, 5
  %v3027 = vsel %vm1182, %v3025, %v3026
  %v3028 = vrot.slane %v2944, 5
  %v3029 = vrot.slane %v3028, 4
  %v3030 = vrot.slane %v2535, 5
  %v3031 = vsel %vm1182, %v3029, %v3030
  %v3032 = vrot.slane %v2945, 5
  %v3033 = vrot.slane %v3032, 4
  %v3034 = vrot.slane %v2537, 5
  %v3035 = vsel %vm1182, %v3033, %v3034
  %v3036 = vrot.slane %v2946, 5
  %v3037 = vrot.slane %v3036, 4
  %v3038 = vrot.slane %v2539, 5
  %v3039 = vsel %vm1182, %v3037, %v3038
  %v3040 = vrot.slane %v2947, 5
  %v3041 = vrot.slane %v3040, 4
  %v3042 = vrot.slane %v2541, 5
  %v3043 = vsel %vm1182, %v3041, %v3042
  %s3044 = scalar_lea.vmem %s1, 16
  %v3045 = vld [vmem:[%s3044] sm:$0x3]
  %v3046 = vunpack.c.l.b16 %v2983
  %v3047 = vunpack.c.l.b16 %v2987
  %v3048 = vunpack.c.l.b16 %v2991
  %v3049 = vunpack.c.l.b16 %v2995
  %v3050 = vunpack.c.l.b16 %v2999
  %v3051 = vunpack.c.l.b16 %v3003
  %v3052 = vunpack.c.l.b16 %v3007
  %v3053 = vunpack.c.l.b16 %v3011
  %v3054 = vunpack.c.l.b16 %v3015
  %v3055 = vunpack.c.l.b16 %v3019
  %v3056 = vunpack.c.l.b16 %v3023
  %v3057 = vunpack.c.l.b16 %v3027
  %v3058 = vunpack.c.l.b16 %v3031
  %v3059 = vunpack.c.l.b16 %v3035
  %v3060 = vunpack.c.l.b16 %v3039
  %v3061 = vunpack.c.l.b16 %v3043
  %v3062 = vpack.c.b16 %v3047, %v3046
  %v3063 = vpack.c.b16 %v3049, %v3048
  %v3064 = vpack.c.b16 %v3051, %v3050
  %v3065 = vpack.c.b16 %v3053, %v3052
  %v3066 = vpack.c.b16 %v3055, %v3054
  %v3067 = vpack.c.b16 %v3057, %v3056
  %v3068 = vpack.c.b16 %v3059, %v3058
  %v3069 = vpack.c.b16 %v3061, %v3060
  %v3071 = vsel %vm842, %v3062, 0
  %v3074 = vsel %vm842, %v3063, 0
  %v3077 = vsel %vm842, %v3064, 0
  %v3080 = vsel %vm842, %v3065, 0
  %v3083 = vsel %vm842, %v3066, 0
  %v3086 = vsel %vm842, %v3067, 0
  %v3089 = vsel %vm842, %v3068, 0
  %v3092 = vsel %vm842, %v3069, 0
  %v3095 = vsel %vm867, %v3045, 0
  %3097 = vmatprep.subr.bf16.mxu0 0
  %3098 = vmatpush1.bf16.msra.mxu0 0
  %3099 = vmatprep.subr.bf16.mxu0 0
  %3100 = vmatpush1.bf16.msra.mxu0 0
  %3101 = vmatprep.subr.bf16.mxu0 0
  %3102 = vmatpush1.bf16.msra.mxu0 0
  %3103 = vmatprep.subr.bf16.mxu0 0
  %3104 = vmatpush1.bf16.msra.mxu0 0
  %3105 = vmatprep.subr.bf16.mxu0 0
  %3106 = vmatpush1.bf16.msra.mxu0 0
  %3107 = vmatprep.subr.bf16.mxu0 0
  %3108 = vmatpush1.bf16.msra.mxu0 0
  %3109 = vmatprep.subr.bf16.mxu0 0
  %3110 = vmatpush1.bf16.msra.mxu0 0
  %3111 = vmatprep.subr.bf16.mxu0 0
  %3112 = vmatpush1.bf16.msra.mxu0 %v3095
  %3113 = vmatprep.subr.bf16.mxu0 0
  %3114 = vmatpush2.bf16.msra.mxu0 0
  %3115 = vmatprep.subr.bf16.mxu0 0
  %3116 = vmatpush2.bf16.msra.mxu0 0
  %3117 = vmatprep.subr.bf16.mxu0 0
  %3118 = vmatpush2.bf16.msra.mxu0 0
  %3119 = vmatprep.subr.bf16.mxu0 0
  %3120 = vmatpush2.bf16.msra.mxu0 0
  %3121 = vmatprep.subr.bf16.mxu0 0
  %3122 = vmatpush2.bf16.msra.mxu0 0
  %3123 = vmatprep.subr.bf16.mxu0 0
  %3124 = vmatpush2.bf16.msra.mxu0 0
  %3125 = vmatprep.subr.bf16.mxu0 0
  %3126 = vmatpush2.bf16.msra.mxu0 0
  %3127 = vmatprep.subr.bf16.mxu0 0
  %3128 = vmatpush2.bf16.msra.mxu0 0
  %3129 = vmatprep.mubr.bf16.mxu0 0
  %3130 = vmatmul.mubr.bf16.gmra.mxu0 %v3071
  %v3131 = vpop.f32.mrf.mxu0
  %v3132 = vadd.f32 0.0, %v3131
  %v3133 = vpop.f32.mrf.mxu0
  %v3134 = vpop.f32.mrf.mxu0
  %v3135 = vadd.f32 0.0, %v3134
  %v3136 = vpop.f32.mrf.mxu0
  %3137 = vmatprep.mubr.bf16.mxu0 0
  %3138 = vmatmul.mubr.bf16.gmra.mxu0 %v3074
  %v3139 = vpop.f32.mrf.mxu0
  %v3140 = vadd.f32 0.0, %v3139
  %v3141 = vpop.f32.mrf.mxu0
  %v3142 = vpop.f32.mrf.mxu0
  %v3143 = vadd.f32 0.0, %v3142
  %v3144 = vpop.f32.mrf.mxu0
  %3145 = vmatprep.mubr.bf16.mxu0 0
  %3146 = vmatmul.mubr.bf16.gmra.mxu0 %v3077
  %v3147 = vpop.f32.mrf.mxu0
  %v3148 = vadd.f32 0.0, %v3147
  %v3149 = vpop.f32.mrf.mxu0
  %v3150 = vpop.f32.mrf.mxu0
  %v3151 = vadd.f32 0.0, %v3150
  %v3152 = vpop.f32.mrf.mxu0
  %3153 = vmatprep.mubr.bf16.mxu0 0
  %3154 = vmatmul.mubr.bf16.gmra.mxu0 %v3080
  %v3155 = vpop.f32.mrf.mxu0
  %v3156 = vadd.f32 0.0, %v3155
  %v3157 = vpop.f32.mrf.mxu0
  %v3158 = vpop.f32.mrf.mxu0
  %v3159 = vadd.f32 0.0, %v3158
  %v3160 = vpop.f32.mrf.mxu0
  %3161 = vmatprep.mubr.bf16.mxu0 0
  %3162 = vmatmul.mubr.bf16.gmra.mxu0 %v3083
  %v3163 = vpop.f32.mrf.mxu0
  %v3164 = vadd.f32 0.0, %v3163
  %v3165 = vpop.f32.mrf.mxu0
  %v3166 = vpop.f32.mrf.mxu0
  %v3167 = vadd.f32 0.0, %v3166
  %v3168 = vpop.f32.mrf.mxu0
  %3169 = vmatprep.mubr.bf16.mxu0 0
  %3170 = vmatmul.mubr.bf16.gmra.mxu0 %v3086
  %v3171 = vpop.f32.mrf.mxu0
  %v3172 = vadd.f32 0.0, %v3171
  %v3173 = vpop.f32.mrf.mxu0
  %v3174 = vpop.f32.mrf.mxu0
  %v3175 = vadd.f32 0.0, %v3174
  %v3176 = vpop.f32.mrf.mxu0
  %3177 = vmatprep.mubr.bf16.mxu0 0
  %3178 = vmatmul.mubr.bf16.gmra.mxu0 %v3089
  %v3179 = vpop.f32.mrf.mxu0
  %v3180 = vadd.f32 0.0, %v3179
  %v3181 = vpop.f32.mrf.mxu0
  %v3182 = vpop.f32.mrf.mxu0
  %v3183 = vadd.f32 0.0, %v3182
  %v3184 = vpop.f32.mrf.mxu0
  %3185 = vmatprep.mubr.bf16.mxu0 0
  %3186 = vmatmul.mubr.bf16.gmra.mxu0 %v3092
  %v3187 = vpop.f32.mrf.mxu0
  %v3188 = vadd.f32 0.0, %v3187
  %v3189 = vpop.f32.mrf.mxu0
  %v3190 = vpop.f32.mrf.mxu0
  %v3191 = vadd.f32 0.0, %v3190
  %v3192 = vpop.f32.mrf.mxu0
  %3193 = vdwg.mxu0
  %v3194 = vadd.f32 %v2916, %v3132
  %v3195 = vadd.f32 %v2917, %v3135
  %v3196 = vadd.f32 %v2918, %v3140
  %v3197 = vadd.f32 %v2919, %v3143
  %v3198 = vadd.f32 %v2920, %v3148
  %v3199 = vadd.f32 %v2921, %v3151
  %v3200 = vadd.f32 %v2922, %v3156
  %v3201 = vadd.f32 %v2923, %v3159
  %v3202 = vadd.f32 %v2924, %v3164
  %v3203 = vadd.f32 %v2925, %v3167
  %v3204 = vadd.f32 %v2926, %v3172
  %v3205 = vadd.f32 %v2927, %v3175
  %v3206 = vadd.f32 %v2928, %v3180
  %v3207 = vadd.f32 %v2929, %v3183
  %v3208 = vadd.f32 %v2930, %v3188
  %v3209 = vadd.f32 %v2931, %v3191
  %v3210 = vld [vmem:[%s2] sm:$0x1]
  %v3211 = vld [vmem:[%s3] sm:$0x1]
  %vm3212 = vcmask 64512
  %v3213 = vsel %vm3212, %v3194, 0.0
  %v3214 = vsel %vm3212, %v3195, 0.0
  %v3215 = vadd.f32 %v3213, %v3214
  %v3216 = vsel %vm3212, %v3196, 0.0
  %v3217 = vadd.f32 %v3215, %v3216
  %v3218 = vsel %vm3212, %v3197, 0.0
  %v3219 = vadd.f32 %v3217, %v3218
  %v3220 = vsel %vm3212, %v3198, 0.0
  %v3221 = vadd.f32 %v3219, %v3220
  %v3222 = vsel %vm3212, %v3199, 0.0
  %v3223 = vadd.f32 %v3221, %v3222
  %v3224 = vsel %vm3212, %v3200, 0.0
  %v3225 = vadd.f32 %v3223, %v3224
  %v3226 = vsel %vm3212, %v3201, 0.0
  %v3227 = vadd.f32 %v3225, %v3226
  %v3228 = vsel %vm3212, %v3202, 0.0
  %v3229 = vadd.f32 %v3227, %v3228
  %v3230 = vsel %vm3212, %v3203, 0.0
  %v3231 = vadd.f32 %v3229, %v3230
  %v3232 = vsel %vm3212, %v3204, 0.0
  %v3233 = vadd.f32 %v3231, %v3232
  %v3234 = vsel %vm3212, %v3205, 0.0
  %v3235 = vadd.f32 %v3233, %v3234
  %v3236 = vsel %vm3212, %v3206, 0.0
  %v3237 = vadd.f32 %v3235, %v3236
  %v3238 = vsel %vm3212, %v3207, 0.0
  %v3239 = vadd.f32 %v3237, %v3238
  %v3240 = vsel %vm3212, %v3208, 0.0
  %v3241 = vadd.f32 %v3239, %v3240
  %v3242 = vsel %vm3212, %v3209, 0.0
  %v3243 = vadd.f32 %v3241, %v3242
  %v3244 = vrot.slane %v3243, 4
  %v3245 = vadd.f32 %v3243, %v3244
  %v3246 = vrot.slane %v3245, 2
  %v3247 = vadd.f32 %v3245, %v3246
  %v3248 = vrot.slane %v3247, 1
  %v3249 = vadd.f32 %v3247, %v3248
  %v3250 = vmul.f32 %v3194, %v3194
  %v3251 = vmul.f32 %v3195, %v3195
  %v3252 = vmul.f32 %v3196, %v3196
  %v3253 = vmul.f32 %v3197, %v3197
  %v3254 = vmul.f32 %v3198, %v3198
  %v3255 = vmul.f32 %v3199, %v3199
  %v3256 = vmul.f32 %v3200, %v3200
  %v3257 = vmul.f32 %v3201, %v3201
  %v3258 = vmul.f32 %v3202, %v3202
  %v3259 = vmul.f32 %v3203, %v3203
  %v3260 = vmul.f32 %v3204, %v3204
  %v3261 = vmul.f32 %v3205, %v3205
  %v3262 = vmul.f32 %v3206, %v3206
  %v3263 = vmul.f32 %v3207, %v3207
  %v3264 = vmul.f32 %v3208, %v3208
  %v3265 = vmul.f32 %v3209, %v3209
  %v3266 = vsel %vm3212, %v3250, 0.0
  %v3267 = vsel %vm3212, %v3251, 0.0
  %v3268 = vadd.f32 %v3266, %v3267
  %v3269 = vsel %vm3212, %v3252, 0.0
  %v3270 = vadd.f32 %v3268, %v3269
  %v3271 = vsel %vm3212, %v3253, 0.0
  %v3272 = vadd.f32 %v3270, %v3271
  %v3273 = vsel %vm3212, %v3254, 0.0
  %v3274 = vadd.f32 %v3272, %v3273
  %v3275 = vsel %vm3212, %v3255, 0.0
  %v3276 = vadd.f32 %v3274, %v3275
  %v3277 = vsel %vm3212, %v3256, 0.0
  %v3278 = vadd.f32 %v3276, %v3277
  %v3279 = vsel %vm3212, %v3257, 0.0
  %v3280 = vadd.f32 %v3278, %v3279
  %v3281 = vsel %vm3212, %v3258, 0.0
  %v3282 = vadd.f32 %v3280, %v3281
  %v3283 = vsel %vm3212, %v3259, 0.0
  %v3284 = vadd.f32 %v3282, %v3283
  %v3285 = vsel %vm3212, %v3260, 0.0
  %v3286 = vadd.f32 %v3284, %v3285
  %v3287 = vsel %vm3212, %v3261, 0.0
  %v3288 = vadd.f32 %v3286, %v3287
  %v3289 = vsel %vm3212, %v3262, 0.0
  %v3290 = vadd.f32 %v3288, %v3289
  %v3291 = vsel %vm3212, %v3263, 0.0
  %v3292 = vadd.f32 %v3290, %v3291
  %v3293 = vsel %vm3212, %v3264, 0.0
  %v3294 = vadd.f32 %v3292, %v3293
  %v3295 = vsel %vm3212, %v3265, 0.0
  %v3296 = vadd.f32 %v3294, %v3295
  %v3297 = vrot.slane %v3296, 4
  %v3298 = vadd.f32 %v3296, %v3297
  %v3299 = vrot.slane %v3298, 2
  %v3300 = vadd.f32 %v3298, %v3299
  %v3301 = vrot.slane %v3300, 1
  %v3302 = vadd.f32 %v3300, %v3301
  %v3303 = vmul.f32 %v3249, 0.0078125
  %v3304 = vmul.f32 %v3302, 0.0078125
  %v3305 = vmul.f32 %v3303, %v3303
  %v3306 = vsub.f32 %v3304, %v3305
  %v3307 = vadd.f32 %v3306, 1e-05
  %v3308 = vrsqrt.pop %v3307
  %v3309 = vmul.f32 %v3210, %v3308
  %v3310 = vmul.f32 %v3303, %v3309
  %v3311 = vsub.f32 %v3211, %v3310
  %v3313 = vlaneseq
  %v3314 = vshrl.u32 %v3313, 7
  %v3315 = vsub.s32 0, %v3314
  %v3316 = vrot.slane %v3309, %v3315
  %v3318 = vmul.f32 %v3194, %v3316
  %v3319 = vmul.f32 %v3195, %v3316
  %v3320 = vmul.f32 %v3196, %v3316
  %v3321 = vmul.f32 %v3197, %v3316
  %v3322 = vmul.f32 %v3198, %v3316
  %v3323 = vmul.f32 %v3199, %v3316
  %v3324 = vmul.f32 %v3200, %v3316
  %v3325 = vmul.f32 %v3201, %v3316
  %v3326 = vmul.f32 %v3202, %v3316
  %v3327 = vmul.f32 %v3203, %v3316
  %v3328 = vmul.f32 %v3204, %v3316
  %v3329 = vmul.f32 %v3205, %v3316
  %v3330 = vmul.f32 %v3206, %v3316
  %v3331 = vmul.f32 %v3207, %v3316
  %v3332 = vmul.f32 %v3208, %v3316
  %v3333 = vmul.f32 %v3209, %v3316
  %v3335 = vlaneseq
  %v3336 = vshrl.u32 %v3335, 7
  %v3337 = vsub.s32 0, %v3336
  %v3338 = vrot.slane %v3311, %v3337
  %v3340 = vadd.f32 %v3318, %v3338
  %v3341 = vadd.f32 %v3319, %v3338
  %v3342 = vadd.f32 %v3320, %v3338
  %v3343 = vadd.f32 %v3321, %v3338
  %v3344 = vadd.f32 %v3322, %v3338
  %v3345 = vadd.f32 %v3323, %v3338
  %v3346 = vadd.f32 %v3324, %v3338
  %v3347 = vadd.f32 %v3325, %v3338
  %v3348 = vadd.f32 %v3326, %v3338
  %v3349 = vadd.f32 %v3327, %v3338
  %v3350 = vadd.f32 %v3328, %v3338
  %v3351 = vadd.f32 %v3329, %v3338
  %v3352 = vadd.f32 %v3330, %v3338
  %v3353 = vadd.f32 %v3331, %v3338
  %v3354 = vadd.f32 %v3332, %v3338
  %v3355 = vadd.f32 %v3333, %v3338
  %v3356 = vmax.f32 %v3340, 0.0
  %v3357 = vmax.f32 %v3341, 0.0
  %v3358 = vmax.f32 %v3342, 0.0
  %v3359 = vmax.f32 %v3343, 0.0
  %v3360 = vmax.f32 %v3344, 0.0
  %v3361 = vmax.f32 %v3345, 0.0
  %v3362 = vmax.f32 %v3346, 0.0
  %v3363 = vmax.f32 %v3347, 0.0
  %v3364 = vmax.f32 %v3348, 0.0
  %v3365 = vmax.f32 %v3349, 0.0
  %v3366 = vmax.f32 %v3350, 0.0
  %v3367 = vmax.f32 %v3351, 0.0
  %v3368 = vmax.f32 %v3352, 0.0
  %v3369 = vmax.f32 %v3353, 0.0
  %v3370 = vmax.f32 %v3354, 0.0
  %v3371 = vmax.f32 %v3355, 0.0
  %v3372 = vpack.c.bf16 %v3356, %v3356
  %v3373 = vpack.c.bf16 %v3357, %v3357
  %v3374 = vpack.c.bf16 %v3358, %v3358
  %v3375 = vpack.c.bf16 %v3359, %v3359
  %v3376 = vpack.c.bf16 %v3360, %v3360
  %v3377 = vpack.c.bf16 %v3361, %v3361
  %v3378 = vpack.c.bf16 %v3362, %v3362
  %v3379 = vpack.c.bf16 %v3363, %v3363
  %v3380 = vpack.c.bf16 %v3364, %v3364
  %v3381 = vpack.c.bf16 %v3365, %v3365
  %v3382 = vpack.c.bf16 %v3366, %v3366
  %v3383 = vpack.c.bf16 %v3367, %v3367
  %v3384 = vpack.c.bf16 %v3368, %v3368
  %v3385 = vpack.c.bf16 %v3369, %v3369
  %v3386 = vpack.c.bf16 %v3370, %v3370
  %v3387 = vpack.c.bf16 %v3371, %v3371
  %vm3388 = vcmask 60416
  %3389 = vst.msk [vmem:[#allocation3] sm:$0xf] %vm3388, 0
  %vm3390 = vcmask 57344
  %3391 = vst.msk [vmem:[#allocation3 + $0x4] sm:$0x1] %vm3390, 0
  %3392 = vst.msk [vmem:[#allocation3 + $0x50] sm:$0xf] %vm3388, 0
  %3393 = vst.msk [vmem:[#allocation3 + $0x54] sm:$0x1] %vm3390, 0
  %s3394 = scalar_lea.vmem [#allocation3], 72
  %3395 = vst.msk [vmem:[%s3394] sm:$0xf] %vm3388, 0
  %3396 = vst.msk [vmem:[%s3394 + $0x4] sm:$0x1] %vm3390, 0
  %3397 = vst.msk [vmem:[%s3394 + $0x50] sm:$0xf] %vm3388, 0
  %3398 = vst.msk [vmem:[%s3394 + $0x54] sm:$0x1] %vm3390, 0
  %vm3399 = vcmask 57344
  %vm3400 = vmand %vm3399, %vm173
  %v3401 = vld [vmem:[#allocation3] sm:$0x1]
  %v3402 = vsel %vm3400, 0, %v3401
  %3403 = vst [vmem:[#allocation3] sm:$0x1] %v3402
  %v3404 = vld [vmem:[#allocation3 + $0x8] sm:$0x1]
  %v3405 = vsel %vm3400, 0, %v3404
  %3406 = vst [vmem:[#allocation3 + $0x8] sm:$0x1] %v3405
  %v3407 = vld [vmem:[#allocation3 + $0x10] sm:$0x1]
  %v3408 = vsel %vm3400, 0, %v3407
  %3409 = vst [vmem:[#allocation3 + $0x10] sm:$0x1] %v3408
  %v3410 = vld [vmem:[#allocation3 + $0x18] sm:$0x1]
  %v3411 = vsel %vm3400, 0, %v3410
  %3412 = vst [vmem:[#allocation3 + $0x18] sm:$0x1] %v3411
  %v3413 = vld [vmem:[#allocation3 + $0x20] sm:$0x1]
  %v3414 = vsel %vm3400, 0, %v3413
  %3415 = vst [vmem:[#allocation3 + $0x20] sm:$0x1] %v3414
  %v3416 = vld [vmem:[#allocation3 + $0x28] sm:$0x1]
  %v3417 = vsel %vm3400, 0, %v3416
  %3418 = vst [vmem:[#allocation3 + $0x28] sm:$0x1] %v3417
  %v3419 = vld [vmem:[#allocation3 + $0x30] sm:$0x1]
  %v3420 = vsel %vm3400, 0, %v3419
  %3421 = vst [vmem:[#allocation3 + $0x30] sm:$0x1] %v3420
  %v3422 = vld [vmem:[#allocation3 + $0x38] sm:$0x1]
  %v3423 = vsel %vm3400, 0, %v3422
  %3424 = vst [vmem:[#allocation3 + $0x38] sm:$0x1] %v3423
  %v3425 = vld [vmem:[#allocation3 + $0x40] sm:$0x1]
  %v3426 = vsel %vm3400, 0, %v3425
  %3427 = vst [vmem:[#allocation3 + $0x40] sm:$0x1] %v3426
  %v3428 = vld [vmem:[#allocation3 + $0x48] sm:$0x1]
  %v3429 = vsel %vm3400, 0, %v3428
  %3430 = vst [vmem:[#allocation3 + $0x48] sm:$0x1] %v3429
  %v3431 = vld [vmem:[#allocation3 + $0x50] sm:$0x1]
  %v3432 = vsel %vm3400, 0, %v3431
  %3433 = vst [vmem:[#allocation3 + $0x50] sm:$0x1] %v3432
  %v3434 = vld [vmem:[#allocation3 + $0x58] sm:$0x1]
  %v3435 = vsel %vm3400, 0, %v3434
  %3436 = vst [vmem:[#allocation3 + $0x58] sm:$0x1] %v3435
  %v3437 = vld [vmem:[#allocation3 + $0x60] sm:$0x1]
  %v3438 = vsel %vm3400, 0, %v3437
  %3439 = vst [vmem:[#allocation3 + $0x60] sm:$0x1] %v3438
  %v3440 = vld [vmem:[#allocation3 + $0x68] sm:$0x1]
  %v3441 = vsel %vm3400, 0, %v3440
  %3442 = vst [vmem:[#allocation3 + $0x68] sm:$0x1] %v3441
  %v3443 = vld [vmem:[#allocation3 + $0x70] sm:$0x1]
  %v3444 = vsel %vm3400, 0, %v3443
  %3445 = vst [vmem:[#allocation3 + $0x70] sm:$0x1] %v3444
  %v3446 = vld [vmem:[#allocation3 + $0x78] sm:$0x1]
  %v3447 = vsel %vm3400, 0, %v3446
  %3448 = vst [vmem:[#allocation3 + $0x78] sm:$0x1] %v3447
  %v3449 = vld [vmem:[#allocation3 + $0x80] sm:$0x1]
  %v3450 = vsel %vm3400, 0, %v3449
  %3451 = vst [vmem:[#allocation3 + $0x80] sm:$0x1] %v3450
  %v3452 = vld [vmem:[#allocation3 + $0x88] sm:$0x1]
  %v3453 = vsel %vm3400, 0, %v3452
  %3454 = vst [vmem:[#allocation3 + $0x88] sm:$0x1] %v3453
  %v3455 = vld [vmem:[#allocation3 + $0x90] sm:$0x1]
  %v3456 = vsel %vm3400, 0, %v3455
  %3457 = vst [vmem:[#allocation3 + $0x90] sm:$0x1] %v3456
  %v3458 = vld [vmem:[#allocation3 + $0x98] sm:$0x1]
  %v3459 = vsel %vm3400, 0, %v3458
  %3460 = vst [vmem:[#allocation3 + $0x98] sm:$0x1] %v3459
  %vm3461 = vmand %vm3399, %vm235
  %v3462 = vld [vmem:[#allocation3 + $0x4] sm:$0x1]
  %v3463 = vsel %vm3461, 0, %v3462
  %3464 = vst [vmem:[#allocation3 + $0x4] sm:$0x1] %v3463
  %v3465 = vld [vmem:[#allocation3 + $0xc] sm:$0x1]
  %v3466 = vsel %vm3461, 0, %v3465
  %3467 = vst [vmem:[#allocation3 + $0xc] sm:$0x1] %v3466
  %v3468 = vld [vmem:[#allocation3 + $0x14] sm:$0x1]
  %v3469 = vsel %vm3461, 0, %v3468
  %3470 = vst [vmem:[#allocation3 + $0x14] sm:$0x1] %v3469
  %v3471 = vld [vmem:[#allocation3 + $0x1c] sm:$0x1]
  %v3472 = vsel %vm3461, 0, %v3471
  %3473 = vst [vmem:[#allocation3 + $0x1c] sm:$0x1] %v3472
  %v3474 = vld [vmem:[#allocation3 + $0x24] sm:$0x1]
  %v3475 = vsel %vm3461, 0, %v3474
  %3476 = vst [vmem:[#allocation3 + $0x24] sm:$0x1] %v3475
  %v3477 = vld [vmem:[#allocation3 + $0x2c] sm:$0x1]
  %v3478 = vsel %vm3461, 0, %v3477
  %3479 = vst [vmem:[#allocation3 + $0x2c] sm:$0x1] %v3478
  %v3480 = vld [vmem:[#allocation3 + $0x34] sm:$0x1]
  %v3481 = vsel %vm3461, 0, %v3480
  %3482 = vst [vmem:[#allocation3 + $0x34] sm:$0x1] %v3481
  %v3483 = vld [vmem:[#allocation3 + $0x3c] sm:$0x1]
  %v3484 = vsel %vm3461, 0, %v3483
  %3485 = vst [vmem:[#allocation3 + $0x3c] sm:$0x1] %v3484
  %v3486 = vld [vmem:[#allocation3 + $0x44] sm:$0x1]
  %v3487 = vsel %vm3461, 0, %v3486
  %3488 = vst [vmem:[#allocation3 + $0x44] sm:$0x1] %v3487
  %v3489 = vld [vmem:[#allocation3 + $0x4c] sm:$0x1]
  %v3490 = vsel %vm3461, 0, %v3489
  %3491 = vst [vmem:[#allocation3 + $0x4c] sm:$0x1] %v3490
  %v3492 = vld [vmem:[#allocation3 + $0x54] sm:$0x1]
  %v3493 = vsel %vm3461, 0, %v3492
  %3494 = vst [vmem:[#allocation3 + $0x54] sm:$0x1] %v3493
  %v3495 = vld [vmem:[#allocation3 + $0x5c] sm:$0x1]
  %v3496 = vsel %vm3461, 0, %v3495
  %3497 = vst [vmem:[#allocation3 + $0x5c] sm:$0x1] %v3496
  %v3498 = vld [vmem:[#allocation3 + $0x64] sm:$0x1]
  %v3499 = vsel %vm3461, 0, %v3498
  %3500 = vst [vmem:[#allocation3 + $0x64] sm:$0x1] %v3499
  %v3501 = vld [vmem:[#allocation3 + $0x6c] sm:$0x1]
  %v3502 = vsel %vm3461, 0, %v3501
  %3503 = vst [vmem:[#allocation3 + $0x6c] sm:$0x1] %v3502
  %v3504 = vld [vmem:[#allocation3 + $0x74] sm:$0x1]
  %v3505 = vsel %vm3461, 0, %v3504
  %3506 = vst [vmem:[#allocation3 + $0x74] sm:$0x1] %v3505
  %v3507 = vld [vmem:[#allocation3 + $0x7c] sm:$0x1]
  %v3508 = vsel %vm3461, 0, %v3507
  %3509 = vst [vmem:[#allocation3 + $0x7c] sm:$0x1] %v3508
  %v3510 = vld [vmem:[#allocation3 + $0x84] sm:$0x1]
  %v3511 = vsel %vm3461, 0, %v3510
  %3512 = vst [vmem:[#allocation3 + $0x84] sm:$0x1] %v3511
  %v3513 = vld [vmem:[#allocation3 + $0x8c] sm:$0x1]
  %v3514 = vsel %vm3461, 0, %v3513
  %3515 = vst [vmem:[#allocation3 + $0x8c] sm:$0x1] %v3514
  %v3516 = vld [vmem:[#allocation3 + $0x94] sm:$0x1]
  %v3517 = vsel %vm3461, 0, %v3516
  %3518 = vst [vmem:[#allocation3 + $0x94] sm:$0x1] %v3517
  %v3519 = vld [vmem:[#allocation3 + $0x9c] sm:$0x1]
  %v3520 = vsel %vm3461, 0, %v3519
  %3521 = vst [vmem:[#allocation3 + $0x9c] sm:$0x1] %v3520
  %v3538 = vunpack.c.l.b16 %v3372
  %v3539 = vunpack.c.l.b16 %v3373
  %v3540 = vunpack.c.l.b16 %v3374
  %v3541 = vunpack.c.l.b16 %v3375
  %v3542 = vunpack.c.l.b16 %v3376
  %v3543 = vunpack.c.l.b16 %v3377
  %v3544 = vunpack.c.l.b16 %v3378
  %v3545 = vunpack.c.l.b16 %v3379
  %v3546 = vunpack.c.l.b16 %v3380
  %v3547 = vunpack.c.l.b16 %v3381
  %v3548 = vunpack.c.l.b16 %v3382
  %v3549 = vunpack.c.l.b16 %v3383
  %v3550 = vunpack.c.l.b16 %v3384
  %v3551 = vunpack.c.l.b16 %v3385
  %v3552 = vunpack.c.l.b16 %v3386
  %v3553 = vunpack.c.l.b16 %v3387
  %v3554 = vpack.c.b16 %v3538, %v3538
  %v3555 = vpack.c.b16 %v3539, %v3539
  %v3556 = vpack.c.b16 %v3540, %v3540
  %v3557 = vpack.c.b16 %v3541, %v3541
  %v3558 = vpack.c.b16 %v3542, %v3542
  %v3559 = vpack.c.b16 %v3543, %v3543
  %v3560 = vpack.c.b16 %v3544, %v3544
  %v3561 = vpack.c.b16 %v3545, %v3545
  %v3562 = vpack.c.b16 %v3546, %v3546
  %v3563 = vpack.c.b16 %v3547, %v3547
  %v3564 = vpack.c.b16 %v3548, %v3548
  %v3565 = vpack.c.b16 %v3549, %v3549
  %v3566 = vpack.c.b16 %v3550, %v3550
  %v3567 = vpack.c.b16 %v3551, %v3551
  %v3568 = vpack.c.b16 %v3552, %v3552
  %v3569 = vpack.c.b16 %v3553, %v3553
  %v3571 = vshrl.u32 %v3554, 16
  %v3573 = vrot.slane %v3571, 7
  %v3574 = vshll.u32 %v3554, 16
  %v3576 = vor.u32 %v3573, %v3574
  %v3577 = vrot.slane %v3573, 4
  %v3579 = vshrl.u32 %v3555, 16
  %v3581 = vrot.slane %v3579, 7
  %v3582 = vshll.u32 %v3555, 16
  %v3584 = vor.u32 %v3581, %v3582
  %v3585 = vrot.slane %v3581, 4
  %v3587 = vshrl.u32 %v3556, 16
  %v3589 = vrot.slane %v3587, 7
  %v3590 = vshll.u32 %v3556, 16
  %v3592 = vor.u32 %v3589, %v3590
  %v3593 = vrot.slane %v3589, 4
  %v3595 = vshrl.u32 %v3557, 16
  %v3597 = vrot.slane %v3595, 7
  %v3598 = vshll.u32 %v3557, 16
  %v3600 = vor.u32 %v3597, %v3598
  %v3601 = vrot.slane %v3597, 4
  %v3603 = vshrl.u32 %v3558, 16
  %v3605 = vrot.slane %v3603, 7
  %v3606 = vshll.u32 %v3558, 16
  %v3608 = vor.u32 %v3605, %v3606
  %v3609 = vrot.slane %v3605, 4
  %v3611 = vshrl.u32 %v3559, 16
  %v3613 = vrot.slane %v3611, 7
  %v3614 = vshll.u32 %v3559, 16
  %v3616 = vor.u32 %v3613, %v3614
  %v3617 = vrot.slane %v3613, 4
  %v3619 = vshrl.u32 %v3560, 16
  %v3621 = vrot.slane %v3619, 7
  %v3622 = vshll.u32 %v3560, 16
  %v3624 = vor.u32 %v3621, %v3622
  %v3625 = vrot.slane %v3621, 4
  %v3627 = vshrl.u32 %v3561, 16
  %v3629 = vrot.slane %v3627, 7
  %v3630 = vshll.u32 %v3561, 16
  %v3632 = vor.u32 %v3629, %v3630
  %v3633 = vrot.slane %v3629, 4
  %v3635 = vshrl.u32 %v3562, 16
  %v3637 = vrot.slane %v3635, 7
  %v3638 = vshll.u32 %v3562, 16
  %v3640 = vor.u32 %v3637, %v3638
  %v3641 = vrot.slane %v3637, 4
  %v3643 = vshrl.u32 %v3563, 16
  %v3645 = vrot.slane %v3643, 7
  %v3646 = vshll.u32 %v3563, 16
  %v3648 = vor.u32 %v3645, %v3646
  %v3649 = vrot.slane %v3645, 4
  %v3651 = vshrl.u32 %v3564, 16
  %v3653 = vrot.slane %v3651, 7
  %v3654 = vshll.u32 %v3564, 16
  %v3656 = vor.u32 %v3653, %v3654
  %v3657 = vrot.slane %v3653, 4
  %v3659 = vshrl.u32 %v3565, 16
  %v3661 = vrot.slane %v3659, 7
  %v3662 = vshll.u32 %v3565, 16
  %v3664 = vor.u32 %v3661, %v3662
  %v3665 = vrot.slane %v3661, 4
  %v3667 = vshrl.u32 %v3566, 16
  %v3669 = vrot.slane %v3667, 7
  %v3670 = vshll.u32 %v3566, 16
  %v3672 = vor.u32 %v3669, %v3670
  %v3673 = vrot.slane %v3669, 4
  %v3675 = vshrl.u32 %v3567, 16
  %v3677 = vrot.slane %v3675, 7
  %v3678 = vshll.u32 %v3567, 16
  %v3680 = vor.u32 %v3677, %v3678
  %v3681 = vrot.slane %v3677, 4
  %v3683 = vshrl.u32 %v3568, 16
  %v3685 = vrot.slane %v3683, 7
  %v3686 = vshll.u32 %v3568, 16
  %v3688 = vor.u32 %v3685, %v3686
  %v3689 = vrot.slane %v3685, 4
  %v3691 = vshrl.u32 %v3569, 16
  %v3693 = vrot.slane %v3691, 7
  %v3694 = vshll.u32 %v3569, 16
  %v3696 = vor.u32 %v3693, %v3694
  %v3697 = vrot.slane %v3693, 4
  %s3730 = scalar_lea.vmem [#allocation3], 8
  %vm3731 = vcmask 60416
  %vm3732 = vmand %vm3731, %vm235
  %v3733 = vld [vmem:[%s3730] sm:$0xf]
  %v3734 = vsel %vm3732, %v3576, %v3733
  %3735 = vst [vmem:[%s3730] sm:$0xf] %v3734
  %v3736 = vld [vmem:[%s3730 + $0x4] sm:$0x1]
  %v3737 = vsel %vm3400, %v3577, %v3736
  %3738 = vst [vmem:[%s3730 + $0x4] sm:$0x1] %v3737
  %v3739 = vld [vmem:[%s3730 + $0x8] sm:$0xf]
  %v3740 = vsel %vm3732, %v3584, %v3739
  %3741 = vst [vmem:[%s3730 + $0x8] sm:$0xf] %v3740
  %v3742 = vld [vmem:[%s3730 + $0xc] sm:$0x1]
  %v3743 = vsel %vm3400, %v3585, %v3742
  %3744 = vst [vmem:[%s3730 + $0xc] sm:$0x1] %v3743
  %v3745 = vld [vmem:[%s3730 + $0x10] sm:$0xf]
  %v3746 = vsel %vm3732, %v3592, %v3745
  %3747 = vst [vmem:[%s3730 + $0x10] sm:$0xf] %v3746
  %v3748 = vld [vmem:[%s3730 + $0x14] sm:$0x1]
  %v3749 = vsel %vm3400, %v3593, %v3748
  %3750 = vst [vmem:[%s3730 + $0x14] sm:$0x1] %v3749
  %v3751 = vld [vmem:[%s3730 + $0x18] sm:$0xf]
  %v3752 = vsel %vm3732, %v3600, %v3751
  %3753 = vst [vmem:[%s3730 + $0x18] sm:$0xf] %v3752
  %v3754 = vld [vmem:[%s3730 + $0x1c] sm:$0x1]
  %v3755 = vsel %vm3400, %v3601, %v3754
  %3756 = vst [vmem:[%s3730 + $0x1c] sm:$0x1] %v3755
  %v3757 = vld [vmem:[%s3730 + $0x20] sm:$0xf]
  %v3758 = vsel %vm3732, %v3608, %v3757
  %3759 = vst [vmem:[%s3730 + $0x20] sm:$0xf] %v3758
  %v3760 = vld [vmem:[%s3730 + $0x24] sm:$0x1]
  %v3761 = vsel %vm3400, %v3609, %v3760
  %3762 = vst [vmem:[%s3730 + $0x24] sm:$0x1] %v3761
  %v3763 = vld [vmem:[%s3730 + $0x28] sm:$0xf]
  %v3764 = vsel %vm3732, %v3616, %v3763
  %3765 = vst [vmem:[%s3730 + $0x28] sm:$0xf] %v3764
  %v3766 = vld [vmem:[%s3730 + $0x2c] sm:$0x1]
  %v3767 = vsel %vm3400, %v3617, %v3766
  %3768 = vst [vmem:[%s3730 + $0x2c] sm:$0x1] %v3767
  %v3769 = vld [vmem:[%s3730 + $0x30] sm:$0xf]
  %v3770 = vsel %vm3732, %v3624, %v3769
  %3771 = vst [vmem:[%s3730 + $0x30] sm:$0xf] %v3770
  %v3772 = vld [vmem:[%s3730 + $0x34] sm:$0x1]
  %v3773 = vsel %vm3400, %v3625, %v3772
  %3774 = vst [vmem:[%s3730 + $0x34] sm:$0x1] %v3773
  %v3775 = vld [vmem:[%s3730 + $0x38] sm:$0xf]
  %v3776 = vsel %vm3732, %v3632, %v3775
  %3777 = vst [vmem:[%s3730 + $0x38] sm:$0xf] %v3776
  %v3778 = vld [vmem:[%s3730 + $0x3c] sm:$0x1]
  %v3779 = vsel %vm3400, %v3633, %v3778
  %3780 = vst [vmem:[%s3730 + $0x3c] sm:$0x1] %v3779
  %v3781 = vld [vmem:[%s3730 + $0x50] sm:$0xf]
  %v3782 = vsel %vm3732, %v3640, %v3781
  %3783 = vst [vmem:[%s3730 + $0x50] sm:$0xf] %v3782
  %v3784 = vld [vmem:[%s3730 + $0x54] sm:$0x1]
  %v3785 = vsel %vm3400, %v3641, %v3784
  %3786 = vst [vmem:[%s3730 + $0x54] sm:$0x1] %v3785
  %v3787 = vld [vmem:[%s3730 + $0x58] sm:$0xf]
  %v3788 = vsel %vm3732, %v3648, %v3787
  %3789 = vst [vmem:[%s3730 + $0x58] sm:$0xf] %v3788
  %v3790 = vld [vmem:[%s3730 + $0x5c] sm:$0x1]
  %v3791 = vsel %vm3400, %v3649, %v3790
  %3792 = vst [vmem:[%s3730 + $0x5c] sm:$0x1] %v3791
  %v3793 = vld [vmem:[%s3730 + $0x60] sm:$0xf]
  %v3794 = vsel %vm3732, %v3656, %v3793
  %3795 = vst [vmem:[%s3730 + $0x60] sm:$0xf] %v3794
  %v3796 = vld [vmem:[%s3730 + $0x64] sm:$0x1]
  %v3797 = vsel %vm3400, %v3657, %v3796
  %3798 = vst [vmem:[%s3730 + $0x64] sm:$0x1] %v3797
  %v3799 = vld [vmem:[%s3730 + $0x68] sm:$0xf]
  %v3800 = vsel %vm3732, %v3664, %v3799
  %3801 = vst [vmem:[%s3730 + $0x68] sm:$0xf] %v3800
  %v3802 = vld [vmem:[%s3730 + $0x6c] sm:$0x1]
  %v3803 = vsel %vm3400, %v3665, %v3802
  %3804 = vst [vmem:[%s3730 + $0x6c] sm:$0x1] %v3803
  %v3805 = vld [vmem:[%s3730 + $0x70] sm:$0xf]
  %v3806 = vsel %vm3732, %v3672, %v3805
  %3807 = vst [vmem:[%s3730 + $0x70] sm:$0xf] %v3806
  %v3808 = vld [vmem:[%s3730 + $0x74] sm:$0x1]
  %v3809 = vsel %vm3400, %v3673, %v3808
  %3810 = vst [vmem:[%s3730 + $0x74] sm:$0x1] %v3809
  %v3811 = vld [vmem:[%s3730 + $0x78] sm:$0xf]
  %v3812 = vsel %vm3732, %v3680, %v3811
  %3813 = vst [vmem:[%s3730 + $0x78] sm:$0xf] %v3812
  %v3814 = vld [vmem:[%s3730 + $0x7c] sm:$0x1]
  %v3815 = vsel %vm3400, %v3681, %v3814
  %3816 = vst [vmem:[%s3730 + $0x7c] sm:$0x1] %v3815
  %v3817 = vld [vmem:[%s3730 + $0x80] sm:$0xf]
  %v3818 = vsel %vm3732, %v3688, %v3817
  %3819 = vst [vmem:[%s3730 + $0x80] sm:$0xf] %v3818
  %v3820 = vld [vmem:[%s3730 + $0x84] sm:$0x1]
  %v3821 = vsel %vm3400, %v3689, %v3820
  %3822 = vst [vmem:[%s3730 + $0x84] sm:$0x1] %v3821
  %v3823 = vld [vmem:[%s3730 + $0x88] sm:$0xf]
  %v3824 = vsel %vm3732, %v3696, %v3823
  %3825 = vst [vmem:[%s3730 + $0x88] sm:$0xf] %v3824
  %v3826 = vld [vmem:[%s3730 + $0x8c] sm:$0x1]
  %v3827 = vsel %vm3400, %v3697, %v3826
  %3828 = vst [vmem:[%s3730 + $0x8c] sm:$0x1] %v3827
  %v3829 = vld [vmem:[#allocation3] sm:$0xf]
  %v3830 = vld [vmem:[#allocation3 + $0x8] sm:$0xf]
  %v3831 = vld [vmem:[#allocation3 + $0x10] sm:$0xf]
  %v3832 = vld [vmem:[#allocation3 + $0x18] sm:$0xf]
  %v3833 = vld [vmem:[#allocation3 + $0x20] sm:$0xf]
  %v3834 = vld [vmem:[#allocation3 + $0x28] sm:$0xf]
  %v3835 = vld [vmem:[#allocation3 + $0x30] sm:$0xf]
  %v3836 = vld [vmem:[#allocation3 + $0x38] sm:$0xf]
  %v3837 = vld [vmem:[#allocation3 + $0x50] sm:$0xf]
  %v3838 = vld [vmem:[#allocation3 + $0x58] sm:$0xf]
  %v3839 = vld [vmem:[#allocation3 + $0x60] sm:$0xf]
  %v3840 = vld [vmem:[#allocation3 + $0x68] sm:$0xf]
  %v3841 = vld [vmem:[#allocation3 + $0x70] sm:$0xf]
  %v3842 = vld [vmem:[#allocation3 + $0x78] sm:$0xf]
  %v3843 = vld [vmem:[#allocation3 + $0x80] sm:$0xf]
  %v3844 = vld [vmem:[#allocation3 + $0x88] sm:$0xf]
  %v3845 = vld [vmem:[%s4] sm:$0xf]
  %v3846 = vld [vmem:[#allocation3 + $0x4] sm:$0x1]
  %v3847 = vld [vmem:[#allocation3 + $0xc] sm:$0x1]
  %v3848 = vld [vmem:[#allocation3 + $0x14] sm:$0x1]
  %v3849 = vld [vmem:[#allocation3 + $0x1c] sm:$0x1]
  %v3850 = vld [vmem:[#allocation3 + $0x24] sm:$0x1]
  %v3851 = vld [vmem:[#allocation3 + $0x2c] sm:$0x1]
  %v3852 = vld [vmem:[#allocation3 + $0x34] sm:$0x1]
  %v3853 = vld [vmem:[#allocation3 + $0x3c] sm:$0x1]
  %v3854 = vld [vmem:[#allocation3 + $0x54] sm:$0x1]
  %v3855 = vld [vmem:[#allocation3 + $0x5c] sm:$0x1]
  %v3856 = vld [vmem:[#allocation3 + $0x64] sm:$0x1]
  %v3857 = vld [vmem:[#allocation3 + $0x6c] sm:$0x1]
  %v3858 = vld [vmem:[#allocation3 + $0x74] sm:$0x1]
  %v3859 = vld [vmem:[#allocation3 + $0x7c] sm:$0x1]
  %v3860 = vld [vmem:[#allocation3 + $0x84] sm:$0x1]
  %v3861 = vld [vmem:[#allocation3 + $0x8c] sm:$0x1]
  %v3863 = vshrl.u32 %v3829, 16
  %v3865 = vrot.slane %v3863, 4
  %v3866 = vshll.u32 %v3829, 16
  %v3868 = vrot.slane %v3866, 5
  %v3869 = vor.u32 %v3865, %v3868
  %v3870 = vrot.slane %v3869, 4
  %v3872 = vshll.u32 %v3846, 16
  %v3874 = vrot.slane %v3872, 5
  %v3875 = vsel %vm591, %v3870, %v3874
  %v3877 = vshrl.u32 %v3830, 16
  %v3879 = vrot.slane %v3877, 4
  %v3880 = vshll.u32 %v3830, 16
  %v3882 = vrot.slane %v3880, 5
  %v3883 = vor.u32 %v3879, %v3882
  %v3884 = vrot.slane %v3883, 4
  %v3886 = vshll.u32 %v3847, 16
  %v3888 = vrot.slane %v3886, 5
  %v3889 = vsel %vm591, %v3884, %v3888
  %v3891 = vshrl.u32 %v3831, 16
  %v3893 = vrot.slane %v3891, 4
  %v3894 = vshll.u32 %v3831, 16
  %v3896 = vrot.slane %v3894, 5
  %v3897 = vor.u32 %v3893, %v3896
  %v3898 = vrot.slane %v3897, 4
  %v3900 = vshll.u32 %v3848, 16
  %v3902 = vrot.slane %v3900, 5
  %v3903 = vsel %vm591, %v3898, %v3902
  %v3905 = vshrl.u32 %v3832, 16
  %v3907 = vrot.slane %v3905, 4
  %v3908 = vshll.u32 %v3832, 16
  %v3910 = vrot.slane %v3908, 5
  %v3911 = vor.u32 %v3907, %v3910
  %v3912 = vrot.slane %v3911, 4
  %v3914 = vshll.u32 %v3849, 16
  %v3916 = vrot.slane %v3914, 5
  %v3917 = vsel %vm591, %v3912, %v3916
  %v3919 = vshrl.u32 %v3833, 16
  %v3921 = vrot.slane %v3919, 4
  %v3922 = vshll.u32 %v3833, 16
  %v3924 = vrot.slane %v3922, 5
  %v3925 = vor.u32 %v3921, %v3924
  %v3926 = vrot.slane %v3925, 4
  %v3928 = vshll.u32 %v3850, 16
  %v3930 = vrot.slane %v3928, 5
  %v3931 = vsel %vm591, %v3926, %v3930
  %v3933 = vshrl.u32 %v3834, 16
  %v3935 = vrot.slane %v3933, 4
  %v3936 = vshll.u32 %v3834, 16
  %v3938 = vrot.slane %v3936, 5
  %v3939 = vor.u32 %v3935, %v3938
  %v3940 = vrot.slane %v3939, 4
  %v3942 = vshll.u32 %v3851, 16
  %v3944 = vrot.slane %v3942, 5
  %v3945 = vsel %vm591, %v3940, %v3944
  %v3947 = vshrl.u32 %v3835, 16
  %v3949 = vrot.slane %v3947, 4
  %v3950 = vshll.u32 %v3835, 16
  %v3952 = vrot.slane %v3950, 5
  %v3953 = vor.u32 %v3949, %v3952
  %v3954 = vrot.slane %v3953, 4
  %v3956 = vshll.u32 %v3852, 16
  %v3958 = vrot.slane %v3956, 5
  %v3959 = vsel %vm591, %v3954, %v3958
  %v3961 = vshrl.u32 %v3836, 16
  %v3963 = vrot.slane %v3961, 4
  %v3964 = vshll.u32 %v3836, 16
  %v3966 = vrot.slane %v3964, 5
  %v3967 = vor.u32 %v3963, %v3966
  %v3968 = vrot.slane %v3967, 4
  %v3970 = vshll.u32 %v3853, 16
  %v3972 = vrot.slane %v3970, 5
  %v3973 = vsel %vm591, %v3968, %v3972
  %v3975 = vshrl.u32 %v3837, 16
  %v3977 = vrot.slane %v3975, 4
  %v3978 = vshll.u32 %v3837, 16
  %v3980 = vrot.slane %v3978, 5
  %v3981 = vor.u32 %v3977, %v3980
  %v3982 = vrot.slane %v3981, 4
  %v3984 = vshll.u32 %v3854, 16
  %v3986 = vrot.slane %v3984, 5
  %v3987 = vsel %vm591, %v3982, %v3986
  %v3989 = vshrl.u32 %v3838, 16
  %v3991 = vrot.slane %v3989, 4
  %v3992 = vshll.u32 %v3838, 16
  %v3994 = vrot.slane %v3992, 5
  %v3995 = vor.u32 %v3991, %v3994
  %v3996 = vrot.slane %v3995, 4
  %v3998 = vshll.u32 %v3855, 16
  %v4000 = vrot.slane %v3998, 5
  %v4001 = vsel %vm591, %v3996, %v4000
  %v4003 = vshrl.u32 %v3839, 16
  %v4005 = vrot.slane %v4003, 4
  %v4006 = vshll.u32 %v3839, 16
  %v4008 = vrot.slane %v4006, 5
  %v4009 = vor.u32 %v4005, %v4008
  %v4010 = vrot.slane %v4009, 4
  %v4012 = vshll.u32 %v3856, 16
  %v4014 = vrot.slane %v4012, 5
  %v4015 = vsel %vm591, %v4010, %v4014
  %v4017 = vshrl.u32 %v3840, 16
  %v4019 = vrot.slane %v4017, 4
  %v4020 = vshll.u32 %v3840, 16
  %v4022 = vrot.slane %v4020, 5
  %v4023 = vor.u32 %v4019, %v4022
  %v4024 = vrot.slane %v4023, 4
  %v4026 = vshll.u32 %v3857, 16
  %v4028 = vrot.slane %v4026, 5
  %v4029 = vsel %vm591, %v4024, %v4028
  %v4031 = vshrl.u32 %v3841, 16
  %v4033 = vrot.slane %v4031, 4
  %v4034 = vshll.u32 %v3841, 16
  %v4036 = vrot.slane %v4034, 5
  %v4037 = vor.u32 %v4033, %v4036
  %v4038 = vrot.slane %v4037, 4
  %v4040 = vshll.u32 %v3858, 16
  %v4042 = vrot.slane %v4040, 5
  %v4043 = vsel %vm591, %v4038, %v4042
  %v4045 = vshrl.u32 %v3842, 16
  %v4047 = vrot.slane %v4045, 4
  %v4048 = vshll.u32 %v3842, 16
  %v4050 = vrot.slane %v4048, 5
  %v4051 = vor.u32 %v4047, %v4050
  %v4052 = vrot.slane %v4051, 4
  %v4054 = vshll.u32 %v3859, 16
  %v4056 = vrot.slane %v4054, 5
  %v4057 = vsel %vm591, %v4052, %v4056
  %v4059 = vshrl.u32 %v3843, 16
  %v4061 = vrot.slane %v4059, 4
  %v4062 = vshll.u32 %v3843, 16
  %v4064 = vrot.slane %v4062, 5
  %v4065 = vor.u32 %v4061, %v4064
  %v4066 = vrot.slane %v4065, 4
  %v4068 = vshll.u32 %v3860, 16
  %v4070 = vrot.slane %v4068, 5
  %v4071 = vsel %vm591, %v4066, %v4070
  %v4073 = vshrl.u32 %v3844, 16
  %v4075 = vrot.slane %v4073, 4
  %v4076 = vshll.u32 %v3844, 16
  %v4078 = vrot.slane %v4076, 5
  %v4079 = vor.u32 %v4075, %v4078
  %v4080 = vrot.slane %v4079, 4
  %v4082 = vshll.u32 %v3861, 16
  %v4084 = vrot.slane %v4082, 5
  %v4085 = vsel %vm591, %v4080, %v4084
  %s4086 = scalar_lea.vmem %s4, 4
  %v4087 = vld [vmem:[%s4086] sm:$0xf]
  %v4088 = vunpack.c.l.b16 %v3875
  %v4089 = vunpack.c.l.b16 %v3889
  %v4090 = vunpack.c.l.b16 %v3903
  %v4091 = vunpack.c.l.b16 %v3917
  %v4092 = vunpack.c.l.b16 %v3931
  %v4093 = vunpack.c.l.b16 %v3945
  %v4094 = vunpack.c.l.b16 %v3959
  %v4095 = vunpack.c.l.b16 %v3973
  %v4096 = vunpack.c.l.b16 %v3987
  %v4097 = vunpack.c.l.b16 %v4001
  %v4098 = vunpack.c.l.b16 %v4015
  %v4099 = vunpack.c.l.b16 %v4029
  %v4100 = vunpack.c.l.b16 %v4043
  %v4101 = vunpack.c.l.b16 %v4057
  %v4102 = vunpack.c.l.b16 %v4071
  %v4103 = vunpack.c.l.b16 %v4085
  %v4104 = vpack.c.b16 %v4089, %v4088
  %v4105 = vpack.c.b16 %v4091, %v4090
  %v4106 = vpack.c.b16 %v4093, %v4092
  %v4107 = vpack.c.b16 %v4095, %v4094
  %v4108 = vpack.c.b16 %v4097, %v4096
  %v4109 = vpack.c.b16 %v4099, %v4098
  %v4110 = vpack.c.b16 %v4101, %v4100
  %v4111 = vpack.c.b16 %v4103, %v4102
  %v4113 = vsel %vm3212, %v4104, 0
  %v4116 = vsel %vm3212, %v4105, 0
  %v4119 = vsel %vm3212, %v4106, 0
  %v4122 = vsel %vm3212, %v4107, 0
  %v4125 = vsel %vm3212, %v4108, 0
  %v4128 = vsel %vm3212, %v4109, 0
  %v4131 = vsel %vm3212, %v4110, 0
  %v4134 = vsel %vm3212, %v4111, 0
  %vm4136 = vcmask 1043456
  %v4138 = vsel %vm4136, %v4087, 0
  %4140 = vmatprep.subr.bf16.mxu0 0
  %4141 = vmatpush1.bf16.msra.mxu0 0
  %4142 = vmatprep.subr.bf16.mxu0 0
  %4143 = vmatpush1.bf16.msra.mxu0 0
  %4144 = vmatprep.subr.bf16.mxu0 0
  %4145 = vmatpush1.bf16.msra.mxu0 0
  %4146 = vmatprep.subr.bf16.mxu0 0
  %4147 = vmatpush1.bf16.msra.mxu0 0
  %4148 = vmatprep.subr.bf16.mxu0 0
  %4149 = vmatpush1.bf16.msra.mxu0 0
  %4150 = vmatprep.subr.bf16.mxu0 0
  %4151 = vmatpush1.bf16.msra.mxu0 0
  %4152 = vmatprep.subr.bf16.mxu0 0
  %4153 = vmatpush1.bf16.msra.mxu0 0
  %4154 = vmatprep.subr.bf16.mxu0 0
  %4155 = vmatpush1.bf16.msra.mxu0 %v4138
  %4156 = vmatprep.subr.bf16.mxu0 0
  %4157 = vmatpush2.bf16.msra.mxu0 0
  %4158 = vmatprep.subr.bf16.mxu0 0
  %4159 = vmatpush2.bf16.msra.mxu0 0
  %4160 = vmatprep.subr.bf16.mxu0 0
  %4161 = vmatpush2.bf16.msra.mxu0 0
  %4162 = vmatprep.subr.bf16.mxu0 0
  %4163 = vmatpush2.bf16.msra.mxu0 0
  %4164 = vmatprep.subr.bf16.mxu0 0
  %4165 = vmatpush2.bf16.msra.mxu0 0
  %4166 = vmatprep.subr.bf16.mxu0 0
  %4167 = vmatpush2.bf16.msra.mxu0 0
  %4168 = vmatprep.subr.bf16.mxu0 0
  %4169 = vmatpush2.bf16.msra.mxu0 0
  %4170 = vmatprep.subr.bf16.mxu0 0
  %4171 = vmatpush2.bf16.msra.mxu0 0
  %4172 = vmatprep.mubr.bf16.mxu0 0
  %4173 = vmatmul.mubr.bf16.gmra.mxu0 %v4113
  %v4174 = vpop.f32.mrf.mxu0
  %v4175 = vadd.f32 0.0, %v4174
  %v4176 = vpop.f32.mrf.mxu0
  %v4177 = vpop.f32.mrf.mxu0
  %v4178 = vadd.f32 0.0, %v4177
  %v4179 = vpop.f32.mrf.mxu0
  %4180 = vmatprep.mubr.bf16.mxu0 0
  %4181 = vmatmul.mubr.bf16.gmra.mxu0 %v4116
  %v4182 = vpop.f32.mrf.mxu0
  %v4183 = vadd.f32 0.0, %v4182
  %v4184 = vpop.f32.mrf.mxu0
  %v4185 = vpop.f32.mrf.mxu0
  %v4186 = vadd.f32 0.0, %v4185
  %v4187 = vpop.f32.mrf.mxu0
  %4188 = vmatprep.mubr.bf16.mxu0 0
  %4189 = vmatmul.mubr.bf16.gmra.mxu0 %v4119
  %v4190 = vpop.f32.mrf.mxu0
  %v4191 = vadd.f32 0.0, %v4190
  %v4192 = vpop.f32.mrf.mxu0
  %v4193 = vpop.f32.mrf.mxu0
  %v4194 = vadd.f32 0.0, %v4193
  %v4195 = vpop.f32.mrf.mxu0
  %4196 = vmatprep.mubr.bf16.mxu0 0
  %4197 = vmatmul.mubr.bf16.gmra.mxu0 %v4122
  %v4198 = vpop.f32.mrf.mxu0
  %v4199 = vadd.f32 0.0, %v4198
  %v4200 = vpop.f32.mrf.mxu0
  %v4201 = vpop.f32.mrf.mxu0
  %v4202 = vadd.f32 0.0, %v4201
  %v4203 = vpop.f32.mrf.mxu0
  %4204 = vmatprep.mubr.bf16.mxu0 0
  %4205 = vmatmul.mubr.bf16.gmra.mxu0 %v4125
  %v4206 = vpop.f32.mrf.mxu0
  %v4207 = vadd.f32 0.0, %v4206
  %v4208 = vpop.f32.mrf.mxu0
  %v4209 = vpop.f32.mrf.mxu0
  %v4210 = vadd.f32 0.0, %v4209
  %v4211 = vpop.f32.mrf.mxu0
  %4212 = vmatprep.mubr.bf16.mxu0 0
  %4213 = vmatmul.mubr.bf16.gmra.mxu0 %v4128
  %v4214 = vpop.f32.mrf.mxu0
  %v4215 = vadd.f32 0.0, %v4214
  %v4216 = vpop.f32.mrf.mxu0
  %v4217 = vpop.f32.mrf.mxu0
  %v4218 = vadd.f32 0.0, %v4217
  %v4219 = vpop.f32.mrf.mxu0
  %4220 = vmatprep.mubr.bf16.mxu0 0
  %4221 = vmatmul.mubr.bf16.gmra.mxu0 %v4131
  %v4222 = vpop.f32.mrf.mxu0
  %v4223 = vadd.f32 0.0, %v4222
  %v4224 = vpop.f32.mrf.mxu0
  %v4225 = vpop.f32.mrf.mxu0
  %v4226 = vadd.f32 0.0, %v4225
  %v4227 = vpop.f32.mrf.mxu0
  %4228 = vmatprep.mubr.bf16.mxu0 0
  %4229 = vmatmul.mubr.bf16.gmra.mxu0 %v4134
  %v4230 = vpop.f32.mrf.mxu0
  %v4231 = vadd.f32 0.0, %v4230
  %v4232 = vpop.f32.mrf.mxu0
  %v4233 = vpop.f32.mrf.mxu0
  %v4234 = vadd.f32 0.0, %v4233
  %v4235 = vpop.f32.mrf.mxu0
  %4236 = vdwg.mxu0
  %v4253 = vunpack.c.l.b16 %v3829
  %v4254 = vunpack.c.l.b16 %v3830
  %v4255 = vunpack.c.l.b16 %v3831
  %v4256 = vunpack.c.l.b16 %v3832
  %v4257 = vunpack.c.l.b16 %v3833
  %v4258 = vunpack.c.l.b16 %v3834
  %v4259 = vunpack.c.l.b16 %v3835
  %v4260 = vunpack.c.l.b16 %v3836
  %v4261 = vunpack.c.l.b16 %v3837
  %v4262 = vunpack.c.l.b16 %v3838
  %v4263 = vunpack.c.l.b16 %v3839
  %v4264 = vunpack.c.l.b16 %v3840
  %v4265 = vunpack.c.l.b16 %v3841
  %v4266 = vunpack.c.l.b16 %v3842
  %v4267 = vunpack.c.l.b16 %v3843
  %v4268 = vunpack.c.l.b16 %v3844
  %v4269 = vpack.c.b16 %v4254, %v4253
  %v4270 = vpack.c.b16 %v4256, %v4255
  %v4271 = vpack.c.b16 %v4258, %v4257
  %v4272 = vpack.c.b16 %v4260, %v4259
  %v4273 = vpack.c.b16 %v4262, %v4261
  %v4274 = vpack.c.b16 %v4264, %v4263
  %v4275 = vpack.c.b16 %v4266, %v4265
  %v4276 = vpack.c.b16 %v4268, %v4267
  %v4278 = vsel %vm3212, %v4269, 0
  %v4281 = vsel %vm3212, %v4270, 0
  %v4284 = vsel %vm3212, %v4271, 0
  %v4287 = vsel %vm3212, %v4272, 0
  %v4290 = vsel %vm3212, %v4273, 0
  %v4293 = vsel %vm3212, %v4274, 0
  %v4296 = vsel %vm3212, %v4275, 0
  %v4299 = vsel %vm3212, %v4276, 0
  %v4302 = vsel %vm4136, %v3845, 0
  %4304 = vmatprep.subr.bf16.mxu0 0
  %4305 = vmatpush1.bf16.msra.mxu0 0
  %4306 = vmatprep.subr.bf16.mxu0 0
  %4307 = vmatpush1.bf16.msra.mxu0 0
  %4308 = vmatprep.subr.bf16.mxu0 0
  %4309 = vmatpush1.bf16.msra.mxu0 0
  %4310 = vmatprep.subr.bf16.mxu0 0
  %4311 = vmatpush1.bf16.msra.mxu0 0
  %4312 = vmatprep.subr.bf16.mxu0 0
  %4313 = vmatpush1.bf16.msra.mxu0 0
  %4314 = vmatprep.subr.bf16.mxu0 0
  %4315 = vmatpush1.bf16.msra.mxu0 0
  %4316 = vmatprep.subr.bf16.mxu0 0
  %4317 = vmatpush1.bf16.msra.mxu0 0
  %4318 = vmatprep.subr.bf16.mxu0 0
  %4319 = vmatpush1.bf16.msra.mxu0 %v4302
  %4320 = vmatprep.subr.bf16.mxu0 0
  %4321 = vmatpush2.bf16.msra.mxu0 0
  %4322 = vmatprep.subr.bf16.mxu0 0
  %4323 = vmatpush2.bf16.msra.mxu0 0
  %4324 = vmatprep.subr.bf16.mxu0 0
  %4325 = vmatpush2.bf16.msra.mxu0 0
  %4326 = vmatprep.subr.bf16.mxu0 0
  %4327 = vmatpush2.bf16.msra.mxu0 0
  %4328 = vmatprep.subr.bf16.mxu0 0
  %4329 = vmatpush2.bf16.msra.mxu0 0
  %4330 = vmatprep.subr.bf16.mxu0 0
  %4331 = vmatpush2.bf16.msra.mxu0 0
  %4332 = vmatprep.subr.bf16.mxu0 0
  %4333 = vmatpush2.bf16.msra.mxu0 0
  %4334 = vmatprep.subr.bf16.mxu0 0
  %4335 = vmatpush2.bf16.msra.mxu0 0
  %4336 = vmatprep.mubr.bf16.mxu0 0
  %4337 = vmatmul.mubr.bf16.gmra.mxu0 %v4278
  %v4338 = vpop.f32.mrf.mxu0
  %v4339 = vadd.f32 %v4175, %v4338
  %v4340 = vpop.f32.mrf.mxu0
  %v4341 = vpop.f32.mrf.mxu0
  %v4342 = vadd.f32 %v4178, %v4341
  %v4343 = vpop.f32.mrf.mxu0
  %4344 = vmatprep.mubr.bf16.mxu0 0
  %4345 = vmatmul.mubr.bf16.gmra.mxu0 %v4281
  %v4346 = vpop.f32.mrf.mxu0
  %v4347 = vadd.f32 %v4183, %v4346
  %v4348 = vpop.f32.mrf.mxu0
  %v4349 = vpop.f32.mrf.mxu0
  %v4350 = vadd.f32 %v4186, %v4349
  %v4351 = vpop.f32.mrf.mxu0
  %4352 = vmatprep.mubr.bf16.mxu0 0
  %4353 = vmatmul.mubr.bf16.gmra.mxu0 %v4284
  %v4354 = vpop.f32.mrf.mxu0
  %v4355 = vadd.f32 %v4191, %v4354
  %v4356 = vpop.f32.mrf.mxu0
  %v4357 = vpop.f32.mrf.mxu0
  %v4358 = vadd.f32 %v4194, %v4357
  %v4359 = vpop.f32.mrf.mxu0
  %4360 = vmatprep.mubr.bf16.mxu0 0
  %4361 = vmatmul.mubr.bf16.gmra.mxu0 %v4287
  %v4362 = vpop.f32.mrf.mxu0
  %v4363 = vadd.f32 %v4199, %v4362
  %v4364 = vpop.f32.mrf.mxu0
  %v4365 = vpop.f32.mrf.mxu0
  %v4366 = vadd.f32 %v4202, %v4365
  %v4367 = vpop.f32.mrf.mxu0
  %4368 = vmatprep.mubr.bf16.mxu0 0
  %4369 = vmatmul.mubr.bf16.gmra.mxu0 %v4290
  %v4370 = vpop.f32.mrf.mxu0
  %v4371 = vadd.f32 %v4207, %v4370
  %v4372 = vpop.f32.mrf.mxu0
  %v4373 = vpop.f32.mrf.mxu0
  %v4374 = vadd.f32 %v4210, %v4373
  %v4375 = vpop.f32.mrf.mxu0
  %4376 = vmatprep.mubr.bf16.mxu0 0
  %4377 = vmatmul.mubr.bf16.gmra.mxu0 %v4293
  %v4378 = vpop.f32.mrf.mxu0
  %v4379 = vadd.f32 %v4215, %v4378
  %v4380 = vpop.f32.mrf.mxu0
  %v4381 = vpop.f32.mrf.mxu0
  %v4382 = vadd.f32 %v4218, %v4381
  %v4383 = vpop.f32.mrf.mxu0
  %4384 = vmatprep.mubr.bf16.mxu0 0
  %4385 = vmatmul.mubr.bf16.gmra.mxu0 %v4296
  %v4386 = vpop.f32.mrf.mxu0
  %v4387 = vadd.f32 %v4223, %v4386
  %v4388 = vpop.f32.mrf.mxu0
  %v4389 = vpop.f32.mrf.mxu0
  %v4390 = vadd.f32 %v4226, %v4389
  %v4391 = vpop.f32.mrf.mxu0
  %4392 = vmatprep.mubr.bf16.mxu0 0
  %4393 = vmatmul.mubr.bf16.gmra.mxu0 %v4299
  %v4394 = vpop.f32.mrf.mxu0
  %v4395 = vadd.f32 %v4231, %v4394
  %v4396 = vpop.f32.mrf.mxu0
  %v4397 = vpop.f32.mrf.mxu0
  %v4398 = vadd.f32 %v4234, %v4397
  %v4399 = vpop.f32.mrf.mxu0
  %4400 = vdwg.mxu0
  %v4401 = vld [vmem:[#allocation3] sm:$0xe]
  %v4402 = vld [vmem:[#allocation3 + $0x8] sm:$0xe]
  %v4403 = vld [vmem:[#allocation3 + $0x10] sm:$0xe]
  %v4404 = vld [vmem:[#allocation3 + $0x18] sm:$0xe]
  %v4405 = vld [vmem:[#allocation3 + $0x20] sm:$0xe]
  %v4406 = vld [vmem:[#allocation3 + $0x28] sm:$0xe]
  %v4407 = vld [vmem:[#allocation3 + $0x30] sm:$0xe]
  %v4408 = vld [vmem:[#allocation3 + $0x38] sm:$0xe]
  %v4409 = vld [vmem:[#allocation3 + $0x50] sm:$0xe]
  %v4410 = vld [vmem:[#allocation3 + $0x58] sm:$0xe]
  %v4411 = vld [vmem:[#allocation3 + $0x60] sm:$0xe]
  %v4412 = vld [vmem:[#allocation3 + $0x68] sm:$0xe]
  %v4413 = vld [vmem:[#allocation3 + $0x70] sm:$0xe]
  %v4414 = vld [vmem:[#allocation3 + $0x78] sm:$0xe]
  %v4415 = vld [vmem:[#allocation3 + $0x80] sm:$0xe]
  %v4416 = vld [vmem:[#allocation3 + $0x88] sm:$0xe]
  %v4449 = vrot.slane %v4401, 5
  %v4450 = vrot.slane %v4449, 4
  %v4451 = vrot.slane %v3846, 5
  %v4452 = vsel %vm1182, %v4450, %v4451
  %v4453 = vrot.slane %v4402, 5
  %v4454 = vrot.slane %v4453, 4
  %v4455 = vrot.slane %v3847, 5
  %v4456 = vsel %vm1182, %v4454, %v4455
  %v4457 = vrot.slane %v4403, 5
  %v4458 = vrot.slane %v4457, 4
  %v4459 = vrot.slane %v3848, 5
  %v4460 = vsel %vm1182, %v4458, %v4459
  %v4461 = vrot.slane %v4404, 5
  %v4462 = vrot.slane %v4461, 4
  %v4463 = vrot.slane %v3849, 5
  %v4464 = vsel %vm1182, %v4462, %v4463
  %v4465 = vrot.slane %v4405, 5
  %v4466 = vrot.slane %v4465, 4
  %v4467 = vrot.slane %v3850, 5
  %v4468 = vsel %vm1182, %v4466, %v4467
  %v4469 = vrot.slane %v4406, 5
  %v4470 = vrot.slane %v4469, 4
  %v4471 = vrot.slane %v3851, 5
  %v4472 = vsel %vm1182, %v4470, %v4471
  %v4473 = vrot.slane %v4407, 5
  %v4474 = vrot.slane %v4473, 4
  %v4475 = vrot.slane %v3852, 5
  %v4476 = vsel %vm1182, %v4474, %v4475
  %v4477 = vrot.slane %v4408, 5
  %v4478 = vrot.slane %v4477, 4
  %v4479 = vrot.slane %v3853, 5
  %v4480 = vsel %vm1182, %v4478, %v4479
  %v4481 = vrot.slane %v4409, 5
  %v4482 = vrot.slane %v4481, 4
  %v4483 = vrot.slane %v3854, 5
  %v4484 = vsel %vm1182, %v4482, %v4483
  %v4485 = vrot.slane %v4410, 5
  %v4486 = vrot.slane %v4485, 4
  %v4487 = vrot.slane %v3855, 5
  %v4488 = vsel %vm1182, %v4486, %v4487
  %v4489 = vrot.slane %v4411, 5
  %v4490 = vrot.slane %v4489, 4
  %v4491 = vrot.slane %v3856, 5
  %v4492 = vsel %vm1182, %v4490, %v4491
  %v4493 = vrot.slane %v4412, 5
  %v4494 = vrot.slane %v4493, 4
  %v4495 = vrot.slane %v3857, 5
  %v4496 = vsel %vm1182, %v4494, %v4495
  %v4497 = vrot.slane %v4413, 5
  %v4498 = vrot.slane %v4497, 4
  %v4499 = vrot.slane %v3858, 5
  %v4500 = vsel %vm1182, %v4498, %v4499
  %v4501 = vrot.slane %v4414, 5
  %v4502 = vrot.slane %v4501, 4
  %v4503 = vrot.slane %v3859, 5
  %v4504 = vsel %vm1182, %v4502, %v4503
  %v4505 = vrot.slane %v4415, 5
  %v4506 = vrot.slane %v4505, 4
  %v4507 = vrot.slane %v3860, 5
  %v4508 = vsel %vm1182, %v4506, %v4507
  %v4509 = vrot.slane %v4416, 5
  %v4510 = vrot.slane %v4509, 4
  %v4511 = vrot.slane %v3861, 5
  %v4512 = vsel %vm1182, %v4510, %v4511
  %s4513 = scalar_lea.vmem %s4, 8
  %v4514 = vld [vmem:[%s4513] sm:$0xf]
  %v4515 = vunpack.c.l.b16 %v4452
  %v4516 = vunpack.c.l.b16 %v4456
  %v4517 = vunpack.c.l.b16 %v4460
  %v4518 = vunpack.c.l.b16 %v4464
  %v4519 = vunpack.c.l.b16 %v4468
  %v4520 = vunpack.c.l.b16 %v4472
  %v4521 = vunpack.c.l.b16 %v4476
  %v4522 = vunpack.c.l.b16 %v4480
  %v4523 = vunpack.c.l.b16 %v4484
  %v4524 = vunpack.c.l.b16 %v4488
  %v4525 = vunpack.c.l.b16 %v4492
  %v4526 = vunpack.c.l.b16 %v4496
  %v4527 = vunpack.c.l.b16 %v4500
  %v4528 = vunpack.c.l.b16 %v4504
  %v4529 = vunpack.c.l.b16 %v4508
  %v4530 = vunpack.c.l.b16 %v4512
  %v4531 = vpack.c.b16 %v4516, %v4515
  %v4532 = vpack.c.b16 %v4518, %v4517
  %v4533 = vpack.c.b16 %v4520, %v4519
  %v4534 = vpack.c.b16 %v4522, %v4521
  %v4535 = vpack.c.b16 %v4524, %v4523
  %v4536 = vpack.c.b16 %v4526, %v4525
  %v4537 = vpack.c.b16 %v4528, %v4527
  %v4538 = vpack.c.b16 %v4530, %v4529
  %v4540 = vsel %vm3212, %v4531, 0
  %v4543 = vsel %vm3212, %v4532, 0
  %v4546 = vsel %vm3212, %v4533, 0
  %v4549 = vsel %vm3212, %v4534, 0
  %v4552 = vsel %vm3212, %v4535, 0
  %v4555 = vsel %vm3212, %v4536, 0
  %v4558 = vsel %vm3212, %v4537, 0
  %v4561 = vsel %vm3212, %v4538, 0
  %v4564 = vsel %vm4136, %v4514, 0
  %4566 = vmatprep.subr.bf16.mxu0 0
  %4567 = vmatpush1.bf16.msra.mxu0 0
  %4568 = vmatprep.subr.bf16.mxu0 0
  %4569 = vmatpush1.bf16.msra.mxu0 0
  %4570 = vmatprep.subr.bf16.mxu0 0
  %4571 = vmatpush1.bf16.msra.mxu0 0
  %4572 = vmatprep.subr.bf16.mxu0 0
  %4573 = vmatpush1.bf16.msra.mxu0 0
  %4574 = vmatprep.subr.bf16.mxu0 0
  %4575 = vmatpush1.bf16.msra.mxu0 0
  %4576 = vmatprep.subr.bf16.mxu0 0
  %4577 = vmatpush1.bf16.msra.mxu0 0
  %4578 = vmatprep.subr.bf16.mxu0 0
  %4579 = vmatpush1.bf16.msra.mxu0 0
  %4580 = vmatprep.subr.bf16.mxu0 0
  %4581 = vmatpush1.bf16.msra.mxu0 %v4564
  %4582 = vmatprep.subr.bf16.mxu0 0
  %4583 = vmatpush2.bf16.msra.mxu0 0
  %4584 = vmatprep.subr.bf16.mxu0 0
  %4585 = vmatpush2.bf16.msra.mxu0 0
  %4586 = vmatprep.subr.bf16.mxu0 0
  %4587 = vmatpush2.bf16.msra.mxu0 0
  %4588 = vmatprep.subr.bf16.mxu0 0
  %4589 = vmatpush2.bf16.msra.mxu0 0
  %4590 = vmatprep.subr.bf16.mxu0 0
  %4591 = vmatpush2.bf16.msra.mxu0 0
  %4592 = vmatprep.subr.bf16.mxu0 0
  %4593 = vmatpush2.bf16.msra.mxu0 0
  %4594 = vmatprep.subr.bf16.mxu0 0
  %4595 = vmatpush2.bf16.msra.mxu0 0
  %4596 = vmatprep.subr.bf16.mxu0 0
  %4597 = vmatpush2.bf16.msra.mxu0 0
  %4598 = vmatprep.mubr.bf16.mxu0 0
  %4599 = vmatmul.mubr.bf16.gmra.mxu0 %v4540
  %v4600 = vpop.f32.mrf.mxu0
  %v4601 = vadd.f32 0.0, %v4600
  %v4602 = vpop.f32.mrf.mxu0
  %v4603 = vpop.f32.mrf.mxu0
  %v4604 = vadd.f32 0.0, %v4603
  %v4605 = vpop.f32.mrf.mxu0
  %4606 = vmatprep.mubr.bf16.mxu0 0
  %4607 = vmatmul.mubr.bf16.gmra.mxu0 %v4543
  %v4608 = vpop.f32.mrf.mxu0
  %v4609 = vadd.f32 0.0, %v4608
  %v4610 = vpop.f32.mrf.mxu0
  %v4611 = vpop.f32.mrf.mxu0
  %v4612 = vadd.f32 0.0, %v4611
  %v4613 = vpop.f32.mrf.mxu0
  %4614 = vmatprep.mubr.bf16.mxu0 0
  %4615 = vmatmul.mubr.bf16.gmra.mxu0 %v4546
  %v4616 = vpop.f32.mrf.mxu0
  %v4617 = vadd.f32 0.0, %v4616
  %v4618 = vpop.f32.mrf.mxu0
  %v4619 = vpop.f32.mrf.mxu0
  %v4620 = vadd.f32 0.0, %v4619
  %v4621 = vpop.f32.mrf.mxu0
  %4622 = vmatprep.mubr.bf16.mxu0 0
  %4623 = vmatmul.mubr.bf16.gmra.mxu0 %v4549
  %v4624 = vpop.f32.mrf.mxu0
  %v4625 = vadd.f32 0.0, %v4624
  %v4626 = vpop.f32.mrf.mxu0
  %v4627 = vpop.f32.mrf.mxu0
  %v4628 = vadd.f32 0.0, %v4627
  %v4629 = vpop.f32.mrf.mxu0
  %4630 = vmatprep.mubr.bf16.mxu0 0
  %4631 = vmatmul.mubr.bf16.gmra.mxu0 %v4552
  %v4632 = vpop.f32.mrf.mxu0
  %v4633 = vadd.f32 0.0, %v4632
  %v4634 = vpop.f32.mrf.mxu0
  %v4635 = vpop.f32.mrf.mxu0
  %v4636 = vadd.f32 0.0, %v4635
  %v4637 = vpop.f32.mrf.mxu0
  %4638 = vmatprep.mubr.bf16.mxu0 0
  %4639 = vmatmul.mubr.bf16.gmra.mxu0 %v4555
  %v4640 = vpop.f32.mrf.mxu0
  %v4641 = vadd.f32 0.0, %v4640
  %v4642 = vpop.f32.mrf.mxu0
  %v4643 = vpop.f32.mrf.mxu0
  %v4644 = vadd.f32 0.0, %v4643
  %v4645 = vpop.f32.mrf.mxu0
  %4646 = vmatprep.mubr.bf16.mxu0 0
  %4647 = vmatmul.mubr.bf16.gmra.mxu0 %v4558
  %v4648 = vpop.f32.mrf.mxu0
  %v4649 = vadd.f32 0.0, %v4648
  %v4650 = vpop.f32.mrf.mxu0
  %v4651 = vpop.f32.mrf.mxu0
  %v4652 = vadd.f32 0.0, %v4651
  %v4653 = vpop.f32.mrf.mxu0
  %4654 = vmatprep.mubr.bf16.mxu0 0
  %4655 = vmatmul.mubr.bf16.gmra.mxu0 %v4561
  %v4656 = vpop.f32.mrf.mxu0
  %v4657 = vadd.f32 0.0, %v4656
  %v4658 = vpop.f32.mrf.mxu0
  %v4659 = vpop.f32.mrf.mxu0
  %v4660 = vadd.f32 0.0, %v4659
  %v4661 = vpop.f32.mrf.mxu0
  %4662 = vdwg.mxu0
  %v4663 = vadd.f32 %v4339, %v4601
  %v4664 = vadd.f32 %v4342, %v4604
  %v4665 = vadd.f32 %v4347, %v4609
  %v4666 = vadd.f32 %v4350, %v4612
  %v4667 = vadd.f32 %v4355, %v4617
  %v4668 = vadd.f32 %v4358, %v4620
  %v4669 = vadd.f32 %v4363, %v4625
  %v4670 = vadd.f32 %v4366, %v4628
  %v4671 = vadd.f32 %v4371, %v4633
  %v4672 = vadd.f32 %v4374, %v4636
  %v4673 = vadd.f32 %v4379, %v4641
  %v4674 = vadd.f32 %v4382, %v4644
  %v4675 = vadd.f32 %v4387, %v4649
  %v4676 = vadd.f32 %v4390, %v4652
  %v4677 = vadd.f32 %v4395, %v4657
  %v4678 = vadd.f32 %v4398, %v4660
  %v4679 = vld [vmem:[%s3730] sm:$0xf]
  %v4680 = vld [vmem:[%s3730 + $0x8] sm:$0xf]
  %v4681 = vld [vmem:[%s3730 + $0x10] sm:$0xf]
  %v4682 = vld [vmem:[%s3730 + $0x18] sm:$0xf]
  %v4683 = vld [vmem:[%s3730 + $0x20] sm:$0xf]
  %v4684 = vld [vmem:[%s3730 + $0x28] sm:$0xf]
  %v4685 = vld [vmem:[%s3730 + $0x30] sm:$0xf]
  %v4686 = vld [vmem:[%s3730 + $0x38] sm:$0xf]
  %v4687 = vld [vmem:[%s3730 + $0x50] sm:$0xf]
  %v4688 = vld [vmem:[%s3730 + $0x58] sm:$0xf]
  %v4689 = vld [vmem:[%s3730 + $0x60] sm:$0xf]
  %v4690 = vld [vmem:[%s3730 + $0x68] sm:$0xf]
  %v4691 = vld [vmem:[%s3730 + $0x70] sm:$0xf]
  %v4692 = vld [vmem:[%s3730 + $0x78] sm:$0xf]
  %v4693 = vld [vmem:[%s3730 + $0x80] sm:$0xf]
  %v4694 = vld [vmem:[%s3730 + $0x88] sm:$0xf]
  %s4695 = scalar_lea.vmem %s4, 12
  %v4696 = vld [vmem:[%s4695] sm:$0xf]
  %v4713 = vunpack.c.l.b16 %v4679
  %v4714 = vunpack.c.l.b16 %v4680
  %v4715 = vunpack.c.l.b16 %v4681
  %v4716 = vunpack.c.l.b16 %v4682
  %v4717 = vunpack.c.l.b16 %v4683
  %v4718 = vunpack.c.l.b16 %v4684
  %v4719 = vunpack.c.l.b16 %v4685
  %v4720 = vunpack.c.l.b16 %v4686
  %v4721 = vunpack.c.l.b16 %v4687
  %v4722 = vunpack.c.l.b16 %v4688
  %v4723 = vunpack.c.l.b16 %v4689
  %v4724 = vunpack.c.l.b16 %v4690
  %v4725 = vunpack.c.l.b16 %v4691
  %v4726 = vunpack.c.l.b16 %v4692
  %v4727 = vunpack.c.l.b16 %v4693
  %v4728 = vunpack.c.l.b16 %v4694
  %v4729 = vpack.c.b16 %v4714, %v4713
  %v4730 = vpack.c.b16 %v4716, %v4715
  %v4731 = vpack.c.b16 %v4718, %v4717
  %v4732 = vpack.c.b16 %v4720, %v4719
  %v4733 = vpack.c.b16 %v4722, %v4721
  %v4734 = vpack.c.b16 %v4724, %v4723
  %v4735 = vpack.c.b16 %v4726, %v4725
  %v4736 = vpack.c.b16 %v4728, %v4727
  %v4738 = vsel %vm3212, %v4729, 0
  %v4741 = vsel %vm3212, %v4730, 0
  %v4744 = vsel %vm3212, %v4731, 0
  %v4747 = vsel %vm3212, %v4732, 0
  %v4750 = vsel %vm3212, %v4733, 0
  %v4753 = vsel %vm3212, %v4734, 0
  %v4756 = vsel %vm3212, %v4735, 0
  %v4759 = vsel %vm3212, %v4736, 0
  %v4762 = vsel %vm4136, %v4696, 0
  %4764 = vmatprep.subr.bf16.mxu0 0
  %4765 = vmatpush1.bf16.msra.mxu0 0
  %4766 = vmatprep.subr.bf16.mxu0 0
  %4767 = vmatpush1.bf16.msra.mxu0 0
  %4768 = vmatprep.subr.bf16.mxu0 0
  %4769 = vmatpush1.bf16.msra.mxu0 0
  %4770 = vmatprep.subr.bf16.mxu0 0
  %4771 = vmatpush1.bf16.msra.mxu0 0
  %4772 = vmatprep.subr.bf16.mxu0 0
  %4773 = vmatpush1.bf16.msra.mxu0 0
  %4774 = vmatprep.subr.bf16.mxu0 0
  %4775 = vmatpush1.bf16.msra.mxu0 0
  %4776 = vmatprep.subr.bf16.mxu0 0
  %4777 = vmatpush1.bf16.msra.mxu0 0
  %4778 = vmatprep.subr.bf16.mxu0 0
  %4779 = vmatpush1.bf16.msra.mxu0 %v4762
  %4780 = vmatprep.subr.bf16.mxu0 0
  %4781 = vmatpush2.bf16.msra.mxu0 0
  %4782 = vmatprep.subr.bf16.mxu0 0
  %4783 = vmatpush2.bf16.msra.mxu0 0
  %4784 = vmatprep.subr.bf16.mxu0 0
  %4785 = vmatpush2.bf16.msra.mxu0 0
  %4786 = vmatprep.subr.bf16.mxu0 0
  %4787 = vmatpush2.bf16.msra.mxu0 0
  %4788 = vmatprep.subr.bf16.mxu0 0
  %4789 = vmatpush2.bf16.msra.mxu0 0
  %4790 = vmatprep.subr.bf16.mxu0 0
  %4791 = vmatpush2.bf16.msra.mxu0 0
  %4792 = vmatprep.subr.bf16.mxu0 0
  %4793 = vmatpush2.bf16.msra.mxu0 0
  %4794 = vmatprep.subr.bf16.mxu0 0
  %4795 = vmatpush2.bf16.msra.mxu0 0
  %4796 = vmatprep.mubr.bf16.mxu0 0
  %4797 = vmatmul.mubr.bf16.gmra.mxu0 %v4738
  %v4798 = vpop.f32.mrf.mxu0
  %v4799 = vadd.f32 0.0, %v4798
  %v4800 = vpop.f32.mrf.mxu0
  %v4801 = vpop.f32.mrf.mxu0
  %v4802 = vadd.f32 0.0, %v4801
  %v4803 = vpop.f32.mrf.mxu0
  %4804 = vmatprep.mubr.bf16.mxu0 0
  %4805 = vmatmul.mubr.bf16.gmra.mxu0 %v4741
  %v4806 = vpop.f32.mrf.mxu0
  %v4807 = vadd.f32 0.0, %v4806
  %v4808 = vpop.f32.mrf.mxu0
  %v4809 = vpop.f32.mrf.mxu0
  %v4810 = vadd.f32 0.0, %v4809
  %v4811 = vpop.f32.mrf.mxu0
  %4812 = vmatprep.mubr.bf16.mxu0 0
  %4813 = vmatmul.mubr.bf16.gmra.mxu0 %v4744
  %v4814 = vpop.f32.mrf.mxu0
  %v4815 = vadd.f32 0.0, %v4814
  %v4816 = vpop.f32.mrf.mxu0
  %v4817 = vpop.f32.mrf.mxu0
  %v4818 = vadd.f32 0.0, %v4817
  %v4819 = vpop.f32.mrf.mxu0
  %4820 = vmatprep.mubr.bf16.mxu0 0
  %4821 = vmatmul.mubr.bf16.gmra.mxu0 %v4747
  %v4822 = vpop.f32.mrf.mxu0
  %v4823 = vadd.f32 0.0, %v4822
  %v4824 = vpop.f32.mrf.mxu0
  %v4825 = vpop.f32.mrf.mxu0
  %v4826 = vadd.f32 0.0, %v4825
  %v4827 = vpop.f32.mrf.mxu0
  %4828 = vmatprep.mubr.bf16.mxu0 0
  %4829 = vmatmul.mubr.bf16.gmra.mxu0 %v4750
  %v4830 = vpop.f32.mrf.mxu0
  %v4831 = vadd.f32 0.0, %v4830
  %v4832 = vpop.f32.mrf.mxu0
  %v4833 = vpop.f32.mrf.mxu0
  %v4834 = vadd.f32 0.0, %v4833
  %v4835 = vpop.f32.mrf.mxu0
  %4836 = vmatprep.mubr.bf16.mxu0 0
  %4837 = vmatmul.mubr.bf16.gmra.mxu0 %v4753
  %v4838 = vpop.f32.mrf.mxu0
  %v4839 = vadd.f32 0.0, %v4838
  %v4840 = vpop.f32.mrf.mxu0
  %v4841 = vpop.f32.mrf.mxu0
  %v4842 = vadd.f32 0.0, %v4841
  %v4843 = vpop.f32.mrf.mxu0
  %4844 = vmatprep.mubr.bf16.mxu0 0
  %4845 = vmatmul.mubr.bf16.gmra.mxu0 %v4756
  %v4846 = vpop.f32.mrf.mxu0
  %v4847 = vadd.f32 0.0, %v4846
  %v4848 = vpop.f32.mrf.mxu0
  %v4849 = vpop.f32.mrf.mxu0
  %v4850 = vadd.f32 0.0, %v4849
  %v4851 = vpop.f32.mrf.mxu0
  %4852 = vmatprep.mubr.bf16.mxu0 0
  %4853 = vmatmul.mubr.bf16.gmra.mxu0 %v4759
  %v4854 = vpop.f32.mrf.mxu0
  %v4855 = vadd.f32 0.0, %v4854
  %v4856 = vpop.f32.mrf.mxu0
  %v4857 = vpop.f32.mrf.mxu0
  %v4858 = vadd.f32 0.0, %v4857
  %v4859 = vpop.f32.mrf.mxu0
  %4860 = vdwg.mxu0
  %v4861 = vadd.f32 %v4663, %v4799
  %v4862 = vadd.f32 %v4664, %v4802
  %v4863 = vadd.f32 %v4665, %v4807
  %v4864 = vadd.f32 %v4666, %v4810
  %v4865 = vadd.f32 %v4667, %v4815
  %v4866 = vadd.f32 %v4668, %v4818
  %v4867 = vadd.f32 %v4669, %v4823
  %v4868 = vadd.f32 %v4670, %v4826
  %v4869 = vadd.f32 %v4671, %v4831
  %v4870 = vadd.f32 %v4672, %v4834
  %v4871 = vadd.f32 %v4673, %v4839
  %v4872 = vadd.f32 %v4674, %v4842
  %v4873 = vadd.f32 %v4675, %v4847
  %v4874 = vadd.f32 %v4676, %v4850
  %v4875 = vadd.f32 %v4677, %v4855
  %v4876 = vadd.f32 %v4678, %v4858
  %v4877 = vld [vmem:[%s3730] sm:$0xf]
  %v4878 = vld [vmem:[%s3730 + $0x4] sm:$0x1]
  %v4879 = vld [vmem:[%s3730 + $0x8] sm:$0xf]
  %v4880 = vld [vmem:[%s3730 + $0xc] sm:$0x1]
  %v4881 = vld [vmem:[%s3730 + $0x10] sm:$0xf]
  %v4882 = vld [vmem:[%s3730 + $0x14] sm:$0x1]
  %v4883 = vld [vmem:[%s3730 + $0x18] sm:$0xf]
  %v4884 = vld [vmem:[%s3730 + $0x1c] sm:$0x1]
  %v4885 = vld [vmem:[%s3730 + $0x20] sm:$0xf]
  %v4886 = vld [vmem:[%s3730 + $0x24] sm:$0x1]
  %v4887 = vld [vmem:[%s3730 + $0x28] sm:$0xf]
  %v4888 = vld [vmem:[%s3730 + $0x2c] sm:$0x1]
  %v4889 = vld [vmem:[%s3730 + $0x30] sm:$0xf]
  %v4890 = vld [vmem:[%s3730 + $0x34] sm:$0x1]
  %v4891 = vld [vmem:[%s3730 + $0x38] sm:$0xf]
  %v4892 = vld [vmem:[%s3730 + $0x3c] sm:$0x1]
  %v4893 = vld [vmem:[%s3730 + $0x50] sm:$0xf]
  %v4894 = vld [vmem:[%s3730 + $0x54] sm:$0x1]
  %v4895 = vld [vmem:[%s3730 + $0x58] sm:$0xf]
  %v4896 = vld [vmem:[%s3730 + $0x5c] sm:$0x1]
  %v4897 = vld [vmem:[%s3730 + $0x60] sm:$0xf]
  %v4898 = vld [vmem:[%s3730 + $0x64] sm:$0x1]
  %v4899 = vld [vmem:[%s3730 + $0x68] sm:$0xf]
  %v4900 = vld [vmem:[%s3730 + $0x6c] sm:$0x1]
  %v4901 = vld [vmem:[%s3730 + $0x70] sm:$0xf]
  %v4902 = vld [vmem:[%s3730 + $0x74] sm:$0x1]
  %v4903 = vld [vmem:[%s3730 + $0x78] sm:$0xf]
  %v4904 = vld [vmem:[%s3730 + $0x7c] sm:$0x1]
  %v4905 = vld [vmem:[%s3730 + $0x80] sm:$0xf]
  %v4906 = vld [vmem:[%s3730 + $0x84] sm:$0x1]
  %v4907 = vld [vmem:[%s3730 + $0x88] sm:$0xf]
  %v4908 = vld [vmem:[%s3730 + $0x8c] sm:$0x1]
  %v4910 = vshrl.u32 %v4877, 16
  %v4912 = vrot.slane %v4910, 4
  %v4913 = vshll.u32 %v4877, 16
  %v4915 = vrot.slane %v4913, 5
  %v4916 = vor.u32 %v4912, %v4915
  %v4917 = vrot.slane %v4916, 4
  %v4919 = vshll.u32 %v4878, 16
  %v4921 = vrot.slane %v4919, 5
  %v4922 = vsel %vm591, %v4917, %v4921
  %v4924 = vshrl.u32 %v4879, 16
  %v4926 = vrot.slane %v4924, 4
  %v4927 = vshll.u32 %v4879, 16
  %v4929 = vrot.slane %v4927, 5
  %v4930 = vor.u32 %v4926, %v4929
  %v4931 = vrot.slane %v4930, 4
  %v4933 = vshll.u32 %v4880, 16
  %v4935 = vrot.slane %v4933, 5
  %v4936 = vsel %vm591, %v4931, %v4935
  %v4938 = vshrl.u32 %v4881, 16
  %v4940 = vrot.slane %v4938, 4
  %v4941 = vshll.u32 %v4881, 16
  %v4943 = vrot.slane %v4941, 5
  %v4944 = vor.u32 %v4940, %v4943
  %v4945 = vrot.slane %v4944, 4
  %v4947 = vshll.u32 %v4882, 16
  %v4949 = vrot.slane %v4947, 5
  %v4950 = vsel %vm591, %v4945, %v4949
  %v4952 = vshrl.u32 %v4883, 16
  %v4954 = vrot.slane %v4952, 4
  %v4955 = vshll.u32 %v4883, 16
  %v4957 = vrot.slane %v4955, 5
  %v4958 = vor.u32 %v4954, %v4957
  %v4959 = vrot.slane %v4958, 4
  %v4961 = vshll.u32 %v4884, 16
  %v4963 = vrot.slane %v4961, 5
  %v4964 = vsel %vm591, %v4959, %v4963
  %v4966 = vshrl.u32 %v4885, 16
  %v4968 = vrot.slane %v4966, 4
  %v4969 = vshll.u32 %v4885, 16
  %v4971 = vrot.slane %v4969, 5
  %v4972 = vor.u32 %v4968, %v4971
  %v4973 = vrot.slane %v4972, 4
  %v4975 = vshll.u32 %v4886, 16
  %v4977 = vrot.slane %v4975, 5
  %v4978 = vsel %vm591, %v4973, %v4977
  %v4980 = vshrl.u32 %v4887, 16
  %v4982 = vrot.slane %v4980, 4
  %v4983 = vshll.u32 %v4887, 16
  %v4985 = vrot.slane %v4983, 5
  %v4986 = vor.u32 %v4982, %v4985
  %v4987 = vrot.slane %v4986, 4
  %v4989 = vshll.u32 %v4888, 16
  %v4991 = vrot.slane %v4989, 5
  %v4992 = vsel %vm591, %v4987, %v4991
  %v4994 = vshrl.u32 %v4889, 16
  %v4996 = vrot.slane %v4994, 4
  %v4997 = vshll.u32 %v4889, 16
  %v4999 = vrot.slane %v4997, 5
  %v5000 = vor.u32 %v4996, %v4999
  %v5001 = vrot.slane %v5000, 4
  %v5003 = vshll.u32 %v4890, 16
  %v5005 = vrot.slane %v5003, 5
  %v5006 = vsel %vm591, %v5001, %v5005
  %v5008 = vshrl.u32 %v4891, 16
  %v5010 = vrot.slane %v5008, 4
  %v5011 = vshll.u32 %v4891, 16
  %v5013 = vrot.slane %v5011, 5
  %v5014 = vor.u32 %v5010, %v5013
  %v5015 = vrot.slane %v5014, 4
  %v5017 = vshll.u32 %v4892, 16
  %v5019 = vrot.slane %v5017, 5
  %v5020 = vsel %vm591, %v5015, %v5019
  %v5022 = vshrl.u32 %v4893, 16
  %v5024 = vrot.slane %v5022, 4
  %v5025 = vshll.u32 %v4893, 16
  %v5027 = vrot.slane %v5025, 5
  %v5028 = vor.u32 %v5024, %v5027
  %v5029 = vrot.slane %v5028, 4
  %v5031 = vshll.u32 %v4894, 16
  %v5033 = vrot.slane %v5031, 5
  %v5034 = vsel %vm591, %v5029, %v5033
  %v5036 = vshrl.u32 %v4895, 16
  %v5038 = vrot.slane %v5036, 4
  %v5039 = vshll.u32 %v4895, 16
  %v5041 = vrot.slane %v5039, 5
  %v5042 = vor.u32 %v5038, %v5041
  %v5043 = vrot.slane %v5042, 4
  %v5045 = vshll.u32 %v4896, 16
  %v5047 = vrot.slane %v5045, 5
  %v5048 = vsel %vm591, %v5043, %v5047
  %v5050 = vshrl.u32 %v4897, 16
  %v5052 = vrot.slane %v5050, 4
  %v5053 = vshll.u32 %v4897, 16
  %v5055 = vrot.slane %v5053, 5
  %v5056 = vor.u32 %v5052, %v5055
  %v5057 = vrot.slane %v5056, 4
  %v5059 = vshll.u32 %v4898, 16
  %v5061 = vrot.slane %v5059, 5
  %v5062 = vsel %vm591, %v5057, %v5061
  %v5064 = vshrl.u32 %v4899, 16
  %v5066 = vrot.slane %v5064, 4
  %v5067 = vshll.u32 %v4899, 16
  %v5069 = vrot.slane %v5067, 5
  %v5070 = vor.u32 %v5066, %v5069
  %v5071 = vrot.slane %v5070, 4
  %v5073 = vshll.u32 %v4900, 16
  %v5075 = vrot.slane %v5073, 5
  %v5076 = vsel %vm591, %v5071, %v5075
  %v5078 = vshrl.u32 %v4901, 16
  %v5080 = vrot.slane %v5078, 4
  %v5081 = vshll.u32 %v4901, 16
  %v5083 = vrot.slane %v5081, 5
  %v5084 = vor.u32 %v5080, %v5083
  %v5085 = vrot.slane %v5084, 4
  %v5087 = vshll.u32 %v4902, 16
  %v5089 = vrot.slane %v5087, 5
  %v5090 = vsel %vm591, %v5085, %v5089
  %v5092 = vshrl.u32 %v4903, 16
  %v5094 = vrot.slane %v5092, 4
  %v5095 = vshll.u32 %v4903, 16
  %v5097 = vrot.slane %v5095, 5
  %v5098 = vor.u32 %v5094, %v5097
  %v5099 = vrot.slane %v5098, 4
  %v5101 = vshll.u32 %v4904, 16
  %v5103 = vrot.slane %v5101, 5
  %v5104 = vsel %vm591, %v5099, %v5103
  %v5106 = vshrl.u32 %v4905, 16
  %v5108 = vrot.slane %v5106, 4
  %v5109 = vshll.u32 %v4905, 16
  %v5111 = vrot.slane %v5109, 5
  %v5112 = vor.u32 %v5108, %v5111
  %v5113 = vrot.slane %v5112, 4
  %v5115 = vshll.u32 %v4906, 16
  %v5117 = vrot.slane %v5115, 5
  %v5118 = vsel %vm591, %v5113, %v5117
  %v5120 = vshrl.u32 %v4907, 16
  %v5122 = vrot.slane %v5120, 4
  %v5123 = vshll.u32 %v4907, 16
  %v5125 = vrot.slane %v5123, 5
  %v5126 = vor.u32 %v5122, %v5125
  %v5127 = vrot.slane %v5126, 4
  %v5129 = vshll.u32 %v4908, 16
  %v5131 = vrot.slane %v5129, 5
  %v5132 = vsel %vm591, %v5127, %v5131
  %s5133 = scalar_lea.vmem %s4, 16
  %v5134 = vld [vmem:[%s5133] sm:$0xf]
  %v5135 = vunpack.c.l.b16 %v4922
  %v5136 = vunpack.c.l.b16 %v4936
  %v5137 = vunpack.c.l.b16 %v4950
  %v5138 = vunpack.c.l.b16 %v4964
  %v5139 = vunpack.c.l.b16 %v4978
  %v5140 = vunpack.c.l.b16 %v4992
  %v5141 = vunpack.c.l.b16 %v5006
  %v5142 = vunpack.c.l.b16 %v5020
  %v5143 = vunpack.c.l.b16 %v5034
  %v5144 = vunpack.c.l.b16 %v5048
  %v5145 = vunpack.c.l.b16 %v5062
  %v5146 = vunpack.c.l.b16 %v5076
  %v5147 = vunpack.c.l.b16 %v5090
  %v5148 = vunpack.c.l.b16 %v5104
  %v5149 = vunpack.c.l.b16 %v5118
  %v5150 = vunpack.c.l.b16 %v5132
  %v5151 = vpack.c.b16 %v5136, %v5135
  %v5152 = vpack.c.b16 %v5138, %v5137
  %v5153 = vpack.c.b16 %v5140, %v5139
  %v5154 = vpack.c.b16 %v5142, %v5141
  %v5155 = vpack.c.b16 %v5144, %v5143
  %v5156 = vpack.c.b16 %v5146, %v5145
  %v5157 = vpack.c.b16 %v5148, %v5147
  %v5158 = vpack.c.b16 %v5150, %v5149
  %v5160 = vsel %vm3212, %v5151, 0
  %v5163 = vsel %vm3212, %v5152, 0
  %v5166 = vsel %vm3212, %v5153, 0
  %v5169 = vsel %vm3212, %v5154, 0
  %v5172 = vsel %vm3212, %v5155, 0
  %v5175 = vsel %vm3212, %v5156, 0
  %v5178 = vsel %vm3212, %v5157, 0
  %v5181 = vsel %vm3212, %v5158, 0
  %v5184 = vsel %vm4136, %v5134, 0
  %5186 = vmatprep.subr.bf16.mxu0 0
  %5187 = vmatpush1.bf16.msra.mxu0 0
  %5188 = vmatprep.subr.bf16.mxu0 0
  %5189 = vmatpush1.bf16.msra.mxu0 0
  %5190 = vmatprep.subr.bf16.mxu0 0
  %5191 = vmatpush1.bf16.msra.mxu0 0
  %5192 = vmatprep.subr.bf16.mxu0 0
  %5193 = vmatpush1.bf16.msra.mxu0 0
  %5194 = vmatprep.subr.bf16.mxu0 0
  %5195 = vmatpush1.bf16.msra.mxu0 0
  %5196 = vmatprep.subr.bf16.mxu0 0
  %5197 = vmatpush1.bf16.msra.mxu0 0
  %5198 = vmatprep.subr.bf16.mxu0 0
  %5199 = vmatpush1.bf16.msra.mxu0 0
  %5200 = vmatprep.subr.bf16.mxu0 0
  %5201 = vmatpush1.bf16.msra.mxu0 %v5184
  %5202 = vmatprep.subr.bf16.mxu0 0
  %5203 = vmatpush2.bf16.msra.mxu0 0
  %5204 = vmatprep.subr.bf16.mxu0 0
  %5205 = vmatpush2.bf16.msra.mxu0 0
  %5206 = vmatprep.subr.bf16.mxu0 0
  %5207 = vmatpush2.bf16.msra.mxu0 0
  %5208 = vmatprep.subr.bf16.mxu0 0
  %5209 = vmatpush2.bf16.msra.mxu0 0
  %5210 = vmatprep.subr.bf16.mxu0 0
  %5211 = vmatpush2.bf16.msra.mxu0 0
  %5212 = vmatprep.subr.bf16.mxu0 0
  %5213 = vmatpush2.bf16.msra.mxu0 0
  %5214 = vmatprep.subr.bf16.mxu0 0
  %5215 = vmatpush2.bf16.msra.mxu0 0
  %5216 = vmatprep.subr.bf16.mxu0 0
  %5217 = vmatpush2.bf16.msra.mxu0 0
  %5218 = vmatprep.mubr.bf16.mxu0 0
  %5219 = vmatmul.mubr.bf16.gmra.mxu0 %v5160
  %v5220 = vpop.f32.mrf.mxu0
  %v5221 = vadd.f32 0.0, %v5220
  %v5222 = vpop.f32.mrf.mxu0
  %v5223 = vpop.f32.mrf.mxu0
  %v5224 = vadd.f32 0.0, %v5223
  %v5225 = vpop.f32.mrf.mxu0
  %5226 = vmatprep.mubr.bf16.mxu0 0
  %5227 = vmatmul.mubr.bf16.gmra.mxu0 %v5163
  %v5228 = vpop.f32.mrf.mxu0
  %v5229 = vadd.f32 0.0, %v5228
  %v5230 = vpop.f32.mrf.mxu0
  %v5231 = vpop.f32.mrf.mxu0
  %v5232 = vadd.f32 0.0, %v5231
  %v5233 = vpop.f32.mrf.mxu0
  %5234 = vmatprep.mubr.bf16.mxu0 0
  %5235 = vmatmul.mubr.bf16.gmra.mxu0 %v5166
  %v5236 = vpop.f32.mrf.mxu0
  %v5237 = vadd.f32 0.0, %v5236
  %v5238 = vpop.f32.mrf.mxu0
  %v5239 = vpop.f32.mrf.mxu0
  %v5240 = vadd.f32 0.0, %v5239
  %v5241 = vpop.f32.mrf.mxu0
  %5242 = vmatprep.mubr.bf16.mxu0 0
  %5243 = vmatmul.mubr.bf16.gmra.mxu0 %v5169
  %v5244 = vpop.f32.mrf.mxu0
  %v5245 = vadd.f32 0.0, %v5244
  %v5246 = vpop.f32.mrf.mxu0
  %v5247 = vpop.f32.mrf.mxu0
  %v5248 = vadd.f32 0.0, %v5247
  %v5249 = vpop.f32.mrf.mxu0
  %5250 = vmatprep.mubr.bf16.mxu0 0
  %5251 = vmatmul.mubr.bf16.gmra.mxu0 %v5172
  %v5252 = vpop.f32.mrf.mxu0
  %v5253 = vadd.f32 0.0, %v5252
  %v5254 = vpop.f32.mrf.mxu0
  %v5255 = vpop.f32.mrf.mxu0
  %v5256 = vadd.f32 0.0, %v5255
  %v5257 = vpop.f32.mrf.mxu0
  %5258 = vmatprep.mubr.bf16.mxu0 0
  %5259 = vmatmul.mubr.bf16.gmra.mxu0 %v5175
  %v5260 = vpop.f32.mrf.mxu0
  %v5261 = vadd.f32 0.0, %v5260
  %v5262 = vpop.f32.mrf.mxu0
  %v5263 = vpop.f32.mrf.mxu0
  %v5264 = vadd.f32 0.0, %v5263
  %v5265 = vpop.f32.mrf.mxu0
  %5266 = vmatprep.mubr.bf16.mxu0 0
  %5267 = vmatmul.mubr.bf16.gmra.mxu0 %v5178
  %v5268 = vpop.f32.mrf.mxu0
  %v5269 = vadd.f32 0.0, %v5268
  %v5270 = vpop.f32.mrf.mxu0
  %v5271 = vpop.f32.mrf.mxu0
  %v5272 = vadd.f32 0.0, %v5271
  %v5273 = vpop.f32.mrf.mxu0
  %5274 = vmatprep.mubr.bf16.mxu0 0
  %5275 = vmatmul.mubr.bf16.gmra.mxu0 %v5181
  %v5276 = vpop.f32.mrf.mxu0
  %v5277 = vadd.f32 0.0, %v5276
  %v5278 = vpop.f32.mrf.mxu0
  %v5279 = vpop.f32.mrf.mxu0
  %v5280 = vadd.f32 0.0, %v5279
  %v5281 = vpop.f32.mrf.mxu0
  %5282 = vdwg.mxu0
  %v5283 = vadd.f32 %v4861, %v5221
  %v5284 = vadd.f32 %v4862, %v5224
  %v5285 = vadd.f32 %v4863, %v5229
  %v5286 = vadd.f32 %v4864, %v5232
  %v5287 = vadd.f32 %v4865, %v5237
  %v5288 = vadd.f32 %v4866, %v5240
  %v5289 = vadd.f32 %v4867, %v5245
  %v5290 = vadd.f32 %v4868, %v5248
  %v5291 = vadd.f32 %v4869, %v5253
  %v5292 = vadd.f32 %v4870, %v5256
  %v5293 = vadd.f32 %v4871, %v5261
  %v5294 = vadd.f32 %v4872, %v5264
  %v5295 = vadd.f32 %v4873, %v5269
  %v5296 = vadd.f32 %v4874, %v5272
  %v5297 = vadd.f32 %v4875, %v5277
  %v5298 = vadd.f32 %v4876, %v5280
  %v5299 = vld [vmem:[%s3730] sm:$0xe]
  %v5300 = vld [vmem:[%s3730 + $0x8] sm:$0xe]
  %v5301 = vld [vmem:[%s3730 + $0x10] sm:$0xe]
  %v5302 = vld [vmem:[%s3730 + $0x18] sm:$0xe]
  %v5303 = vld [vmem:[%s3730 + $0x20] sm:$0xe]
  %v5304 = vld [vmem:[%s3730 + $0x28] sm:$0xe]
  %v5305 = vld [vmem:[%s3730 + $0x30] sm:$0xe]
  %v5306 = vld [vmem:[%s3730 + $0x38] sm:$0xe]
  %v5307 = vld [vmem:[%s3730 + $0x50] sm:$0xe]
  %v5308 = vld [vmem:[%s3730 + $0x58] sm:$0xe]
  %v5309 = vld [vmem:[%s3730 + $0x60] sm:$0xe]
  %v5310 = vld [vmem:[%s3730 + $0x68] sm:$0xe]
  %v5311 = vld [vmem:[%s3730 + $0x70] sm:$0xe]
  %v5312 = vld [vmem:[%s3730 + $0x78] sm:$0xe]
  %v5313 = vld [vmem:[%s3730 + $0x80] sm:$0xe]
  %v5314 = vld [vmem:[%s3730 + $0x88] sm:$0xe]
  %v5347 = vrot.slane %v5299, 5
  %v5348 = vrot.slane %v5347, 4
  %v5349 = vrot.slane %v4878, 5
  %v5350 = vsel %vm1182, %v5348, %v5349
  %v5351 = vrot.slane %v5300, 5
  %v5352 = vrot.slane %v5351, 4
  %v5353 = vrot.slane %v4880, 5
  %v5354 = vsel %vm1182, %v5352, %v5353
  %v5355 = vrot.slane %v5301, 5
  %v5356 = vrot.slane %v5355, 4
  %v5357 = vrot.slane %v4882, 5
  %v5358 = vsel %vm1182, %v5356, %v5357
  %v5359 = vrot.slane %v5302, 5
  %v5360 = vrot.slane %v5359, 4
  %v5361 = vrot.slane %v4884, 5
  %v5362 = vsel %vm1182, %v5360, %v5361
  %v5363 = vrot.slane %v5303, 5
  %v5364 = vrot.slane %v5363, 4
  %v5365 = vrot.slane %v4886, 5
  %v5366 = vsel %vm1182, %v5364, %v5365
  %v5367 = vrot.slane %v5304, 5
  %v5368 = vrot.slane %v5367, 4
  %v5369 = vrot.slane %v4888, 5
  %v5370 = vsel %vm1182, %v5368, %v5369
  %v5371 = vrot.slane %v5305, 5
  %v5372 = vrot.slane %v5371, 4
  %v5373 = vrot.slane %v4890, 5
  %v5374 = vsel %vm1182, %v5372, %v5373
  %v5375 = vrot.slane %v5306, 5
  %v5376 = vrot.slane %v5375, 4
  %v5377 = vrot.slane %v4892, 5
  %v5378 = vsel %vm1182, %v5376, %v5377
  %v5379 = vrot.slane %v5307, 5
  %v5380 = vrot.slane %v5379, 4
  %v5381 = vrot.slane %v4894, 5
  %v5382 = vsel %vm1182, %v5380, %v5381
  %v5383 = vrot.slane %v5308, 5
  %v5384 = vrot.slane %v5383, 4
  %v5385 = vrot.slane %v4896, 5
  %v5386 = vsel %vm1182, %v5384, %v5385
  %v5387 = vrot.slane %v5309, 5
  %v5388 = vrot.slane %v5387, 4
  %v5389 = vrot.slane %v4898, 5
  %v5390 = vsel %vm1182, %v5388, %v5389
  %v5391 = vrot.slane %v5310, 5
  %v5392 = vrot.slane %v5391, 4
  %v5393 = vrot.slane %v4900, 5
  %v5394 = vsel %vm1182, %v5392, %v5393
  %v5395 = vrot.slane %v5311, 5
  %v5396 = vrot.slane %v5395, 4
  %v5397 = vrot.slane %v4902, 5
  %v5398 = vsel %vm1182, %v5396, %v5397
  %v5399 = vrot.slane %v5312, 5
  %v5400 = vrot.slane %v5399, 4
  %v5401 = vrot.slane %v4904, 5
  %v5402 = vsel %vm1182, %v5400, %v5401
  %v5403 = vrot.slane %v5313, 5
  %v5404 = vrot.slane %v5403, 4
  %v5405 = vrot.slane %v4906, 5
  %v5406 = vsel %vm1182, %v5404, %v5405
  %v5407 = vrot.slane %v5314, 5
  %v5408 = vrot.slane %v5407, 4
  %v5409 = vrot.slane %v4908, 5
  %v5410 = vsel %vm1182, %v5408, %v5409
  %s5411 = scalar_lea.vmem %s4, 20
  %v5412 = vld [vmem:[%s5411] sm:$0xf]
  %v5413 = vunpack.c.l.b16 %v5350
  %v5414 = vunpack.c.l.b16 %v5354
  %v5415 = vunpack.c.l.b16 %v5358
  %v5416 = vunpack.c.l.b16 %v5362
  %v5417 = vunpack.c.l.b16 %v5366
  %v5418 = vunpack.c.l.b16 %v5370
  %v5419 = vunpack.c.l.b16 %v5374
  %v5420 = vunpack.c.l.b16 %v5378
  %v5421 = vunpack.c.l.b16 %v5382
  %v5422 = vunpack.c.l.b16 %v5386
  %v5423 = vunpack.c.l.b16 %v5390
  %v5424 = vunpack.c.l.b16 %v5394
  %v5425 = vunpack.c.l.b16 %v5398
  %v5426 = vunpack.c.l.b16 %v5402
  %v5427 = vunpack.c.l.b16 %v5406
  %v5428 = vunpack.c.l.b16 %v5410
  %v5429 = vpack.c.b16 %v5414, %v5413
  %v5430 = vpack.c.b16 %v5416, %v5415
  %v5431 = vpack.c.b16 %v5418, %v5417
  %v5432 = vpack.c.b16 %v5420, %v5419
  %v5433 = vpack.c.b16 %v5422, %v5421
  %v5434 = vpack.c.b16 %v5424, %v5423
  %v5435 = vpack.c.b16 %v5426, %v5425
  %v5436 = vpack.c.b16 %v5428, %v5427
  %v5438 = vsel %vm3212, %v5429, 0
  %v5441 = vsel %vm3212, %v5430, 0
  %v5444 = vsel %vm3212, %v5431, 0
  %v5447 = vsel %vm3212, %v5432, 0
  %v5450 = vsel %vm3212, %v5433, 0
  %v5453 = vsel %vm3212, %v5434, 0
  %v5456 = vsel %vm3212, %v5435, 0
  %v5459 = vsel %vm3212, %v5436, 0
  %v5462 = vsel %vm4136, %v5412, 0
  %5464 = vmatprep.subr.bf16.mxu0 0
  %5465 = vmatpush1.bf16.msra.mxu0 0
  %5466 = vmatprep.subr.bf16.mxu0 0
  %5467 = vmatpush1.bf16.msra.mxu0 0
  %5468 = vmatprep.subr.bf16.mxu0 0
  %5469 = vmatpush1.bf16.msra.mxu0 0
  %5470 = vmatprep.subr.bf16.mxu0 0
  %5471 = vmatpush1.bf16.msra.mxu0 0
  %5472 = vmatprep.subr.bf16.mxu0 0
  %5473 = vmatpush1.bf16.msra.mxu0 0
  %5474 = vmatprep.subr.bf16.mxu0 0
  %5475 = vmatpush1.bf16.msra.mxu0 0
  %5476 = vmatprep.subr.bf16.mxu0 0
  %5477 = vmatpush1.bf16.msra.mxu0 0
  %5478 = vmatprep.subr.bf16.mxu0 0
  %5479 = vmatpush1.bf16.msra.mxu0 %v5462
  %5480 = vmatprep.subr.bf16.mxu0 0
  %5481 = vmatpush2.bf16.msra.mxu0 0
  %5482 = vmatprep.subr.bf16.mxu0 0
  %5483 = vmatpush2.bf16.msra.mxu0 0
  %5484 = vmatprep.subr.bf16.mxu0 0
  %5485 = vmatpush2.bf16.msra.mxu0 0
  %5486 = vmatprep.subr.bf16.mxu0 0
  %5487 = vmatpush2.bf16.msra.mxu0 0
  %5488 = vmatprep.subr.bf16.mxu0 0
  %5489 = vmatpush2.bf16.msra.mxu0 0
  %5490 = vmatprep.subr.bf16.mxu0 0
  %5491 = vmatpush2.bf16.msra.mxu0 0
  %5492 = vmatprep.subr.bf16.mxu0 0
  %5493 = vmatpush2.bf16.msra.mxu0 0
  %5494 = vmatprep.subr.bf16.mxu0 0
  %5495 = vmatpush2.bf16.msra.mxu0 0
  %5496 = vmatprep.mubr.bf16.mxu0 0
  %5497 = vmatmul.mubr.bf16.gmra.mxu0 %v5438
  %v5498 = vpop.f32.mrf.mxu0
  %v5499 = vadd.f32 0.0, %v5498
  %v5500 = vpop.f32.mrf.mxu0
  %v5501 = vpop.f32.mrf.mxu0
  %v5502 = vadd.f32 0.0, %v5501
  %v5503 = vpop.f32.mrf.mxu0
  %5504 = vmatprep.mubr.bf16.mxu0 0
  %5505 = vmatmul.mubr.bf16.gmra.mxu0 %v5441
  %v5506 = vpop.f32.mrf.mxu0
  %v5507 = vadd.f32 0.0, %v5506
  %v5508 = vpop.f32.mrf.mxu0
  %v5509 = vpop.f32.mrf.mxu0
  %v5510 = vadd.f32 0.0, %v5509
  %v5511 = vpop.f32.mrf.mxu0
  %5512 = vmatprep.mubr.bf16.mxu0 0
  %5513 = vmatmul.mubr.bf16.gmra.mxu0 %v5444
  %v5514 = vpop.f32.mrf.mxu0
  %v5515 = vadd.f32 0.0, %v5514
  %v5516 = vpop.f32.mrf.mxu0
  %v5517 = vpop.f32.mrf.mxu0
  %v5518 = vadd.f32 0.0, %v5517
  %v5519 = vpop.f32.mrf.mxu0
  %5520 = vmatprep.mubr.bf16.mxu0 0
  %5521 = vmatmul.mubr.bf16.gmra.mxu0 %v5447
  %v5522 = vpop.f32.mrf.mxu0
  %v5523 = vadd.f32 0.0, %v5522
  %v5524 = vpop.f32.mrf.mxu0
  %v5525 = vpop.f32.mrf.mxu0
  %v5526 = vadd.f32 0.0, %v5525
  %v5527 = vpop.f32.mrf.mxu0
  %5528 = vmatprep.mubr.bf16.mxu0 0
  %5529 = vmatmul.mubr.bf16.gmra.mxu0 %v5450
  %v5530 = vpop.f32.mrf.mxu0
  %v5531 = vadd.f32 0.0, %v5530
  %v5532 = vpop.f32.mrf.mxu0
  %v5533 = vpop.f32.mrf.mxu0
  %v5534 = vadd.f32 0.0, %v5533
  %v5535 = vpop.f32.mrf.mxu0
  %5536 = vmatprep.mubr.bf16.mxu0 0
  %5537 = vmatmul.mubr.bf16.gmra.mxu0 %v5453
  %v5538 = vpop.f32.mrf.mxu0
  %v5539 = vadd.f32 0.0, %v5538
  %v5540 = vpop.f32.mrf.mxu0
  %v5541 = vpop.f32.mrf.mxu0
  %v5542 = vadd.f32 0.0, %v5541
  %v5543 = vpop.f32.mrf.mxu0
  %5544 = vmatprep.mubr.bf16.mxu0 0
  %5545 = vmatmul.mubr.bf16.gmra.mxu0 %v5456
  %v5546 = vpop.f32.mrf.mxu0
  %v5547 = vadd.f32 0.0, %v5546
  %v5548 = vpop.f32.mrf.mxu0
  %v5549 = vpop.f32.mrf.mxu0
  %v5550 = vadd.f32 0.0, %v5549
  %v5551 = vpop.f32.mrf.mxu0
  %5552 = vmatprep.mubr.bf16.mxu0 0
  %5553 = vmatmul.mubr.bf16.gmra.mxu0 %v5459
  %v5554 = vpop.f32.mrf.mxu0
  %v5555 = vadd.f32 0.0, %v5554
  %v5556 = vpop.f32.mrf.mxu0
  %v5557 = vpop.f32.mrf.mxu0
  %v5558 = vadd.f32 0.0, %v5557
  %v5559 = vpop.f32.mrf.mxu0
  %5560 = vdwg.mxu0
  %v5561 = vadd.f32 %v5283, %v5499
  %v5562 = vadd.f32 %v5284, %v5502
  %v5563 = vadd.f32 %v5285, %v5507
  %v5564 = vadd.f32 %v5286, %v5510
  %v5565 = vadd.f32 %v5287, %v5515
  %v5566 = vadd.f32 %v5288, %v5518
  %v5567 = vadd.f32 %v5289, %v5523
  %v5568 = vadd.f32 %v5290, %v5526
  %v5569 = vadd.f32 %v5291, %v5531
  %v5570 = vadd.f32 %v5292, %v5534
  %v5571 = vadd.f32 %v5293, %v5539
  %v5572 = vadd.f32 %v5294, %v5542
  %v5573 = vadd.f32 %v5295, %v5547
  %v5574 = vadd.f32 %v5296, %v5550
  %v5575 = vadd.f32 %v5297, %v5555
  %v5576 = vadd.f32 %v5298, %v5558
  %s5577 = scalar_lea.vmem [#allocation3], 16
  %v5578 = vld [vmem:[%s5577] sm:$0xf]
  %v5579 = vld [vmem:[%s5577 + $0x8] sm:$0xf]
  %v5580 = vld [vmem:[%s5577 + $0x10] sm:$0xf]
  %v5581 = vld [vmem:[%s5577 + $0x18] sm:$0xf]
  %v5582 = vld [vmem:[%s5577 + $0x20] sm:$0xf]
  %v5583 = vld [vmem:[%s5577 + $0x28] sm:$0xf]
  %v5584 = vld [vmem:[%s5577 + $0x30] sm:$0xf]
  %v5585 = vld [vmem:[%s5577 + $0x38] sm:$0xf]
  %v5586 = vld [vmem:[%s5577 + $0x50] sm:$0xf]
  %v5587 = vld [vmem:[%s5577 + $0x58] sm:$0xf]
  %v5588 = vld [vmem:[%s5577 + $0x60] sm:$0xf]
  %v5589 = vld [vmem:[%s5577 + $0x68] sm:$0xf]
  %v5590 = vld [vmem:[%s5577 + $0x70] sm:$0xf]
  %v5591 = vld [vmem:[%s5577 + $0x78] sm:$0xf]
  %v5592 = vld [vmem:[%s5577 + $0x80] sm:$0xf]
  %v5593 = vld [vmem:[%s5577 + $0x88] sm:$0xf]
  %s5594 = scalar_lea.vmem %s4, 24
  %v5595 = vld [vmem:[%s5594] sm:$0xf]
  %v5612 = vunpack.c.l.b16 %v5578
  %v5613 = vunpack.c.l.b16 %v5579
  %v5614 = vunpack.c.l.b16 %v5580
  %v5615 = vunpack.c.l.b16 %v5581
  %v5616 = vunpack.c.l.b16 %v5582
  %v5617 = vunpack.c.l.b16 %v5583
  %v5618 = vunpack.c.l.b16 %v5584
  %v5619 = vunpack.c.l.b16 %v5585
  %v5620 = vunpack.c.l.b16 %v5586
  %v5621 = vunpack.c.l.b16 %v5587
  %v5622 = vunpack.c.l.b16 %v5588
  %v5623 = vunpack.c.l.b16 %v5589
  %v5624 = vunpack.c.l.b16 %v5590
  %v5625 = vunpack.c.l.b16 %v5591
  %v5626 = vunpack.c.l.b16 %v5592
  %v5627 = vunpack.c.l.b16 %v5593
  %v5628 = vpack.c.b16 %v5613, %v5612
  %v5629 = vpack.c.b16 %v5615, %v5614
  %v5630 = vpack.c.b16 %v5617, %v5616
  %v5631 = vpack.c.b16 %v5619, %v5618
  %v5632 = vpack.c.b16 %v5621, %v5620
  %v5633 = vpack.c.b16 %v5623, %v5622
  %v5634 = vpack.c.b16 %v5625, %v5624
  %v5635 = vpack.c.b16 %v5627, %v5626
  %v5637 = vsel %vm3212, %v5628, 0
  %v5640 = vsel %vm3212, %v5629, 0
  %v5643 = vsel %vm3212, %v5630, 0
  %v5646 = vsel %vm3212, %v5631, 0
  %v5649 = vsel %vm3212, %v5632, 0
  %v5652 = vsel %vm3212, %v5633, 0
  %v5655 = vsel %vm3212, %v5634, 0
  %v5658 = vsel %vm3212, %v5635, 0
  %v5661 = vsel %vm4136, %v5595, 0
  %5663 = vmatprep.subr.bf16.mxu0 0
  %5664 = vmatpush1.bf16.msra.mxu0 0
  %5665 = vmatprep.subr.bf16.mxu0 0
  %5666 = vmatpush1.bf16.msra.mxu0 0
  %5667 = vmatprep.subr.bf16.mxu0 0
  %5668 = vmatpush1.bf16.msra.mxu0 0
  %5669 = vmatprep.subr.bf16.mxu0 0
  %5670 = vmatpush1.bf16.msra.mxu0 0
  %5671 = vmatprep.subr.bf16.mxu0 0
  %5672 = vmatpush1.bf16.msra.mxu0 0
  %5673 = vmatprep.subr.bf16.mxu0 0
  %5674 = vmatpush1.bf16.msra.mxu0 0
  %5675 = vmatprep.subr.bf16.mxu0 0
  %5676 = vmatpush1.bf16.msra.mxu0 0
  %5677 = vmatprep.subr.bf16.mxu0 0
  %5678 = vmatpush1.bf16.msra.mxu0 %v5661
  %5679 = vmatprep.subr.bf16.mxu0 0
  %5680 = vmatpush2.bf16.msra.mxu0 0
  %5681 = vmatprep.subr.bf16.mxu0 0
  %5682 = vmatpush2.bf16.msra.mxu0 0
  %5683 = vmatprep.subr.bf16.mxu0 0
  %5684 = vmatpush2.bf16.msra.mxu0 0
  %5685 = vmatprep.subr.bf16.mxu0 0
  %5686 = vmatpush2.bf16.msra.mxu0 0
  %5687 = vmatprep.subr.bf16.mxu0 0
  %5688 = vmatpush2.bf16.msra.mxu0 0
  %5689 = vmatprep.subr.bf16.mxu0 0
  %5690 = vmatpush2.bf16.msra.mxu0 0
  %5691 = vmatprep.subr.bf16.mxu0 0
  %5692 = vmatpush2.bf16.msra.mxu0 0
  %5693 = vmatprep.subr.bf16.mxu0 0
  %5694 = vmatpush2.bf16.msra.mxu0 0
  %5695 = vmatprep.mubr.bf16.mxu0 0
  %5696 = vmatmul.mubr.bf16.gmra.mxu0 %v5637
  %v5697 = vpop.f32.mrf.mxu0
  %v5698 = vadd.f32 0.0, %v5697
  %v5699 = vpop.f32.mrf.mxu0
  %v5700 = vpop.f32.mrf.mxu0
  %v5701 = vadd.f32 0.0, %v5700
  %v5702 = vpop.f32.mrf.mxu0
  %5703 = vmatprep.mubr.bf16.mxu0 0
  %5704 = vmatmul.mubr.bf16.gmra.mxu0 %v5640
  %v5705 = vpop.f32.mrf.mxu0
  %v5706 = vadd.f32 0.0, %v5705
  %v5707 = vpop.f32.mrf.mxu0
  %v5708 = vpop.f32.mrf.mxu0
  %v5709 = vadd.f32 0.0, %v5708
  %v5710 = vpop.f32.mrf.mxu0
  %5711 = vmatprep.mubr.bf16.mxu0 0
  %5712 = vmatmul.mubr.bf16.gmra.mxu0 %v5643
  %v5713 = vpop.f32.mrf.mxu0
  %v5714 = vadd.f32 0.0, %v5713
  %v5715 = vpop.f32.mrf.mxu0
  %v5716 = vpop.f32.mrf.mxu0
  %v5717 = vadd.f32 0.0, %v5716
  %v5718 = vpop.f32.mrf.mxu0
  %5719 = vmatprep.mubr.bf16.mxu0 0
  %5720 = vmatmul.mubr.bf16.gmra.mxu0 %v5646
  %v5721 = vpop.f32.mrf.mxu0
  %v5722 = vadd.f32 0.0, %v5721
  %v5723 = vpop.f32.mrf.mxu0
  %v5724 = vpop.f32.mrf.mxu0
  %v5725 = vadd.f32 0.0, %v5724
  %v5726 = vpop.f32.mrf.mxu0
  %5727 = vmatprep.mubr.bf16.mxu0 0
  %5728 = vmatmul.mubr.bf16.gmra.mxu0 %v5649
  %v5729 = vpop.f32.mrf.mxu0
  %v5730 = vadd.f32 0.0, %v5729
  %v5731 = vpop.f32.mrf.mxu0
  %v5732 = vpop.f32.mrf.mxu0
  %v5733 = vadd.f32 0.0, %v5732
  %v5734 = vpop.f32.mrf.mxu0
  %5735 = vmatprep.mubr.bf16.mxu0 0
  %5736 = vmatmul.mubr.bf16.gmra.mxu0 %v5652
  %v5737 = vpop.f32.mrf.mxu0
  %v5738 = vadd.f32 0.0, %v5737
  %v5739 = vpop.f32.mrf.mxu0
  %v5740 = vpop.f32.mrf.mxu0
  %v5741 = vadd.f32 0.0, %v5740
  %v5742 = vpop.f32.mrf.mxu0
  %5743 = vmatprep.mubr.bf16.mxu0 0
  %5744 = vmatmul.mubr.bf16.gmra.mxu0 %v5655
  %v5745 = vpop.f32.mrf.mxu0
  %v5746 = vadd.f32 0.0, %v5745
  %v5747 = vpop.f32.mrf.mxu0
  %v5748 = vpop.f32.mrf.mxu0
  %v5749 = vadd.f32 0.0, %v5748
  %v5750 = vpop.f32.mrf.mxu0
  %5751 = vmatprep.mubr.bf16.mxu0 0
  %5752 = vmatmul.mubr.bf16.gmra.mxu0 %v5658
  %v5753 = vpop.f32.mrf.mxu0
  %v5754 = vadd.f32 0.0, %v5753
  %v5755 = vpop.f32.mrf.mxu0
  %v5756 = vpop.f32.mrf.mxu0
  %v5757 = vadd.f32 0.0, %v5756
  %v5758 = vpop.f32.mrf.mxu0
  %5759 = vdwg.mxu0
  %v5760 = vadd.f32 %v5561, %v5698
  %v5761 = vadd.f32 %v5562, %v5701
  %v5762 = vadd.f32 %v5563, %v5706
  %v5763 = vadd.f32 %v5564, %v5709
  %v5764 = vadd.f32 %v5565, %v5714
  %v5765 = vadd.f32 %v5566, %v5717
  %v5766 = vadd.f32 %v5567, %v5722
  %v5767 = vadd.f32 %v5568, %v5725
  %v5768 = vadd.f32 %v5569, %v5730
  %v5769 = vadd.f32 %v5570, %v5733
  %v5770 = vadd.f32 %v5571, %v5738
  %v5771 = vadd.f32 %v5572, %v5741
  %v5772 = vadd.f32 %v5573, %v5746
  %v5773 = vadd.f32 %v5574, %v5749
  %v5774 = vadd.f32 %v5575, %v5754
  %v5775 = vadd.f32 %v5576, %v5757
  %v5776 = vld [vmem:[%s5577] sm:$0xf]
  %v5777 = vld [vmem:[%s5577 + $0x4] sm:$0x1]
  %v5778 = vld [vmem:[%s5577 + $0x8] sm:$0xf]
  %v5779 = vld [vmem:[%s5577 + $0xc] sm:$0x1]
  %v5780 = vld [vmem:[%s5577 + $0x10] sm:$0xf]
  %v5781 = vld [vmem:[%s5577 + $0x14] sm:$0x1]
  %v5782 = vld [vmem:[%s5577 + $0x18] sm:$0xf]
  %v5783 = vld [vmem:[%s5577 + $0x1c] sm:$0x1]
  %v5784 = vld [vmem:[%s5577 + $0x20] sm:$0xf]
  %v5785 = vld [vmem:[%s5577 + $0x24] sm:$0x1]
  %v5786 = vld [vmem:[%s5577 + $0x28] sm:$0xf]
  %v5787 = vld [vmem:[%s5577 + $0x2c] sm:$0x1]
  %v5788 = vld [vmem:[%s5577 + $0x30] sm:$0xf]
  %v5789 = vld [vmem:[%s5577 + $0x34] sm:$0x1]
  %v5790 = vld [vmem:[%s5577 + $0x38] sm:$0xf]
  %v5791 = vld [vmem:[%s5577 + $0x3c] sm:$0x1]
  %v5792 = vld [vmem:[%s5577 + $0x50] sm:$0xf]
  %v5793 = vld [vmem:[%s5577 + $0x54] sm:$0x1]
  %v5794 = vld [vmem:[%s5577 + $0x58] sm:$0xf]
  %v5795 = vld [vmem:[%s5577 + $0x5c] sm:$0x1]
  %v5796 = vld [vmem:[%s5577 + $0x60] sm:$0xf]
  %v5797 = vld [vmem:[%s5577 + $0x64] sm:$0x1]
  %v5798 = vld [vmem:[%s5577 + $0x68] sm:$0xf]
  %v5799 = vld [vmem:[%s5577 + $0x6c] sm:$0x1]
  %v5800 = vld [vmem:[%s5577 + $0x70] sm:$0xf]
  %v5801 = vld [vmem:[%s5577 + $0x74] sm:$0x1]
  %v5802 = vld [vmem:[%s5577 + $0x78] sm:$0xf]
  %v5803 = vld [vmem:[%s5577 + $0x7c] sm:$0x1]
  %v5804 = vld [vmem:[%s5577 + $0x80] sm:$0xf]
  %v5805 = vld [vmem:[%s5577 + $0x84] sm:$0x1]
  %v5806 = vld [vmem:[%s5577 + $0x88] sm:$0xf]
  %v5807 = vld [vmem:[%s5577 + $0x8c] sm:$0x1]
  %v5809 = vshrl.u32 %v5776, 16
  %v5811 = vrot.slane %v5809, 4
  %v5812 = vshll.u32 %v5776, 16
  %v5814 = vrot.slane %v5812, 5
  %v5815 = vor.u32 %v5811, %v5814
  %v5816 = vrot.slane %v5815, 4
  %v5818 = vshll.u32 %v5777, 16
  %v5820 = vrot.slane %v5818, 5
  %v5821 = vsel %vm591, %v5816, %v5820
  %v5823 = vshrl.u32 %v5778, 16
  %v5825 = vrot.slane %v5823, 4
  %v5826 = vshll.u32 %v5778, 16
  %v5828 = vrot.slane %v5826, 5
  %v5829 = vor.u32 %v5825, %v5828
  %v5830 = vrot.slane %v5829, 4
  %v5832 = vshll.u32 %v5779, 16
  %v5834 = vrot.slane %v5832, 5
  %v5835 = vsel %vm591, %v5830, %v5834
  %v5837 = vshrl.u32 %v5780, 16
  %v5839 = vrot.slane %v5837, 4
  %v5840 = vshll.u32 %v5780, 16
  %v5842 = vrot.slane %v5840, 5
  %v5843 = vor.u32 %v5839, %v5842
  %v5844 = vrot.slane %v5843, 4
  %v5846 = vshll.u32 %v5781, 16
  %v5848 = vrot.slane %v5846, 5
  %v5849 = vsel %vm591, %v5844, %v5848
  %v5851 = vshrl.u32 %v5782, 16
  %v5853 = vrot.slane %v5851, 4
  %v5854 = vshll.u32 %v5782, 16
  %v5856 = vrot.slane %v5854, 5
  %v5857 = vor.u32 %v5853, %v5856
  %v5858 = vrot.slane %v5857, 4
  %v5860 = vshll.u32 %v5783, 16
  %v5862 = vrot.slane %v5860, 5
  %v5863 = vsel %vm591, %v5858, %v5862
  %v5865 = vshrl.u32 %v5784, 16
  %v5867 = vrot.slane %v5865, 4
  %v5868 = vshll.u32 %v5784, 16
  %v5870 = vrot.slane %v5868, 5
  %v5871 = vor.u32 %v5867, %v5870
  %v5872 = vrot.slane %v5871, 4
  %v5874 = vshll.u32 %v5785, 16
  %v5876 = vrot.slane %v5874, 5
  %v5877 = vsel %vm591, %v5872, %v5876
  %v5879 = vshrl.u32 %v5786, 16
  %v5881 = vrot.slane %v5879, 4
  %v5882 = vshll.u32 %v5786, 16
  %v5884 = vrot.slane %v5882, 5
  %v5885 = vor.u32 %v5881, %v5884
  %v5886 = vrot.slane %v5885, 4
  %v5888 = vshll.u32 %v5787, 16
  %v5890 = vrot.slane %v5888, 5
  %v5891 = vsel %vm591, %v5886, %v5890
  %v5893 = vshrl.u32 %v5788, 16
  %v5895 = vrot.slane %v5893, 4
  %v5896 = vshll.u32 %v5788, 16
  %v5898 = vrot.slane %v5896, 5
  %v5899 = vor.u32 %v5895, %v5898
  %v5900 = vrot.slane %v5899, 4
  %v5902 = vshll.u32 %v5789, 16
  %v5904 = vrot.slane %v5902, 5
  %v5905 = vsel %vm591, %v5900, %v5904
  %v5907 = vshrl.u32 %v5790, 16
  %v5909 = vrot.slane %v5907, 4
  %v5910 = vshll.u32 %v5790, 16
  %v5912 = vrot.slane %v5910, 5
  %v5913 = vor.u32 %v5909, %v5912
  %v5914 = vrot.slane %v5913, 4
  %v5916 = vshll.u32 %v5791, 16
  %v5918 = vrot.slane %v5916, 5
  %v5919 = vsel %vm591, %v5914, %v5918
  %v5921 = vshrl.u32 %v5792, 16
  %v5923 = vrot.slane %v5921, 4
  %v5924 = vshll.u32 %v5792, 16
  %v5926 = vrot.slane %v5924, 5
  %v5927 = vor.u32 %v5923, %v5926
  %v5928 = vrot.slane %v5927, 4
  %v5930 = vshll.u32 %v5793, 16
  %v5932 = vrot.slane %v5930, 5
  %v5933 = vsel %vm591, %v5928, %v5932
  %v5935 = vshrl.u32 %v5794, 16
  %v5937 = vrot.slane %v5935, 4
  %v5938 = vshll.u32 %v5794, 16
  %v5940 = vrot.slane %v5938, 5
  %v5941 = vor.u32 %v5937, %v5940
  %v5942 = vrot.slane %v5941, 4
  %v5944 = vshll.u32 %v5795, 16
  %v5946 = vrot.slane %v5944, 5
  %v5947 = vsel %vm591, %v5942, %v5946
  %v5949 = vshrl.u32 %v5796, 16
  %v5951 = vrot.slane %v5949, 4
  %v5952 = vshll.u32 %v5796, 16
  %v5954 = vrot.slane %v5952, 5
  %v5955 = vor.u32 %v5951, %v5954
  %v5956 = vrot.slane %v5955, 4
  %v5958 = vshll.u32 %v5797, 16
  %v5960 = vrot.slane %v5958, 5
  %v5961 = vsel %vm591, %v5956, %v5960
  %v5963 = vshrl.u32 %v5798, 16
  %v5965 = vrot.slane %v5963, 4
  %v5966 = vshll.u32 %v5798, 16
  %v5968 = vrot.slane %v5966, 5
  %v5969 = vor.u32 %v5965, %v5968
  %v5970 = vrot.slane %v5969, 4
  %v5972 = vshll.u32 %v5799, 16
  %v5974 = vrot.slane %v5972, 5
  %v5975 = vsel %vm591, %v5970, %v5974
  %v5977 = vshrl.u32 %v5800, 16
  %v5979 = vrot.slane %v5977, 4
  %v5980 = vshll.u32 %v5800, 16
  %v5982 = vrot.slane %v5980, 5
  %v5983 = vor.u32 %v5979, %v5982
  %v5984 = vrot.slane %v5983, 4
  %v5986 = vshll.u32 %v5801, 16
  %v5988 = vrot.slane %v5986, 5
  %v5989 = vsel %vm591, %v5984, %v5988
  %v5991 = vshrl.u32 %v5802, 16
  %v5993 = vrot.slane %v5991, 4
  %v5994 = vshll.u32 %v5802, 16
  %v5996 = vrot.slane %v5994, 5
  %v5997 = vor.u32 %v5993, %v5996
  %v5998 = vrot.slane %v5997, 4
  %v6000 = vshll.u32 %v5803, 16
  %v6002 = vrot.slane %v6000, 5
  %v6003 = vsel %vm591, %v5998, %v6002
  %v6005 = vshrl.u32 %v5804, 16
  %v6007 = vrot.slane %v6005, 4
  %v6008 = vshll.u32 %v5804, 16
  %v6010 = vrot.slane %v6008, 5
  %v6011 = vor.u32 %v6007, %v6010
  %v6012 = vrot.slane %v6011, 4
  %v6014 = vshll.u32 %v5805, 16
  %v6016 = vrot.slane %v6014, 5
  %v6017 = vsel %vm591, %v6012, %v6016
  %v6019 = vshrl.u32 %v5806, 16
  %v6021 = vrot.slane %v6019, 4
  %v6022 = vshll.u32 %v5806, 16
  %v6024 = vrot.slane %v6022, 5
  %v6025 = vor.u32 %v6021, %v6024
  %v6026 = vrot.slane %v6025, 4
  %v6028 = vshll.u32 %v5807, 16
  %v6030 = vrot.slane %v6028, 5
  %v6031 = vsel %vm591, %v6026, %v6030
  %s6032 = scalar_lea.vmem %s4, 28
  %v6033 = vld [vmem:[%s6032] sm:$0xf]
  %v6034 = vunpack.c.l.b16 %v5821
  %v6035 = vunpack.c.l.b16 %v5835
  %v6036 = vunpack.c.l.b16 %v5849
  %v6037 = vunpack.c.l.b16 %v5863
  %v6038 = vunpack.c.l.b16 %v5877
  %v6039 = vunpack.c.l.b16 %v5891
  %v6040 = vunpack.c.l.b16 %v5905
  %v6041 = vunpack.c.l.b16 %v5919
  %v6042 = vunpack.c.l.b16 %v5933
  %v6043 = vunpack.c.l.b16 %v5947
  %v6044 = vunpack.c.l.b16 %v5961
  %v6045 = vunpack.c.l.b16 %v5975
  %v6046 = vunpack.c.l.b16 %v5989
  %v6047 = vunpack.c.l.b16 %v6003
  %v6048 = vunpack.c.l.b16 %v6017
  %v6049 = vunpack.c.l.b16 %v6031
  %v6050 = vpack.c.b16 %v6035, %v6034
  %v6051 = vpack.c.b16 %v6037, %v6036
  %v6052 = vpack.c.b16 %v6039, %v6038
  %v6053 = vpack.c.b16 %v6041, %v6040
  %v6054 = vpack.c.b16 %v6043, %v6042
  %v6055 = vpack.c.b16 %v6045, %v6044
  %v6056 = vpack.c.b16 %v6047, %v6046
  %v6057 = vpack.c.b16 %v6049, %v6048
  %v6059 = vsel %vm3212, %v6050, 0
  %v6062 = vsel %vm3212, %v6051, 0
  %v6065 = vsel %vm3212, %v6052, 0
  %v6068 = vsel %vm3212, %v6053, 0
  %v6071 = vsel %vm3212, %v6054, 0
  %v6074 = vsel %vm3212, %v6055, 0
  %v6077 = vsel %vm3212, %v6056, 0
  %v6080 = vsel %vm3212, %v6057, 0
  %v6083 = vsel %vm4136, %v6033, 0
  %6085 = vmatprep.subr.bf16.mxu0 0
  %6086 = vmatpush1.bf16.msra.mxu0 0
  %6087 = vmatprep.subr.bf16.mxu0 0
  %6088 = vmatpush1.bf16.msra.mxu0 0
  %6089 = vmatprep.subr.bf16.mxu0 0
  %6090 = vmatpush1.bf16.msra.mxu0 0
  %6091 = vmatprep.subr.bf16.mxu0 0
  %6092 = vmatpush1.bf16.msra.mxu0 0
  %6093 = vmatprep.subr.bf16.mxu0 0
  %6094 = vmatpush1.bf16.msra.mxu0 0
  %6095 = vmatprep.subr.bf16.mxu0 0
  %6096 = vmatpush1.bf16.msra.mxu0 0
  %6097 = vmatprep.subr.bf16.mxu0 0
  %6098 = vmatpush1.bf16.msra.mxu0 0
  %6099 = vmatprep.subr.bf16.mxu0 0
  %6100 = vmatpush1.bf16.msra.mxu0 %v6083
  %6101 = vmatprep.subr.bf16.mxu0 0
  %6102 = vmatpush2.bf16.msra.mxu0 0
  %6103 = vmatprep.subr.bf16.mxu0 0
  %6104 = vmatpush2.bf16.msra.mxu0 0
  %6105 = vmatprep.subr.bf16.mxu0 0
  %6106 = vmatpush2.bf16.msra.mxu0 0
  %6107 = vmatprep.subr.bf16.mxu0 0
  %6108 = vmatpush2.bf16.msra.mxu0 0
  %6109 = vmatprep.subr.bf16.mxu0 0
  %6110 = vmatpush2.bf16.msra.mxu0 0
  %6111 = vmatprep.subr.bf16.mxu0 0
  %6112 = vmatpush2.bf16.msra.mxu0 0
  %6113 = vmatprep.subr.bf16.mxu0 0
  %6114 = vmatpush2.bf16.msra.mxu0 0
  %6115 = vmatprep.subr.bf16.mxu0 0
  %6116 = vmatpush2.bf16.msra.mxu0 0
  %6117 = vmatprep.mubr.bf16.mxu0 0
  %6118 = vmatmul.mubr.bf16.gmra.mxu0 %v6059
  %v6119 = vpop.f32.mrf.mxu0
  %v6120 = vadd.f32 0.0, %v6119
  %v6121 = vpop.f32.mrf.mxu0
  %v6122 = vpop.f32.mrf.mxu0
  %v6123 = vadd.f32 0.0, %v6122
  %v6124 = vpop.f32.mrf.mxu0
  %6125 = vmatprep.mubr.bf16.mxu0 0
  %6126 = vmatmul.mubr.bf16.gmra.mxu0 %v6062
  %v6127 = vpop.f32.mrf.mxu0
  %v6128 = vadd.f32 0.0, %v6127
  %v6129 = vpop.f32.mrf.mxu0
  %v6130 = vpop.f32.mrf.mxu0
  %v6131 = vadd.f32 0.0, %v6130
  %v6132 = vpop.f32.mrf.mxu0
  %6133 = vmatprep.mubr.bf16.mxu0 0
  %6134 = vmatmul.mubr.bf16.gmra.mxu0 %v6065
  %v6135 = vpop.f32.mrf.mxu0
  %v6136 = vadd.f32 0.0, %v6135
  %v6137 = vpop.f32.mrf.mxu0
  %v6138 = vpop.f32.mrf.mxu0
  %v6139 = vadd.f32 0.0, %v6138
  %v6140 = vpop.f32.mrf.mxu0
  %6141 = vmatprep.mubr.bf16.mxu0 0
  %6142 = vmatmul.mubr.bf16.gmra.mxu0 %v6068
  %v6143 = vpop.f32.mrf.mxu0
  %v6144 = vadd.f32 0.0, %v6143
  %v6145 = vpop.f32.mrf.mxu0
  %v6146 = vpop.f32.mrf.mxu0
  %v6147 = vadd.f32 0.0, %v6146
  %v6148 = vpop.f32.mrf.mxu0
  %6149 = vmatprep.mubr.bf16.mxu0 0
  %6150 = vmatmul.mubr.bf16.gmra.mxu0 %v6071
  %v6151 = vpop.f32.mrf.mxu0
  %v6152 = vadd.f32 0.0, %v6151
  %v6153 = vpop.f32.mrf.mxu0
  %v6154 = vpop.f32.mrf.mxu0
  %v6155 = vadd.f32 0.0, %v6154
  %v6156 = vpop.f32.mrf.mxu0
  %6157 = vmatprep.mubr.bf16.mxu0 0
  %6158 = vmatmul.mubr.bf16.gmra.mxu0 %v6074
  %v6159 = vpop.f32.mrf.mxu0
  %v6160 = vadd.f32 0.0, %v6159
  %v6161 = vpop.f32.mrf.mxu0
  %v6162 = vpop.f32.mrf.mxu0
  %v6163 = vadd.f32 0.0, %v6162
  %v6164 = vpop.f32.mrf.mxu0
  %6165 = vmatprep.mubr.bf16.mxu0 0
  %6166 = vmatmul.mubr.bf16.gmra.mxu0 %v6077
  %v6167 = vpop.f32.mrf.mxu0
  %v6168 = vadd.f32 0.0, %v6167
  %v6169 = vpop.f32.mrf.mxu0
  %v6170 = vpop.f32.mrf.mxu0
  %v6171 = vadd.f32 0.0, %v6170
  %v6172 = vpop.f32.mrf.mxu0
  %6173 = vmatprep.mubr.bf16.mxu0 0
  %6174 = vmatmul.mubr.bf16.gmra.mxu0 %v6080
  %v6175 = vpop.f32.mrf.mxu0
  %v6176 = vadd.f32 0.0, %v6175
  %v6177 = vpop.f32.mrf.mxu0
  %v6178 = vpop.f32.mrf.mxu0
  %v6179 = vadd.f32 0.0, %v6178
  %v6180 = vpop.f32.mrf.mxu0
  %6181 = vdwg.mxu0
  %v6182 = vadd.f32 %v5760, %v6120
  %v6183 = vadd.f32 %v5761, %v6123
  %v6184 = vadd.f32 %v5762, %v6128
  %v6185 = vadd.f32 %v5763, %v6131
  %v6186 = vadd.f32 %v5764, %v6136
  %v6187 = vadd.f32 %v5765, %v6139
  %v6188 = vadd.f32 %v5766, %v6144
  %v6189 = vadd.f32 %v5767, %v6147
  %v6190 = vadd.f32 %v5768, %v6152
  %v6191 = vadd.f32 %v5769, %v6155
  %v6192 = vadd.f32 %v5770, %v6160
  %v6193 = vadd.f32 %v5771, %v6163
  %v6194 = vadd.f32 %v5772, %v6168
  %v6195 = vadd.f32 %v5773, %v6171
  %v6196 = vadd.f32 %v5774, %v6176
  %v6197 = vadd.f32 %v5775, %v6179
  %v6198 = vld [vmem:[%s5577] sm:$0xe]
  %v6199 = vld [vmem:[%s5577 + $0x8] sm:$0xe]
  %v6200 = vld [vmem:[%s5577 + $0x10] sm:$0xe]
  %v6201 = vld [vmem:[%s5577 + $0x18] sm:$0xe]
  %v6202 = vld [vmem:[%s5577 + $0x20] sm:$0xe]
  %v6203 = vld [vmem:[%s5577 + $0x28] sm:$0xe]
  %v6204 = vld [vmem:[%s5577 + $0x30] sm:$0xe]
  %v6205 = vld [vmem:[%s5577 + $0x38] sm:$0xe]
  %v6206 = vld [vmem:[%s5577 + $0x50] sm:$0xe]
  %v6207 = vld [vmem:[%s5577 + $0x58] sm:$0xe]
  %v6208 = vld [vmem:[%s5577 + $0x60] sm:$0xe]
  %v6209 = vld [vmem:[%s5577 + $0x68] sm:$0xe]
  %v6210 = vld [vmem:[%s5577 + $0x70] sm:$0xe]
  %v6211 = vld [vmem:[%s5577 + $0x78] sm:$0xe]
  %v6212 = vld [vmem:[%s5577 + $0x80] sm:$0xe]
  %v6213 = vld [vmem:[%s5577 + $0x88] sm:$0xe]
  %v6246 = vrot.slane %v6198, 5
  %v6247 = vrot.slane %v6246, 4
  %v6248 = vrot.slane %v5777, 5
  %v6249 = vsel %vm1182, %v6247, %v6248
  %v6250 = vrot.slane %v6199, 5
  %v6251 = vrot.slane %v6250, 4
  %v6252 = vrot.slane %v5779, 5
  %v6253 = vsel %vm1182, %v6251, %v6252
  %v6254 = vrot.slane %v6200, 5
  %v6255 = vrot.slane %v6254, 4
  %v6256 = vrot.slane %v5781, 5
  %v6257 = vsel %vm1182, %v6255, %v6256
  %v6258 = vrot.slane %v6201, 5
  %v6259 = vrot.slane %v6258, 4
  %v6260 = vrot.slane %v5783, 5
  %v6261 = vsel %vm1182, %v6259, %v6260
  %v6262 = vrot.slane %v6202, 5
  %v6263 = vrot.slane %v6262, 4
  %v6264 = vrot.slane %v5785, 5
  %v6265 = vsel %vm1182, %v6263, %v6264
  %v6266 = vrot.slane %v6203, 5
  %v6267 = vrot.slane %v6266, 4
  %v6268 = vrot.slane %v5787, 5
  %v6269 = vsel %vm1182, %v6267, %v6268
  %v6270 = vrot.slane %v6204, 5
  %v6271 = vrot.slane %v6270, 4
  %v6272 = vrot.slane %v5789, 5
  %v6273 = vsel %vm1182, %v6271, %v6272
  %v6274 = vrot.slane %v6205, 5
  %v6275 = vrot.slane %v6274, 4
  %v6276 = vrot.slane %v5791, 5
  %v6277 = vsel %vm1182, %v6275, %v6276
  %v6278 = vrot.slane %v6206, 5
  %v6279 = vrot.slane %v6278, 4
  %v6280 = vrot.slane %v5793, 5
  %v6281 = vsel %vm1182, %v6279, %v6280
  %v6282 = vrot.slane %v6207, 5
  %v6283 = vrot.slane %v6282, 4
  %v6284 = vrot.slane %v5795, 5
  %v6285 = vsel %vm1182, %v6283, %v6284
  %v6286 = vrot.slane %v6208, 5
  %v6287 = vrot.slane %v6286, 4
  %v6288 = vrot.slane %v5797, 5
  %v6289 = vsel %vm1182, %v6287, %v6288
  %v6290 = vrot.slane %v6209, 5
  %v6291 = vrot.slane %v6290, 4
  %v6292 = vrot.slane %v5799, 5
  %v6293 = vsel %vm1182, %v6291, %v6292
  %v6294 = vrot.slane %v6210, 5
  %v6295 = vrot.slane %v6294, 4
  %v6296 = vrot.slane %v5801, 5
  %v6297 = vsel %vm1182, %v6295, %v6296
  %v6298 = vrot.slane %v6211, 5
  %v6299 = vrot.slane %v6298, 4
  %v6300 = vrot.slane %v5803, 5
  %v6301 = vsel %vm1182, %v6299, %v6300
  %v6302 = vrot.slane %v6212, 5
  %v6303 = vrot.slane %v6302, 4
  %v6304 = vrot.slane %v5805, 5
  %v6305 = vsel %vm1182, %v6303, %v6304
  %v6306 = vrot.slane %v6213, 5
  %v6307 = vrot.slane %v6306, 4
  %v6308 = vrot.slane %v5807, 5
  %v6309 = vsel %vm1182, %v6307, %v6308
  %s6310 = scalar_lea.vmem %s4, 32
  %v6311 = vld [vmem:[%s6310] sm:$0xf]
  %v6312 = vunpack.c.l.b16 %v6249
  %v6313 = vunpack.c.l.b16 %v6253
  %v6314 = vunpack.c.l.b16 %v6257
  %v6315 = vunpack.c.l.b16 %v6261
  %v6316 = vunpack.c.l.b16 %v6265
  %v6317 = vunpack.c.l.b16 %v6269
  %v6318 = vunpack.c.l.b16 %v6273
  %v6319 = vunpack.c.l.b16 %v6277
  %v6320 = vunpack.c.l.b16 %v6281
  %v6321 = vunpack.c.l.b16 %v6285
  %v6322 = vunpack.c.l.b16 %v6289
  %v6323 = vunpack.c.l.b16 %v6293
  %v6324 = vunpack.c.l.b16 %v6297
  %v6325 = vunpack.c.l.b16 %v6301
  %v6326 = vunpack.c.l.b16 %v6305
  %v6327 = vunpack.c.l.b16 %v6309
  %v6328 = vpack.c.b16 %v6313, %v6312
  %v6329 = vpack.c.b16 %v6315, %v6314
  %v6330 = vpack.c.b16 %v6317, %v6316
  %v6331 = vpack.c.b16 %v6319, %v6318
  %v6332 = vpack.c.b16 %v6321, %v6320
  %v6333 = vpack.c.b16 %v6323, %v6322
  %v6334 = vpack.c.b16 %v6325, %v6324
  %v6335 = vpack.c.b16 %v6327, %v6326
  %v6337 = vsel %vm3212, %v6328, 0
  %v6340 = vsel %vm3212, %v6329, 0
  %v6343 = vsel %vm3212, %v6330, 0
  %v6346 = vsel %vm3212, %v6331, 0
  %v6349 = vsel %vm3212, %v6332, 0
  %v6352 = vsel %vm3212, %v6333, 0
  %v6355 = vsel %vm3212, %v6334, 0
  %v6358 = vsel %vm3212, %v6335, 0
  %v6361 = vsel %vm4136, %v6311, 0
  %6363 = vmatprep.subr.bf16.mxu0 0
  %6364 = vmatpush1.bf16.msra.mxu0 0
  %6365 = vmatprep.subr.bf16.mxu0 0
  %6366 = vmatpush1.bf16.msra.mxu0 0
  %6367 = vmatprep.subr.bf16.mxu0 0
  %6368 = vmatpush1.bf16.msra.mxu0 0
  %6369 = vmatprep.subr.bf16.mxu0 0
  %6370 = vmatpush1.bf16.msra.mxu0 0
  %6371 = vmatprep.subr.bf16.mxu0 0
  %6372 = vmatpush1.bf16.msra.mxu0 0
  %6373 = vmatprep.subr.bf16.mxu0 0
  %6374 = vmatpush1.bf16.msra.mxu0 0
  %6375 = vmatprep.subr.bf16.mxu0 0
  %6376 = vmatpush1.bf16.msra.mxu0 0
  %6377 = vmatprep.subr.bf16.mxu0 0
  %6378 = vmatpush1.bf16.msra.mxu0 %v6361
  %6379 = vmatprep.subr.bf16.mxu0 0
  %6380 = vmatpush2.bf16.msra.mxu0 0
  %6381 = vmatprep.subr.bf16.mxu0 0
  %6382 = vmatpush2.bf16.msra.mxu0 0
  %6383 = vmatprep.subr.bf16.mxu0 0
  %6384 = vmatpush2.bf16.msra.mxu0 0
  %6385 = vmatprep.subr.bf16.mxu0 0
  %6386 = vmatpush2.bf16.msra.mxu0 0
  %6387 = vmatprep.subr.bf16.mxu0 0
  %6388 = vmatpush2.bf16.msra.mxu0 0
  %6389 = vmatprep.subr.bf16.mxu0 0
  %6390 = vmatpush2.bf16.msra.mxu0 0
  %6391 = vmatprep.subr.bf16.mxu0 0
  %6392 = vmatpush2.bf16.msra.mxu0 0
  %6393 = vmatprep.subr.bf16.mxu0 0
  %6394 = vmatpush2.bf16.msra.mxu0 0
  %6395 = vmatprep.mubr.bf16.mxu0 0
  %6396 = vmatmul.mubr.bf16.gmra.mxu0 %v6337
  %v6397 = vpop.f32.mrf.mxu0
  %v6398 = vadd.f32 0.0, %v6397
  %v6399 = vpop.f32.mrf.mxu0
  %v6400 = vpop.f32.mrf.mxu0
  %v6401 = vadd.f32 0.0, %v6400
  %v6402 = vpop.f32.mrf.mxu0
  %6403 = vmatprep.mubr.bf16.mxu0 0
  %6404 = vmatmul.mubr.bf16.gmra.mxu0 %v6340
  %v6405 = vpop.f32.mrf.mxu0
  %v6406 = vadd.f32 0.0, %v6405
  %v6407 = vpop.f32.mrf.mxu0
  %v6408 = vpop.f32.mrf.mxu0
  %v6409 = vadd.f32 0.0, %v6408
  %v6410 = vpop.f32.mrf.mxu0
  %6411 = vmatprep.mubr.bf16.mxu0 0
  %6412 = vmatmul.mubr.bf16.gmra.mxu0 %v6343
  %v6413 = vpop.f32.mrf.mxu0
  %v6414 = vadd.f32 0.0, %v6413
  %v6415 = vpop.f32.mrf.mxu0
  %v6416 = vpop.f32.mrf.mxu0
  %v6417 = vadd.f32 0.0, %v6416
  %v6418 = vpop.f32.mrf.mxu0
  %6419 = vmatprep.mubr.bf16.mxu0 0
  %6420 = vmatmul.mubr.bf16.gmra.mxu0 %v6346
  %v6421 = vpop.f32.mrf.mxu0
  %v6422 = vadd.f32 0.0, %v6421
  %v6423 = vpop.f32.mrf.mxu0
  %v6424 = vpop.f32.mrf.mxu0
  %v6425 = vadd.f32 0.0, %v6424
  %v6426 = vpop.f32.mrf.mxu0
  %6427 = vmatprep.mubr.bf16.mxu0 0
  %6428 = vmatmul.mubr.bf16.gmra.mxu0 %v6349
  %v6429 = vpop.f32.mrf.mxu0
  %v6430 = vadd.f32 0.0, %v6429
  %v6431 = vpop.f32.mrf.mxu0
  %v6432 = vpop.f32.mrf.mxu0
  %v6433 = vadd.f32 0.0, %v6432
  %v6434 = vpop.f32.mrf.mxu0
  %6435 = vmatprep.mubr.bf16.mxu0 0
  %6436 = vmatmul.mubr.bf16.gmra.mxu0 %v6352
  %v6437 = vpop.f32.mrf.mxu0
  %v6438 = vadd.f32 0.0, %v6437
  %v6439 = vpop.f32.mrf.mxu0
  %v6440 = vpop.f32.mrf.mxu0
  %v6441 = vadd.f32 0.0, %v6440
  %v6442 = vpop.f32.mrf.mxu0
  %6443 = vmatprep.mubr.bf16.mxu0 0
  %6444 = vmatmul.mubr.bf16.gmra.mxu0 %v6355
  %v6445 = vpop.f32.mrf.mxu0
  %v6446 = vadd.f32 0.0, %v6445
  %v6447 = vpop.f32.mrf.mxu0
  %v6448 = vpop.f32.mrf.mxu0
  %v6449 = vadd.f32 0.0, %v6448
  %v6450 = vpop.f32.mrf.mxu0
  %6451 = vmatprep.mubr.bf16.mxu0 0
  %6452 = vmatmul.mubr.bf16.gmra.mxu0 %v6358
  %v6453 = vpop.f32.mrf.mxu0
  %v6454 = vadd.f32 0.0, %v6453
  %v6455 = vpop.f32.mrf.mxu0
  %v6456 = vpop.f32.mrf.mxu0
  %v6457 = vadd.f32 0.0, %v6456
  %v6458 = vpop.f32.mrf.mxu0
  %6459 = vdwg.mxu0
  %v6460 = vadd.f32 %v6182, %v6398
  %v6461 = vadd.f32 %v6183, %v6401
  %v6462 = vadd.f32 %v6184, %v6406
  %v6463 = vadd.f32 %v6185, %v6409
  %v6464 = vadd.f32 %v6186, %v6414
  %v6465 = vadd.f32 %v6187, %v6417
  %v6466 = vadd.f32 %v6188, %v6422
  %v6467 = vadd.f32 %v6189, %v6425
  %v6468 = vadd.f32 %v6190, %v6430
  %v6469 = vadd.f32 %v6191, %v6433
  %v6470 = vadd.f32 %v6192, %v6438
  %v6471 = vadd.f32 %v6193, %v6441
  %v6472 = vadd.f32 %v6194, %v6446
  %v6473 = vadd.f32 %v6195, %v6449
  %v6474 = vadd.f32 %v6196, %v6454
  %v6475 = vadd.f32 %v6197, %v6457
  %v6476 = vld [vmem:[%s5] sm:$0x1]
  %v6477 = vld [vmem:[%s6] sm:$0x1]
  %v6478 = vsel %vm3212, %v6460, 0.0
  %v6479 = vsel %vm3212, %v6461, 0.0
  %v6480 = vadd.f32 %v6478, %v6479
  %v6481 = vsel %vm3212, %v6462, 0.0
  %v6482 = vadd.f32 %v6480, %v6481
  %v6483 = vsel %vm3212, %v6463, 0.0
  %v6484 = vadd.f32 %v6482, %v6483
  %v6485 = vsel %vm3212, %v6464, 0.0
  %v6486 = vadd.f32 %v6484, %v6485
  %v6487 = vsel %vm3212, %v6465, 0.0
  %v6488 = vadd.f32 %v6486, %v6487
  %v6489 = vsel %vm3212, %v6466, 0.0
  %v6490 = vadd.f32 %v6488, %v6489
  %v6491 = vsel %vm3212, %v6467, 0.0
  %v6492 = vadd.f32 %v6490, %v6491
  %v6493 = vsel %vm3212, %v6468, 0.0
  %v6494 = vadd.f32 %v6492, %v6493
  %v6495 = vsel %vm3212, %v6469, 0.0
  %v6496 = vadd.f32 %v6494, %v6495
  %v6497 = vsel %vm3212, %v6470, 0.0
  %v6498 = vadd.f32 %v6496, %v6497
  %v6499 = vsel %vm3212, %v6471, 0.0
  %v6500 = vadd.f32 %v6498, %v6499
  %v6501 = vsel %vm3212, %v6472, 0.0
  %v6502 = vadd.f32 %v6500, %v6501
  %v6503 = vsel %vm3212, %v6473, 0.0
  %v6504 = vadd.f32 %v6502, %v6503
  %v6505 = vsel %vm3212, %v6474, 0.0
  %v6506 = vadd.f32 %v6504, %v6505
  %v6507 = vsel %vm3212, %v6475, 0.0
  %v6508 = vadd.f32 %v6506, %v6507
  %v6509 = vrot.slane %v6508, 4
  %v6510 = vadd.f32 %v6508, %v6509
  %v6511 = vrot.slane %v6510, 2
  %v6512 = vadd.f32 %v6510, %v6511
  %v6513 = vrot.slane %v6512, 1
  %v6514 = vadd.f32 %v6512, %v6513
  %v6515 = vmul.f32 %v6460, %v6460
  %v6516 = vmul.f32 %v6461, %v6461
  %v6517 = vmul.f32 %v6462, %v6462
  %v6518 = vmul.f32 %v6463, %v6463
  %v6519 = vmul.f32 %v6464, %v6464
  %v6520 = vmul.f32 %v6465, %v6465
  %v6521 = vmul.f32 %v6466, %v6466
  %v6522 = vmul.f32 %v6467, %v6467
  %v6523 = vmul.f32 %v6468, %v6468
  %v6524 = vmul.f32 %v6469, %v6469
  %v6525 = vmul.f32 %v6470, %v6470
  %v6526 = vmul.f32 %v6471, %v6471
  %v6527 = vmul.f32 %v6472, %v6472
  %v6528 = vmul.f32 %v6473, %v6473
  %v6529 = vmul.f32 %v6474, %v6474
  %v6530 = vmul.f32 %v6475, %v6475
  %v6531 = vsel %vm3212, %v6515, 0.0
  %v6532 = vsel %vm3212, %v6516, 0.0
  %v6533 = vadd.f32 %v6531, %v6532
  %v6534 = vsel %vm3212, %v6517, 0.0
  %v6535 = vadd.f32 %v6533, %v6534
  %v6536 = vsel %vm3212, %v6518, 0.0
  %v6537 = vadd.f32 %v6535, %v6536
  %v6538 = vsel %vm3212, %v6519, 0.0
  %v6539 = vadd.f32 %v6537, %v6538
  %v6540 = vsel %vm3212, %v6520, 0.0
  %v6541 = vadd.f32 %v6539, %v6540
  %v6542 = vsel %vm3212, %v6521, 0.0
  %v6543 = vadd.f32 %v6541, %v6542
  %v6544 = vsel %vm3212, %v6522, 0.0
  %v6545 = vadd.f32 %v6543, %v6544
  %v6546 = vsel %vm3212, %v6523, 0.0
  %v6547 = vadd.f32 %v6545, %v6546
  %v6548 = vsel %vm3212, %v6524, 0.0
  %v6549 = vadd.f32 %v6547, %v6548
  %v6550 = vsel %vm3212, %v6525, 0.0
  %v6551 = vadd.f32 %v6549, %v6550
  %v6552 = vsel %vm3212, %v6526, 0.0
  %v6553 = vadd.f32 %v6551, %v6552
  %v6554 = vsel %vm3212, %v6527, 0.0
  %v6555 = vadd.f32 %v6553, %v6554
  %v6556 = vsel %vm3212, %v6528, 0.0
  %v6557 = vadd.f32 %v6555, %v6556
  %v6558 = vsel %vm3212, %v6529, 0.0
  %v6559 = vadd.f32 %v6557, %v6558
  %v6560 = vsel %vm3212, %v6530, 0.0
  %v6561 = vadd.f32 %v6559, %v6560
  %v6562 = vrot.slane %v6561, 4
  %v6563 = vadd.f32 %v6561, %v6562
  %v6564 = vrot.slane %v6563, 2
  %v6565 = vadd.f32 %v6563, %v6564
  %v6566 = vrot.slane %v6565, 1
  %v6567 = vadd.f32 %v6565, %v6566
  %v6568 = vmul.f32 %v6514, 0.0078125
  %v6569 = vmul.f32 %v6567, 0.0078125
  %v6570 = vmul.f32 %v6568, %v6568
  %v6571 = vsub.f32 %v6569, %v6570
  %v6572 = vadd.f32 %v6571, 1e-05
  %v6573 = vrsqrt.pop %v6572
  %v6574 = vmul.f32 %v6476, %v6573
  %v6575 = vmul.f32 %v6568, %v6574
  %v6576 = vsub.f32 %v6477, %v6575
  %v6578 = vlaneseq
  %v6579 = vshrl.u32 %v6578, 7
  %v6580 = vsub.s32 0, %v6579
  %v6581 = vrot.slane %v6574, %v6580
  %v6583 = vmul.f32 %v6460, %v6581
  %v6584 = vmul.f32 %v6461, %v6581
  %v6585 = vmul.f32 %v6462, %v6581
  %v6586 = vmul.f32 %v6463, %v6581
  %v6587 = vmul.f32 %v6464, %v6581
  %v6588 = vmul.f32 %v6465, %v6581
  %v6589 = vmul.f32 %v6466, %v6581
  %v6590 = vmul.f32 %v6467, %v6581
  %v6591 = vmul.f32 %v6468, %v6581
  %v6592 = vmul.f32 %v6469, %v6581
  %v6593 = vmul.f32 %v6470, %v6581
  %v6594 = vmul.f32 %v6471, %v6581
  %v6595 = vmul.f32 %v6472, %v6581
  %v6596 = vmul.f32 %v6473, %v6581
  %v6597 = vmul.f32 %v6474, %v6581
  %v6598 = vmul.f32 %v6475, %v6581
  %v6600 = vlaneseq
  %v6601 = vshrl.u32 %v6600, 7
  %v6602 = vsub.s32 0, %v6601
  %v6603 = vrot.slane %v6576, %v6602
  %v6605 = vadd.f32 %v6583, %v6603
  %v6606 = vadd.f32 %v6584, %v6603
  %v6607 = vadd.f32 %v6585, %v6603
  %v6608 = vadd.f32 %v6586, %v6603
  %v6609 = vadd.f32 %v6587, %v6603
  %v6610 = vadd.f32 %v6588, %v6603
  %v6611 = vadd.f32 %v6589, %v6603
  %v6612 = vadd.f32 %v6590, %v6603
  %v6613 = vadd.f32 %v6591, %v6603
  %v6614 = vadd.f32 %v6592, %v6603
  %v6615 = vadd.f32 %v6593, %v6603
  %v6616 = vadd.f32 %v6594, %v6603
  %v6617 = vadd.f32 %v6595, %v6603
  %v6618 = vadd.f32 %v6596, %v6603
  %v6619 = vadd.f32 %v6597, %v6603
  %v6620 = vadd.f32 %v6598, %v6603
  %v6621 = vmax.f32 %v6605, 0.0
  %v6622 = vmax.f32 %v6606, 0.0
  %v6623 = vmax.f32 %v6607, 0.0
  %v6624 = vmax.f32 %v6608, 0.0
  %v6625 = vmax.f32 %v6609, 0.0
  %v6626 = vmax.f32 %v6610, 0.0
  %v6627 = vmax.f32 %v6611, 0.0
  %v6628 = vmax.f32 %v6612, 0.0
  %v6629 = vmax.f32 %v6613, 0.0
  %v6630 = vmax.f32 %v6614, 0.0
  %v6631 = vmax.f32 %v6615, 0.0
  %v6632 = vmax.f32 %v6616, 0.0
  %v6633 = vmax.f32 %v6617, 0.0
  %v6634 = vmax.f32 %v6618, 0.0
  %v6635 = vmax.f32 %v6619, 0.0
  %v6636 = vmax.f32 %v6620, 0.0
  %v6637 = vpack.c.bf16 %v6622, %v6621
  %v6638 = vpack.c.bf16 %v6624, %v6623
  %v6639 = vpack.c.bf16 %v6626, %v6625
  %v6640 = vpack.c.bf16 %v6628, %v6627
  %v6641 = vpack.c.bf16 %v6630, %v6629
  %v6642 = vpack.c.bf16 %v6632, %v6631
  %v6643 = vpack.c.bf16 %v6634, %v6633
  %v6644 = vpack.c.bf16 %v6636, %v6635
  %v6645 = vld [vmem:[%s7] sm:$0xf]
  %v6646 = vld [vmem:[%s8] sm:$0x1]
  %v6648 = vlaneseq
  %v6649 = vshrl.u32 %v6648, 7
  %v6650 = vsub.s32 0, %v6649
  %v6651 = vrot.slane %v6646, %v6650
  %v6654 = vsel %vm3212, %v6637, 0
  %v6657 = vsel %vm3212, %v6638, 0
  %v6660 = vsel %vm3212, %v6639, 0
  %v6663 = vsel %vm3212, %v6640, 0
  %v6666 = vsel %vm3212, %v6641, 0
  %v6669 = vsel %vm3212, %v6642, 0
  %v6672 = vsel %vm3212, %v6643, 0
  %v6675 = vsel %vm3212, %v6644, 0
  %v6678 = vsel %vm4136, %v6645, 0
  %6680 = vmatprep.subr.bf16.mxu0 0
  %6681 = vmatpush1.bf16.msra.mxu0 0
  %6682 = vmatprep.subr.bf16.mxu0 0
  %6683 = vmatpush1.bf16.msra.mxu0 0
  %6684 = vmatprep.subr.bf16.mxu0 0
  %6685 = vmatpush1.bf16.msra.mxu0 0
  %6686 = vmatprep.subr.bf16.mxu0 0
  %6687 = vmatpush1.bf16.msra.mxu0 0
  %6688 = vmatprep.subr.bf16.mxu0 0
  %6689 = vmatpush1.bf16.msra.mxu0 0
  %6690 = vmatprep.subr.bf16.mxu0 0
  %6691 = vmatpush1.bf16.msra.mxu0 0
  %6692 = vmatprep.subr.bf16.mxu0 0
  %6693 = vmatpush1.bf16.msra.mxu0 0
  %6694 = vmatprep.subr.bf16.mxu0 0
  %6695 = vmatpush1.bf16.msra.mxu0 %v6678
  %6696 = vmatprep.subr.bf16.mxu0 0
  %6697 = vmatpush2.bf16.msra.mxu0 0
  %6698 = vmatprep.subr.bf16.mxu0 0
  %6699 = vmatpush2.bf16.msra.mxu0 0
  %6700 = vmatprep.subr.bf16.mxu0 0
  %6701 = vmatpush2.bf16.msra.mxu0 0
  %6702 = vmatprep.subr.bf16.mxu0 0
  %6703 = vmatpush2.bf16.msra.mxu0 0
  %6704 = vmatprep.subr.bf16.mxu0 0
  %6705 = vmatpush2.bf16.msra.mxu0 0
  %6706 = vmatprep.subr.bf16.mxu0 0
  %6707 = vmatpush2.bf16.msra.mxu0 0
  %6708 = vmatprep.subr.bf16.mxu0 0
  %6709 = vmatpush2.bf16.msra.mxu0 0
  %6710 = vmatprep.subr.bf16.mxu0 0
  %6711 = vmatpush2.bf16.msra.mxu0 0
  %6712 = vmatprep.mubr.bf16.mxu0 0
  %6713 = vmatmul.mubr.bf16.gmra.mxu0 %v6654
  %v6714 = vpop.f32.mrf.mxu0
  %v6715 = vadd.f32 %v6651, %v6714
  %v6716 = vpop.f32.mrf.mxu0
  %v6717 = vpop.f32.mrf.mxu0
  %v6718 = vadd.f32 %v6651, %v6717
  %v6719 = vpop.f32.mrf.mxu0
  %6720 = vmatprep.mubr.bf16.mxu0 0
  %6721 = vmatmul.mubr.bf16.gmra.mxu0 %v6657
  %v6722 = vpop.f32.mrf.mxu0
  %v6723 = vadd.f32 %v6651, %v6722
  %v6724 = vpop.f32.mrf.mxu0
  %v6725 = vpop.f32.mrf.mxu0
  %v6726 = vadd.f32 %v6651, %v6725
  %v6727 = vpop.f32.mrf.mxu0
  %6728 = vmatprep.mubr.bf16.mxu0 0
  %6729 = vmatmul.mubr.bf16.gmra.mxu0 %v6660
  %v6730 = vpop.f32.mrf.mxu0
  %v6731 = vadd.f32 %v6651, %v6730
  %v6732 = vpop.f32.mrf.mxu0
  %v6733 = vpop.f32.mrf.mxu0
  %v6734 = vadd.f32 %v6651, %v6733
  %v6735 = vpop.f32.mrf.mxu0
  %6736 = vmatprep.mubr.bf16.mxu0 0
  %6737 = vmatmul.mubr.bf16.gmra.mxu0 %v6663
  %v6738 = vpop.f32.mrf.mxu0
  %v6739 = vadd.f32 %v6651, %v6738
  %v6740 = vpop.f32.mrf.mxu0
  %v6741 = vpop.f32.mrf.mxu0
  %v6742 = vadd.f32 %v6651, %v6741
  %v6743 = vpop.f32.mrf.mxu0
  %6744 = vmatprep.mubr.bf16.mxu0 0
  %6745 = vmatmul.mubr.bf16.gmra.mxu0 %v6666
  %v6746 = vpop.f32.mrf.mxu0
  %v6747 = vadd.f32 %v6651, %v6746
  %v6748 = vpop.f32.mrf.mxu0
  %v6749 = vpop.f32.mrf.mxu0
  %v6750 = vadd.f32 %v6651, %v6749
  %v6751 = vpop.f32.mrf.mxu0
  %6752 = vmatprep.mubr.bf16.mxu0 0
  %6753 = vmatmul.mubr.bf16.gmra.mxu0 %v6669
  %v6754 = vpop.f32.mrf.mxu0
  %v6755 = vadd.f32 %v6651, %v6754
  %v6756 = vpop.f32.mrf.mxu0
  %v6757 = vpop.f32.mrf.mxu0
  %v6758 = vadd.f32 %v6651, %v6757
  %v6759 = vpop.f32.mrf.mxu0
  %6760 = vmatprep.mubr.bf16.mxu0 0
  %6761 = vmatmul.mubr.bf16.gmra.mxu0 %v6672
  %v6762 = vpop.f32.mrf.mxu0
  %v6763 = vadd.f32 %v6651, %v6762
  %v6764 = vpop.f32.mrf.mxu0
  %v6765 = vpop.f32.mrf.mxu0
  %v6766 = vadd.f32 %v6651, %v6765
  %v6767 = vpop.f32.mrf.mxu0
  %6768 = vmatprep.mubr.bf16.mxu0 0
  %6769 = vmatmul.mubr.bf16.gmra.mxu0 %v6675
  %v6770 = vpop.f32.mrf.mxu0
  %v6771 = vadd.f32 %v6651, %v6770
  %v6772 = vpop.f32.mrf.mxu0
  %v6773 = vpop.f32.mrf.mxu0
  %v6774 = vadd.f32 %v6651, %v6773
  %v6775 = vpop.f32.mrf.mxu0
  %6776 = vdwg.mxu0
  %vm6777 = vcmask 130048
  %6778 = vst.msk [vmem:[%s9] sm:$0xff] %vm6777, %v6715
  %6779 = vst.msk [vmem:[%s9 + $0x8] sm:$0xff] %vm6777, %v6718
  %6780 = vst.msk [vmem:[%s9 + $0x10] sm:$0xff] %vm6777, %v6723
  %6781 = vst.msk [vmem:[%s9 + $0x18] sm:$0xff] %vm6777, %v6726
  %6782 = vst.msk [vmem:[%s9 + $0x20] sm:$0xff] %vm6777, %v6731
  %6783 = vst.msk [vmem:[%s9 + $0x28] sm:$0xff] %vm6777, %v6734
  %6784 = vst.msk [vmem:[%s9 + $0x30] sm:$0xff] %vm6777, %v6739
  %6785 = vst.msk [vmem:[%s9 + $0x38] sm:$0xff] %vm6777, %v6742
  %6786 = vst.msk [vmem:[%s9 + $0x40] sm:$0xff] %vm6777, %v6747
  %6787 = vst.msk [vmem:[%s9 + $0x48] sm:$0xff] %vm6777, %v6750
  %6788 = vst.msk [vmem:[%s9 + $0x50] sm:$0xff] %vm6777, %v6755
  %6789 = vst.msk [vmem:[%s9 + $0x58] sm:$0xff] %vm6777, %v6758
  %6790 = vst.msk [vmem:[%s9 + $0x60] sm:$0xff] %vm6777, %v6763
  %6791 = vst.msk [vmem:[%s9 + $0x68] sm:$0xff] %vm6777, %v6766
  %6792 = vst.msk [vmem:[%s9 + $0x70] sm:$0xff] %vm6777, %v6771
  %6793 = vst.msk [vmem:[%s9 + $0x78] sm:$0xff] %vm6777, %v6774
  // Predicated region
  $region38: #{center2d_forward.1} parent=0 // pred_check
    _
  $region39: #{center2d_forward.1} parent=0 // pred_check_branch
    %6795 = sbr.rel (0) target = $region41
  $region40: #{center2d_forward.1} parent=0 // pred_region
    _
  $region41: #{center2d_forward.1} parent=0 // pred_fallthru
    _
  // Predicated region
  $region42: #{center2d_forward.1} parent=0 // pred_check
    _
  $region43: #{center2d_forward.1} parent=0 // pred_check_branch
    %6797 = sbr.rel (0) target = $region45
  $region44: #{center2d_forward.1} parent=0 // pred_region
    _
  $region45: #{center2d_forward.1} parent=0 // pred_fallthru
    _

</llo_original>
